<compile_context>
chip_gen: v7x
topology: tpu7x:2x2x1
jax: 0.10.0
libtpu: 0.0.40
codegen_flags: <defaults>
</compile_context>

<pallas_src>
import functools

import numpy as np
import jax
import jax.numpy as jnp
from jax.experimental import pallas as pl
from jax.experimental.pallas import tpu as pltpu


LEAKY_SLOPE = 0.01  # nn.LeakyReLU default


def _lrelu(x):
    return jnp.where(x > 0, x, LEAKY_SLOPE * x)


# ----------------------------------------------------------------------------
# Fused forward kernel (one grid step == one batch element)
# ----------------------------------------------------------------------------
def _fused_gnn_kernel(*refs, n_msg_passing):
    (vert_ref, coll_ref, g0_ref, g1_ref, st_ref, invdeg_ref,
     wq0_ref, wqg_ref, bin_ref,
     wc1_ref, bc1_ref, wc2_ref, bc2_ref,
     wv1a_ref, wv1b_ref, bv1_ref, wv2_ref, bv2_ref,
     we1v0_ref, we1v1_ref, we1c0_ref, we1c1_ref, be1_ref,
     we2_ref, be2_ref,
     wr1_ref, br1_ref, wr2_ref, br2_ref,
     wo1_ref, bo1_ref, wo2_ref, bo2_ref,
     wg_ref, bg_ref,
     out_ref) = refs

    dot = functools.partial(jnp.dot, preferred_element_type=jnp.float32)

    v = vert_ref[...]            # (N, 14)
    coll = coll_ref[...]         # (N, 2)
    G0 = g0_ref[...]             # (E, N)  one-hot gather of edges[0]
    G1 = g1_ref[...]             # (E, N)  one-hot gather of edges[1]
    S_T = st_ref[...]            # (N, E)  scatter-sum matrix
    inv_deg = invdeg_ref[...]    # (N, 1)

    # --- per-node config encoders (x/y/th + config_lin), concat folded into W
    def config_chain(wq_ref):
        c = _lrelu(dot(v, wq_ref[...]) + bin_ref[...])    # (N, 24)
        c = _lrelu(dot(c, wc1_ref[...]) + bc1_ref[...])   # (N, 32)
        c = _lrelu(dot(c, wc2_ref[...]) + bc2_ref[...])   # (N, 32)
        return c

    fq0 = config_chain(wq0_ref)                           # qk|q0 features
    fqg = config_chain(wqg_ref)                           # qk|qg features

    # --- vertex_lin: cat(fq0, fqg) @ wv1 == fq0 @ wv1a + fqg @ wv1b
    vf = _lrelu(dot(fq0, wv1a_ref[...]) + dot(fqg, wv1b_ref[...]) + bv1_ref[...])
    vf = _lrelu(dot(vf, wv2_ref[...]) + bv2_ref[...])     # (N, 32)

    # --- constant collision contribution to the edge-MLP pre-activation
    coll_edge = (dot(dot(G0, coll), we1c0_ref[...]) +
                 dot(dot(G1, coll), we1c1_ref[...]))      # (E, 32)

    def msgs_from(h):                                     # h: (N, 32)
        m = dot(dot(G0, h), we1v0_ref[...]) + dot(dot(G1, h), we1v1_ref[...])
        m = _lrelu(m + coll_edge + be1_ref[...])          # edge_lin conv1
        m = _lrelu(dot(m, we2_ref[...]) + be2_ref[...])   # edge_lin conv2
        return m                                          # (E, 32)

    # --- first round: scatter_mean(msgs.repeat(1,1,2), [e1,e0]) == S_T@m/deg
    new_v = dot(S_T, msgs_from(vf)) * inv_deg             # (N, 32)

    # --- message-passing rounds (unrolled; small static trip count)
    for _ in range(n_msg_passing):
        h = _lrelu(dot(new_v, wr1_ref[...]) + br1_ref[...])
        h = _lrelu(dot(h, wr2_ref[...]) + br2_ref[...])   # (N, 32)
        new_v = new_v + dot(S_T, msgs_from(h)) * inv_deg

    # --- vertex output head
    o = _lrelu(dot(new_v, wo1_ref[...]) + bo1_ref[...])   # (N, 32)
    o = _lrelu(dot(o, wo2_ref[...]) + bo2_ref[...])       # (N, 1)

    # --- graph output: Linear(n_nodes, 1) + Sigmoid
    g = jnp.sum(o * wg_ref[...], axis=0, keepdims=True) + bg_ref[...]   # (1, 1)
    out_ref[...] = 1.0 / (1.0 + jnp.exp(-g))


def forward(weights, graph, vertices, *, n_msg_passing):
    """weights: ordered tuple from pack_params; graph: (G0, G1, S_T, inv_deg)."""
    B, N, F = vertices.shape
    collisions = vertices[:, :, 12:14]
    G0, G1, S_T, inv_deg = graph

    const_inputs = [G0, G1, S_T, inv_deg] + list(weights)

    def const_spec(arr):
        nd = arr.ndim
        return pl.BlockSpec(arr.shape, lambda b, _nd=nd: (0,) * _nd)

    in_specs = (
        [pl.BlockSpec((None, N, F), lambda b: (b, 0, 0)),
         pl.BlockSpec((None, N, 2), lambda b: (b, 0, 0))]
        + [const_spec(a) for a in const_inputs]
    )

    out = pl.pallas_call(
        functools.partial(_fused_gnn_kernel, n_msg_passing=n_msg_passing),
        out_shape=jax.ShapeDtypeStruct((B, 1, 1), jnp.float32),
        grid=(B,),
        in_specs=in_specs,
        out_specs=pl.BlockSpec((None, 1, 1), lambda b: (b, 0, 0)),
        compiler_params=pltpu.CompilerParams(
            dimension_semantics=("parallel",)),
    )(vertices, collisions, *const_inputs)
    return out.reshape(B, 1)


# ----------------------------------------------------------------------------
# Graph preprocessing (matches the torch __init__ dedup + scatter semantics)
# ----------------------------------------------------------------------------
def dedup_edges(edges):
    seen, e0, e1 = [], [], []
    for s, d in zip(edges[0], edges[1]):
        key = frozenset((s, d))
        if key not in seen:
            seen.append(key)
            e0.append(s)
            e1.append(d)
    return np.array([e0, e1], dtype=np.int32)


def build_graph(edges, n_nodes):
    e0, e1 = edges
    E = e0.shape[0]
    G0 = np.zeros((E, n_nodes), np.float32)
    G0[np.arange(E), e0] = 1.0                      # gather of v[:, :, edges[0]]
    G1 = np.zeros((E, n_nodes), np.float32)
    G1[np.arange(E), e1] = 1.0                      # gather of v[:, :, edges[1]]
    # scatter_mean(msgs.repeat(1,1,2), [e1,e0]) == (G0+G1)^T @ msgs / deg
    S_T = (G0 + G1).T                               # (n_nodes, E)
    deg = S_T.sum(-1)
    inv_deg = (1.0 / np.maximum(deg, 1.0)).reshape(-1, 1).astype(np.float32)
    return (jnp.asarray(G0), jnp.asarray(G1), jnp.asarray(S_T),
            jnp.asarray(inv_deg))


# ----------------------------------------------------------------------------
# Parameters (deterministic synthetic init; conv weights stored as (C_in, C_out))
# ----------------------------------------------------------------------------
def init_params(key, n_nodes):
    shapes = [
        ("wx", (2, 8)), ("bx", (8,)),               # x_lin   Conv2d(1,8,(1,2))
        ("wy", (2, 8)), ("by", (8,)),               # y_lin   Conv2d(1,8,(1,2))
        ("wth", (4, 8)), ("bth", (8,)),             # th_lin  Conv2d(1,8,(1,4))
        ("wc1", (24, 32)), ("bc1", (32,)),          # config_lin conv1 (1x1)
        ("wc2", (32, 32)), ("bc2", (32,)),          # config_lin conv2 (1x1)
        ("wv1", (64, 32)), ("bv1", (32,)),          # vertex_lin conv1 (1x1)
        ("wv2", (32, 32)), ("bv2", (32,)),          # vertex_lin conv2 (1x1)
        ("we1", (68, 32)), ("be1", (32,)),          # edge_lin Conv2d(1,32,(68,1))
        ("we2", (32, 32)), ("be2", (32,)),          # edge_lin conv2 (1x1)
        ("wr1", (32, 32)), ("br1", (32,)),          # x_lin_after_first_round conv1
        ("wr2", (32, 32)), ("br2", (32,)),          # x_lin_after_first_round conv2
        ("wo1", (32, 32)), ("bo1", (32,)),          # vertex_output_lin conv1
        ("wo2", (32, 1)), ("bo2", (1,)),            # vertex_output_lin conv2
        ("wg", (n_nodes, 1)), ("bg", (1,)),         # graph_output_lin Linear
    ]
    keys = jax.random.split(key, len(shapes))
    return {name: 0.1 * jax.random.normal(k, s, jnp.float32)
            for (name, s), k in zip(shapes, keys)}


def pack_params(p):
    """Pre-transform weights so every torch-side concat becomes a weight split."""
    # block-diagonal x/y/th encoder: input [qk_x, o_x, qk_y, o_y, qk_th(2), o_th(2)]
    W_in = jnp.zeros((8, 24), jnp.float32)
    W_in = W_in.at[0:2, 0:8].set(p["wx"])
    W_in = W_in.at[2:4, 8:16].set(p["wy"])
    W_in = W_in.at[4:8, 16:24].set(p["wth"])
    b_in = jnp.concatenate([p["bx"], p["by"], p["bth"]]).reshape(1, 24)

    def sel(base):
        # selection matrix: 14-wide vertex vector -> 8-wide encoder input
        src = [0, base + 0, 1, base + 1, 2, 3, base + 2, base + 3]
        P = np.zeros((14, 8), np.float32)
        for col, s in enumerate(src):
            P[s, col] = 1.0
        return jnp.asarray(P)

    wq0 = sel(4) @ W_in      # (14, 24) — qk|q0 path
    wqg = sel(8) @ W_in      # (14, 24) — qk|qg path

    we1 = p["we1"]           # rows: [t1 vf 0:32 | t1 coll 32:34 | t2 vf 34:66 | t2 coll 66:68]
    r1 = lambda b: b.reshape(1, -1)
    return (
        wq0, wqg, b_in,
        p["wc1"], r1(p["bc1"]), p["wc2"], r1(p["bc2"]),
        p["wv1"][:32], p["wv1"][32:], r1(p["bv1"]),
        p["wv2"], r1(p["bv2"]),
        we1[0:32], we1[34:66], we1[32:34], we1[66:68], r1(p["be1"]),
        p["we2"], r1(p["be2"]),
        p["wr1"], r1(p["br1"]), p["wr2"], r1(p["br2"]),
        p["wo1"], r1(p["bo1"]), p["wo2"], p["bo2"].reshape(1, 1),
        p["wg"], p["bg"].reshape(1, 1),
    )


# ----------------------------------------------------------------------------
# Pure-JAX reference mirroring the torch module structure (gathers + scatter)
# ----------------------------------------------------------------------------
def reference_forward(p, edges, vertices, n_msg_passing, n_nodes):
    lrelu = lambda x: jnp.where(x > 0, x, LEAKY_SLOPE * x)
    B = vertices.shape[0]
    qk, q0, qg = vertices[..., 0:4], vertices[..., 4:8], vertices[..., 8:12]
    coll = vertices[..., 12:14]
    e0 = jnp.asarray(edges[0])
    e1 = jnp.asarray(edges[1])
    dest = jnp.concatenate([e1, e0])

    def config_feat(other):
        x_in = jnp.stack([qk[..., 0], other[..., 0]], -1)
        y_in = jnp.stack([qk[..., 1], other[..., 1]], -1)
        th_in = jnp.concatenate([qk[..., 2:4], other[..., 2:4]], -1)
        xf = lrelu(x_in @ p["wx"] + p["bx"])
        yf = lrelu(y_in @ p["wy"] + p["by"])
        tf = lrelu(th_in @ p["wth"] + p["bth"])
        c = jnp.concatenate([xf, yf, tf], -1)
        c = lrelu(c @ p["wc1"] + p["bc1"])
        c = lrelu(c @ p["wc2"] + p["bc2"])
        return c

    vfeat = jnp.concatenate([config_feat(q0), config_feat(qg)], -1)
    vfeat = lrelu(vfeat @ p["wv1"] + p["bv1"])
    vfeat = lrelu(vfeat @ p["wv2"] + p["bv2"])
    vfeat = jnp.concatenate([vfeat, coll], -1)                      # (B,N,34)

    def compute_msgs(h):
        ein = jnp.concatenate([h[:, e0], h[:, e1]], -1)             # (B,E,68)
        m = lrelu(ein @ p["we1"] + p["be1"])
        m = lrelu(m @ p["we2"] + p["be2"])
        return m

    def scatter_mean(m):                                            # (B,E,32)
        m2 = jnp.concatenate([m, m], axis=1)                        # repeat(1,1,2)
        summed = jnp.zeros((B, n_nodes, m.shape[-1])).at[:, dest].add(m2)
        cnt = jnp.zeros((n_nodes,)).at[dest].add(1.0)
        return summed / jnp.maximum(cnt, 1.0)[None, :, None]

    new_v = scatter_mean(compute_msgs(vfeat))
    for _ in range(n_msg_passing):
        h = lrelu(new_v @ p["wr1"] + p["br1"])
        h = lrelu(h @ p["wr2"] + p["br2"])
        h = jnp.concatenate([h, coll], -1)
        new_v = new_v + scatter_mean(compute_msgs(h))

    out = lrelu(new_v @ p["wo1"] + p["bo1"])
    out = lrelu(out @ p["wo2"] + p["bo2"])[..., 0]                  # (B,N)
    return 1.0 / (1.0 + jnp.exp(-(out @ p["wg"] + p["bg"])))        # (B,1)


# ----------------------------------------------------------------------------
if __name__ == "__main__":
    B = 2
    N_NODES = 16          # n_key_configs
    N_MSG_PASSING = 2

    # edges: ring over the key configs + one duplicate (exercises __init__ dedup)
    src = list(range(N_NODES)) + [1]
    dst = [(i + 1) % N_NODES for i in range(N_NODES)] + [0]
    edges = dedup_edges([src, dst])
    graph = build_graph(edges, N_NODES)

    key = jax.random.PRNGKey(0)
    pkey, vkey, ckey = jax.random.split(key, 3)
    params = init_params(pkey, N_NODES)
    weights = pack_params(params)

    cfg_vals = jax.random.normal(vkey, (B, N_NODES, 12), jnp.float32)
    collisions = (jax.random.uniform(ckey, (B, N_NODES, 2)) < 0.5).astype(jnp.float32)
    vertices = jnp.concatenate([cfg_vals, collisions], axis=-1)     # (2, 16, 14)

    fwd = jax.jit(functools.partial(forward, n_msg_passing=N_MSG_PASSING))
    out = jax.block_until_ready(fwd(weights, graph, vertices))

    with jax.default_matmul_precision("highest"):
        ref = reference_forward(params, edges, vertices, N_MSG_PASSING, N_NODES)
    ref = jax.block_until_ready(ref)

    assert out.shape == (B, 1)
    assert bool(jnp.all(jnp.isfinite(out)))
    max_err = float(jnp.max(jnp.abs(out - ref)))
    assert max_err < 2e-3, f"mismatch vs reference: {max_err}"
    print("KERNEL_OK")
</pallas_src>

<mosaic_0001>
module attributes {stable_mosaic.version = 11 : i64} {
  func.func @_fused_gnn_kernel(%arg0: i32, %arg1: memref<1x16x14xf32, #tpu.memory_space<vmem>>, %arg2: memref<1x16x2xf32, #tpu.memory_space<vmem>>, %arg3: memref<16x16xf32, #tpu.memory_space<vmem>>, %arg4: memref<16x16xf32, #tpu.memory_space<vmem>>, %arg5: memref<16x16xf32, #tpu.memory_space<vmem>>, %arg6: memref<16x1xf32, #tpu.memory_space<vmem>>, %arg7: memref<14x24xf32, #tpu.memory_space<vmem>>, %arg8: memref<14x24xf32, #tpu.memory_space<vmem>>, %arg9: memref<1x24xf32, #tpu.memory_space<vmem>>, %arg10: memref<24x32xf32, #tpu.memory_space<vmem>>, %arg11: memref<1x32xf32, #tpu.memory_space<vmem>>, %arg12: memref<32x32xf32, #tpu.memory_space<vmem>>, %arg13: memref<1x32xf32, #tpu.memory_space<vmem>>, %arg14: memref<32x32xf32, #tpu.memory_space<vmem>>, %arg15: memref<32x32xf32, #tpu.memory_space<vmem>>, %arg16: memref<1x32xf32, #tpu.memory_space<vmem>>, %arg17: memref<32x32xf32, #tpu.memory_space<vmem>>, %arg18: memref<1x32xf32, #tpu.memory_space<vmem>>, %arg19: memref<32x32xf32, #tpu.memory_space<vmem>>, %arg20: memref<32x32xf32, #tpu.memory_space<vmem>>, %arg21: memref<2x32xf32, #tpu.memory_space<vmem>>, %arg22: memref<2x32xf32, #tpu.memory_space<vmem>>, %arg23: memref<1x32xf32, #tpu.memory_space<vmem>>, %arg24: memref<32x32xf32, #tpu.memory_space<vmem>>, %arg25: memref<1x32xf32, #tpu.memory_space<vmem>>, %arg26: memref<32x32xf32, #tpu.memory_space<vmem>>, %arg27: memref<1x32xf32, #tpu.memory_space<vmem>>, %arg28: memref<32x32xf32, #tpu.memory_space<vmem>>, %arg29: memref<1x32xf32, #tpu.memory_space<vmem>>, %arg30: memref<32x32xf32, #tpu.memory_space<vmem>>, %arg31: memref<1x32xf32, #tpu.memory_space<vmem>>, %arg32: memref<32x1xf32, #tpu.memory_space<vmem>>, %arg33: memref<1x1xf32, #tpu.memory_space<vmem>>, %arg34: memref<16x1xf32, #tpu.memory_space<vmem>>, %arg35: memref<1x1xf32, #tpu.memory_space<vmem>>, %arg36: memref<1x1x1xf32, #tpu.memory_space<vmem>>) attributes {dimension_semantics = [#tpu.dimension_semantics<parallel>], iteration_bounds = array<i64: 2>, scalar_prefetch = 0 : i64, scratch_operands = 0 : i64, tpu.core_type = #tpu.core_type<tc>, window_params = [{transform_indices = @transform_0, window_bounds = array<i64: 1, 16, 14>}, {transform_indices = @transform_1, window_bounds = array<i64: 1, 16, 2>}, {pipeline_mode = #tpu.pipeline_mode<synchronous>, transform_indices = @transform_2, window_bounds = array<i64: 16, 16>}, {pipeline_mode = #tpu.pipeline_mode<synchronous>, transform_indices = @transform_3, window_bounds = array<i64: 16, 16>}, {pipeline_mode = #tpu.pipeline_mode<synchronous>, transform_indices = @transform_4, window_bounds = array<i64: 16, 16>}, {pipeline_mode = #tpu.pipeline_mode<synchronous>, transform_indices = @transform_5, window_bounds = array<i64: 16, 1>}, {pipeline_mode = #tpu.pipeline_mode<synchronous>, transform_indices = @transform_6, window_bounds = array<i64: 14, 24>}, {pipeline_mode = #tpu.pipeline_mode<synchronous>, transform_indices = @transform_7, window_bounds = array<i64: 14, 24>}, {pipeline_mode = #tpu.pipeline_mode<synchronous>, transform_indices = @transform_8, window_bounds = array<i64: 1, 24>}, {pipeline_mode = #tpu.pipeline_mode<synchronous>, transform_indices = @transform_9, window_bounds = array<i64: 24, 32>}, {pipeline_mode = #tpu.pipeline_mode<synchronous>, transform_indices = @transform_10, window_bounds = array<i64: 1, 32>}, {pipeline_mode = #tpu.pipeline_mode<synchronous>, transform_indices = @transform_11, window_bounds = array<i64: 32, 32>}, {pipeline_mode = #tpu.pipeline_mode<synchronous>, transform_indices = @transform_12, window_bounds = array<i64: 1, 32>}, {pipeline_mode = #tpu.pipeline_mode<synchronous>, transform_indices = @transform_13, window_bounds = array<i64: 32, 32>}, {pipeline_mode = #tpu.pipeline_mode<synchronous>, transform_indices = @transform_14, window_bounds = array<i64: 32, 32>}, {pipeline_mode = #tpu.pipeline_mode<synchronous>, transform_indices = @transform_15, window_bounds = array<i64: 1, 32>}, {pipeline_mode = #tpu.pipeline_mode<synchronous>, transform_indices = @transform_16, window_bounds = array<i64: 32, 32>}, {pipeline_mode = #tpu.pipeline_mode<synchronous>, transform_indices = @transform_17, window_bounds = array<i64: 1, 32>}, {pipeline_mode = #tpu.pipeline_mode<synchronous>, transform_indices = @transform_18, window_bounds = array<i64: 32, 32>}, {pipeline_mode = #tpu.pipeline_mode<synchronous>, transform_indices = @transform_19, window_bounds = array<i64: 32, 32>}, {pipeline_mode = #tpu.pipeline_mode<synchronous>, transform_indices = @transform_20, window_bounds = array<i64: 2, 32>}, {pipeline_mode = #tpu.pipeline_mode<synchronous>, transform_indices = @transform_21, window_bounds = array<i64: 2, 32>}, {pipeline_mode = #tpu.pipeline_mode<synchronous>, transform_indices = @transform_22, window_bounds = array<i64: 1, 32>}, {pipeline_mode = #tpu.pipeline_mode<synchronous>, transform_indices = @transform_23, window_bounds = array<i64: 32, 32>}, {pipeline_mode = #tpu.pipeline_mode<synchronous>, transform_indices = @transform_24, window_bounds = array<i64: 1, 32>}, {pipeline_mode = #tpu.pipeline_mode<synchronous>, transform_indices = @transform_25, window_bounds = array<i64: 32, 32>}, {pipeline_mode = #tpu.pipeline_mode<synchronous>, transform_indices = @transform_26, window_bounds = array<i64: 1, 32>}, {pipeline_mode = #tpu.pipeline_mode<synchronous>, transform_indices = @transform_27, window_bounds = array<i64: 32, 32>}, {pipeline_mode = #tpu.pipeline_mode<synchronous>, transform_indices = @transform_28, window_bounds = array<i64: 1, 32>}, {pipeline_mode = #tpu.pipeline_mode<synchronous>, transform_indices = @transform_29, window_bounds = array<i64: 32, 32>}, {pipeline_mode = #tpu.pipeline_mode<synchronous>, transform_indices = @transform_30, window_bounds = array<i64: 1, 32>}, {pipeline_mode = #tpu.pipeline_mode<synchronous>, transform_indices = @transform_31, window_bounds = array<i64: 32, 1>}, {pipeline_mode = #tpu.pipeline_mode<synchronous>, transform_indices = @transform_32, window_bounds = array<i64: 1, 1>}, {pipeline_mode = #tpu.pipeline_mode<synchronous>, transform_indices = @transform_33, window_bounds = array<i64: 16, 1>}, {pipeline_mode = #tpu.pipeline_mode<synchronous>, transform_indices = @transform_34, window_bounds = array<i64: 1, 1>}, {transform_indices = @transform_35, window_bounds = array<i64: 1, 1, 1>}]} {
    %c0 = arith.constant 0 : index
    %c0_0 = arith.constant 0 : index
    %c0_1 = arith.constant 0 : index
    %0 = vector.load %arg1[%c0, %c0_0, %c0_1] : memref<1x16x14xf32, #tpu.memory_space<vmem>>, vector<1x16x14xf32>
    %1 = vector.shape_cast %0 : vector<1x16x14xf32> to vector<16x14xf32>
    %c0_2 = arith.constant 0 : index
    %c0_3 = arith.constant 0 : index
    %c0_4 = arith.constant 0 : index
    %2 = vector.load %arg2[%c0_2, %c0_3, %c0_4] : memref<1x16x2xf32, #tpu.memory_space<vmem>>, vector<1x16x2xf32>
    %3 = vector.shape_cast %2 : vector<1x16x2xf32> to vector<16x2xf32>
    %c0_5 = arith.constant 0 : index
    %c0_6 = arith.constant 0 : index
    %4 = vector.load %arg3[%c0_5, %c0_6] : memref<16x16xf32, #tpu.memory_space<vmem>>, vector<16x16xf32>
    %c0_7 = arith.constant 0 : index
    %c0_8 = arith.constant 0 : index
    %5 = vector.load %arg4[%c0_7, %c0_8] : memref<16x16xf32, #tpu.memory_space<vmem>>, vector<16x16xf32>
    %c0_9 = arith.constant 0 : index
    %c0_10 = arith.constant 0 : index
    %6 = vector.load %arg5[%c0_9, %c0_10] : memref<16x16xf32, #tpu.memory_space<vmem>>, vector<16x16xf32>
    %c0_11 = arith.constant 0 : index
    %c0_12 = arith.constant 0 : index
    %7 = vector.load %arg6[%c0_11, %c0_12] : memref<16x1xf32, #tpu.memory_space<vmem>>, vector<16x1xf32>
    %c0_13 = arith.constant 0 : index
    %c0_14 = arith.constant 0 : index
    %8 = vector.load %arg7[%c0_13, %c0_14] : memref<14x24xf32, #tpu.memory_space<vmem>>, vector<14x24xf32>
    %cst = arith.constant dense<0.000000e+00> : vector<16x24xf32>
    %9 = tpu.matmul %1, %8, %cst {dimension_numbers = #tpu.dot_dimension_numbers<[1], [0], [0], [1], [0, 0, 1, 1], [], []>} : vector<16x14xf32>, vector<14x24xf32>, vector<16x24xf32> -> vector<16x24xf32>
    %c0_15 = arith.constant 0 : index
    %c0_16 = arith.constant 0 : index
    %10 = vector.load %arg9[%c0_15, %c0_16] : memref<1x24xf32, #tpu.memory_space<vmem>>, vector<1x24xf32>
    %11 = vector.broadcast %10 : vector<1x24xf32> to vector<16x24xf32>
    %12 = arith.addf %9, %11 : vector<16x24xf32>
    %cst_17 = arith.constant 0.000000e+00 : f32
    %13 = vector.broadcast %cst_17 : f32 to vector<16x24xf32>
    %14 = arith.cmpf ogt, %12, %13 : vector<16x24xf32>
    %cst_18 = arith.constant 0.00999999977 : f32
    %15 = vector.broadcast %cst_18 : f32 to vector<16x24xf32>
    %16 = arith.mulf %15, %12 : vector<16x24xf32>
    %17 = arith.select %14, %12, %16 : vector<16x24xi1>, vector<16x24xf32>
    %c0_19 = arith.constant 0 : index
    %c0_20 = arith.constant 0 : index
    %18 = vector.load %arg10[%c0_19, %c0_20] : memref<24x32xf32, #tpu.memory_space<vmem>>, vector<24x32xf32>
    %cst_21 = arith.constant dense<0.000000e+00> : vector<16x32xf32>
    %19 = tpu.matmul %17, %18, %cst_21 {dimension_numbers = #tpu.dot_dimension_numbers<[1], [0], [0], [1], [0, 0, 1, 1], [], []>} : vector<16x24xf32>, vector<24x32xf32>, vector<16x32xf32> -> vector<16x32xf32>
    %c0_22 = arith.constant 0 : index
    %c0_23 = arith.constant 0 : index
    %20 = vector.load %arg11[%c0_22, %c0_23] : memref<1x32xf32, #tpu.memory_space<vmem>>, vector<1x32xf32>
    %21 = vector.broadcast %20 : vector<1x32xf32> to vector<16x32xf32>
    %22 = arith.addf %19, %21 : vector<16x32xf32>
    %cst_24 = arith.constant 0.000000e+00 : f32
    %23 = vector.broadcast %cst_24 : f32 to vector<16x32xf32>
    %24 = arith.cmpf ogt, %22, %23 : vector<16x32xf32>
    %cst_25 = arith.constant 0.00999999977 : f32
    %25 = vector.broadcast %cst_25 : f32 to vector<16x32xf32>
    %26 = arith.mulf %25, %22 : vector<16x32xf32>
    %27 = arith.select %24, %22, %26 : vector<16x32xi1>, vector<16x32xf32>
    %c0_26 = arith.constant 0 : index
    %c0_27 = arith.constant 0 : index
    %28 = vector.load %arg12[%c0_26, %c0_27] : memref<32x32xf32, #tpu.memory_space<vmem>>, vector<32x32xf32>
    %cst_28 = arith.constant dense<0.000000e+00> : vector<16x32xf32>
    %29 = tpu.matmul %27, %28, %cst_28 {dimension_numbers = #tpu.dot_dimension_numbers<[1], [0], [0], [1], [0, 0, 1, 1], [], []>} : vector<16x32xf32>, vector<32x32xf32>, vector<16x32xf32> -> vector<16x32xf32>
    %c0_29 = arith.constant 0 : index
    %c0_30 = arith.constant 0 : index
    %30 = vector.load %arg13[%c0_29, %c0_30] : memref<1x32xf32, #tpu.memory_space<vmem>>, vector<1x32xf32>
    %31 = vector.broadcast %30 : vector<1x32xf32> to vector<16x32xf32>
    %32 = arith.addf %29, %31 : vector<16x32xf32>
    %cst_31 = arith.constant 0.000000e+00 : f32
    %33 = vector.broadcast %cst_31 : f32 to vector<16x32xf32>
    %34 = arith.cmpf ogt, %32, %33 : vector<16x32xf32>
    %cst_32 = arith.constant 0.00999999977 : f32
    %35 = vector.broadcast %cst_32 : f32 to vector<16x32xf32>
    %36 = arith.mulf %35, %32 : vector<16x32xf32>
    %37 = arith.select %34, %32, %36 : vector<16x32xi1>, vector<16x32xf32>
    %c0_33 = arith.constant 0 : index
    %c0_34 = arith.constant 0 : index
    %38 = vector.load %arg8[%c0_33, %c0_34] : memref<14x24xf32, #tpu.memory_space<vmem>>, vector<14x24xf32>
    %cst_35 = arith.constant dense<0.000000e+00> : vector<16x24xf32>
    %39 = tpu.matmul %1, %38, %cst_35 {dimension_numbers = #tpu.dot_dimension_numbers<[1], [0], [0], [1], [0, 0, 1, 1], [], []>} : vector<16x14xf32>, vector<14x24xf32>, vector<16x24xf32> -> vector<16x24xf32>
    %c0_36 = arith.constant 0 : index
    %c0_37 = arith.constant 0 : index
    %40 = vector.load %arg9[%c0_36, %c0_37] : memref<1x24xf32, #tpu.memory_space<vmem>>, vector<1x24xf32>
    %41 = vector.broadcast %40 : vector<1x24xf32> to vector<16x24xf32>
    %42 = arith.addf %39, %41 : vector<16x24xf32>
    %cst_38 = arith.constant 0.000000e+00 : f32
    %43 = vector.broadcast %cst_38 : f32 to vector<16x24xf32>
    %44 = arith.cmpf ogt, %42, %43 : vector<16x24xf32>
    %cst_39 = arith.constant 0.00999999977 : f32
    %45 = vector.broadcast %cst_39 : f32 to vector<16x24xf32>
    %46 = arith.mulf %45, %42 : vector<16x24xf32>
    %47 = arith.select %44, %42, %46 : vector<16x24xi1>, vector<16x24xf32>
    %c0_40 = arith.constant 0 : index
    %c0_41 = arith.constant 0 : index
    %48 = vector.load %arg10[%c0_40, %c0_41] : memref<24x32xf32, #tpu.memory_space<vmem>>, vector<24x32xf32>
    %cst_42 = arith.constant dense<0.000000e+00> : vector<16x32xf32>
    %49 = tpu.matmul %47, %48, %cst_42 {dimension_numbers = #tpu.dot_dimension_numbers<[1], [0], [0], [1], [0, 0, 1, 1], [], []>} : vector<16x24xf32>, vector<24x32xf32>, vector<16x32xf32> -> vector<16x32xf32>
    %c0_43 = arith.constant 0 : index
    %c0_44 = arith.constant 0 : index
    %50 = vector.load %arg11[%c0_43, %c0_44] : memref<1x32xf32, #tpu.memory_space<vmem>>, vector<1x32xf32>
    %51 = vector.broadcast %50 : vector<1x32xf32> to vector<16x32xf32>
    %52 = arith.addf %49, %51 : vector<16x32xf32>
    %cst_45 = arith.constant 0.000000e+00 : f32
    %53 = vector.broadcast %cst_45 : f32 to vector<16x32xf32>
    %54 = arith.cmpf ogt, %52, %53 : vector<16x32xf32>
    %cst_46 = arith.constant 0.00999999977 : f32
    %55 = vector.broadcast %cst_46 : f32 to vector<16x32xf32>
    %56 = arith.mulf %55, %52 : vector<16x32xf32>
    %57 = arith.select %54, %52, %56 : vector<16x32xi1>, vector<16x32xf32>
    %c0_47 = arith.constant 0 : index
    %c0_48 = arith.constant 0 : index
    %58 = vector.load %arg12[%c0_47, %c0_48] : memref<32x32xf32, #tpu.memory_space<vmem>>, vector<32x32xf32>
    %cst_49 = arith.constant dense<0.000000e+00> : vector<16x32xf32>
    %59 = tpu.matmul %57, %58, %cst_49 {dimension_numbers = #tpu.dot_dimension_numbers<[1], [0], [0], [1], [0, 0, 1, 1], [], []>} : vector<16x32xf32>, vector<32x32xf32>, vector<16x32xf32> -> vector<16x32xf32>
    %c0_50 = arith.constant 0 : index
    %c0_51 = arith.constant 0 : index
    %60 = vector.load %arg13[%c0_50, %c0_51] : memref<1x32xf32, #tpu.memory_space<vmem>>, vector<1x32xf32>
    %61 = vector.broadcast %60 : vector<1x32xf32> to vector<16x32xf32>
    %62 = arith.addf %59, %61 : vector<16x32xf32>
    %cst_52 = arith.constant 0.000000e+00 : f32
    %63 = vector.broadcast %cst_52 : f32 to vector<16x32xf32>
    %64 = arith.cmpf ogt, %62, %63 : vector<16x32xf32>
    %cst_53 = arith.constant 0.00999999977 : f32
    %65 = vector.broadcast %cst_53 : f32 to vector<16x32xf32>
    %66 = arith.mulf %65, %62 : vector<16x32xf32>
    %67 = arith.select %64, %62, %66 : vector<16x32xi1>, vector<16x32xf32>
    %c0_54 = arith.constant 0 : index
    %c0_55 = arith.constant 0 : index
    %68 = vector.load %arg14[%c0_54, %c0_55] : memref<32x32xf32, #tpu.memory_space<vmem>>, vector<32x32xf32>
    %cst_56 = arith.constant dense<0.000000e+00> : vector<16x32xf32>
    %69 = tpu.matmul %37, %68, %cst_56 {dimension_numbers = #tpu.dot_dimension_numbers<[1], [0], [0], [1], [0, 0, 1, 1], [], []>} : vector<16x32xf32>, vector<32x32xf32>, vector<16x32xf32> -> vector<16x32xf32>
    %c0_57 = arith.constant 0 : index
    %c0_58 = arith.constant 0 : index
    %70 = vector.load %arg15[%c0_57, %c0_58] : memref<32x32xf32, #tpu.memory_space<vmem>>, vector<32x32xf32>
    %cst_59 = arith.constant dense<0.000000e+00> : vector<16x32xf32>
    %71 = tpu.matmul %67, %70, %cst_59 {dimension_numbers = #tpu.dot_dimension_numbers<[1], [0], [0], [1], [0, 0, 1, 1], [], []>} : vector<16x32xf32>, vector<32x32xf32>, vector<16x32xf32> -> vector<16x32xf32>
    %72 = arith.addf %69, %71 : vector<16x32xf32>
    %c0_60 = arith.constant 0 : index
    %c0_61 = arith.constant 0 : index
    %73 = vector.load %arg16[%c0_60, %c0_61] : memref<1x32xf32, #tpu.memory_space<vmem>>, vector<1x32xf32>
    %74 = vector.broadcast %73 : vector<1x32xf32> to vector<16x32xf32>
    %75 = arith.addf %72, %74 : vector<16x32xf32>
    %cst_62 = arith.constant 0.000000e+00 : f32
    %76 = vector.broadcast %cst_62 : f32 to vector<16x32xf32>
    %77 = arith.cmpf ogt, %75, %76 : vector<16x32xf32>
    %cst_63 = arith.constant 0.00999999977 : f32
    %78 = vector.broadcast %cst_63 : f32 to vector<16x32xf32>
    %79 = arith.mulf %78, %75 : vector<16x32xf32>
    %80 = arith.select %77, %75, %79 : vector<16x32xi1>, vector<16x32xf32>
    %c0_64 = arith.constant 0 : index
    %c0_65 = arith.constant 0 : index
    %81 = vector.load %arg17[%c0_64, %c0_65] : memref<32x32xf32, #tpu.memory_space<vmem>>, vector<32x32xf32>
    %cst_66 = arith.constant dense<0.000000e+00> : vector<16x32xf32>
    %82 = tpu.matmul %80, %81, %cst_66 {dimension_numbers = #tpu.dot_dimension_numbers<[1], [0], [0], [1], [0, 0, 1, 1], [], []>} : vector<16x32xf32>, vector<32x32xf32>, vector<16x32xf32> -> vector<16x32xf32>
    %c0_67 = arith.constant 0 : index
    %c0_68 = arith.constant 0 : index
    %83 = vector.load %arg18[%c0_67, %c0_68] : memref<1x32xf32, #tpu.memory_space<vmem>>, vector<1x32xf32>
    %84 = vector.broadcast %83 : vector<1x32xf32> to vector<16x32xf32>
    %85 = arith.addf %82, %84 : vector<16x32xf32>
    %cst_69 = arith.constant 0.000000e+00 : f32
    %86 = vector.broadcast %cst_69 : f32 to vector<16x32xf32>
    %87 = arith.cmpf ogt, %85, %86 : vector<16x32xf32>
    %cst_70 = arith.constant 0.00999999977 : f32
    %88 = vector.broadcast %cst_70 : f32 to vector<16x32xf32>
    %89 = arith.mulf %88, %85 : vector<16x32xf32>
    %90 = arith.select %87, %85, %89 : vector<16x32xi1>, vector<16x32xf32>
    %cst_71 = arith.constant dense<0.000000e+00> : vector<16x2xf32>
    %91 = tpu.matmul %4, %3, %cst_71 {dimension_numbers = #tpu.dot_dimension_numbers<[1], [0], [0], [1], [0, 0, 1, 1], [], []>} : vector<16x16xf32>, vector<16x2xf32>, vector<16x2xf32> -> vector<16x2xf32>
    %c0_72 = arith.constant 0 : index
    %c0_73 = arith.constant 0 : index
    %92 = vector.load %arg21[%c0_72, %c0_73] : memref<2x32xf32, #tpu.memory_space<vmem>>, vector<2x32xf32>
    %cst_74 = arith.constant dense<0.000000e+00> : vector<16x32xf32>
    %93 = tpu.matmul %91, %92, %cst_74 {dimension_numbers = #tpu.dot_dimension_numbers<[1], [0], [0], [1], [0, 0, 1, 1], [], []>} : vector<16x2xf32>, vector<2x32xf32>, vector<16x32xf32> -> vector<16x32xf32>
    %cst_75 = arith.constant dense<0.000000e+00> : vector<16x2xf32>
    %94 = tpu.matmul %5, %3, %cst_75 {dimension_numbers = #tpu.dot_dimension_numbers<[1], [0], [0], [1], [0, 0, 1, 1], [], []>} : vector<16x16xf32>, vector<16x2xf32>, vector<16x2xf32> -> vector<16x2xf32>
    %c0_76 = arith.constant 0 : index
    %c0_77 = arith.constant 0 : index
    %95 = vector.load %arg22[%c0_76, %c0_77] : memref<2x32xf32, #tpu.memory_space<vmem>>, vector<2x32xf32>
    %cst_78 = arith.constant dense<0.000000e+00> : vector<16x32xf32>
    %96 = tpu.matmul %94, %95, %cst_78 {dimension_numbers = #tpu.dot_dimension_numbers<[1], [0], [0], [1], [0, 0, 1, 1], [], []>} : vector<16x2xf32>, vector<2x32xf32>, vector<16x32xf32> -> vector<16x32xf32>
    %97 = arith.addf %93, %96 : vector<16x32xf32>
    %cst_79 = arith.constant dense<0.000000e+00> : vector<16x32xf32>
    %98 = tpu.matmul %4, %90, %cst_79 {dimension_numbers = #tpu.dot_dimension_numbers<[1], [0], [0], [1], [0, 0, 1, 1], [], []>} : vector<16x16xf32>, vector<16x32xf32>, vector<16x32xf32> -> vector<16x32xf32>
    %c0_80 = arith.constant 0 : index
    %c0_81 = arith.constant 0 : index
    %99 = vector.load %arg19[%c0_80, %c0_81] : memref<32x32xf32, #tpu.memory_space<vmem>>, vector<32x32xf32>
    %cst_82 = arith.constant dense<0.000000e+00> : vector<16x32xf32>
    %100 = tpu.matmul %98, %99, %cst_82 {dimension_numbers = #tpu.dot_dimension_numbers<[1], [0], [0], [1], [0, 0, 1, 1], [], []>} : vector<16x32xf32>, vector<32x32xf32>, vector<16x32xf32> -> vector<16x32xf32>
    %cst_83 = arith.constant dense<0.000000e+00> : vector<16x32xf32>
    %101 = tpu.matmul %5, %90, %cst_83 {dimension_numbers = #tpu.dot_dimension_numbers<[1], [0], [0], [1], [0, 0, 1, 1], [], []>} : vector<16x16xf32>, vector<16x32xf32>, vector<16x32xf32> -> vector<16x32xf32>
    %c0_84 = arith.constant 0 : index
    %c0_85 = arith.constant 0 : index
    %102 = vector.load %arg20[%c0_84, %c0_85] : memref<32x32xf32, #tpu.memory_space<vmem>>, vector<32x32xf32>
    %cst_86 = arith.constant dense<0.000000e+00> : vector<16x32xf32>
    %103 = tpu.matmul %101, %102, %cst_86 {dimension_numbers = #tpu.dot_dimension_numbers<[1], [0], [0], [1], [0, 0, 1, 1], [], []>} : vector<16x32xf32>, vector<32x32xf32>, vector<16x32xf32> -> vector<16x32xf32>
    %104 = arith.addf %100, %103 : vector<16x32xf32>
    %105 = arith.addf %104, %97 : vector<16x32xf32>
    %c0_87 = arith.constant 0 : index
    %c0_88 = arith.constant 0 : index
    %106 = vector.load %arg23[%c0_87, %c0_88] : memref<1x32xf32, #tpu.memory_space<vmem>>, vector<1x32xf32>
    %107 = vector.broadcast %106 : vector<1x32xf32> to vector<16x32xf32>
    %108 = arith.addf %105, %107 : vector<16x32xf32>
    %cst_89 = arith.constant 0.000000e+00 : f32
    %109 = vector.broadcast %cst_89 : f32 to vector<16x32xf32>
    %110 = arith.cmpf ogt, %108, %109 : vector<16x32xf32>
    %cst_90 = arith.constant 0.00999999977 : f32
    %111 = vector.broadcast %cst_90 : f32 to vector<16x32xf32>
    %112 = arith.mulf %111, %108 : vector<16x32xf32>
    %113 = arith.select %110, %108, %112 : vector<16x32xi1>, vector<16x32xf32>
    %c0_91 = arith.constant 0 : index
    %c0_92 = arith.constant 0 : index
    %114 = vector.load %arg24[%c0_91, %c0_92] : memref<32x32xf32, #tpu.memory_space<vmem>>, vector<32x32xf32>
    %cst_93 = arith.constant dense<0.000000e+00> : vector<16x32xf32>
    %115 = tpu.matmul %113, %114, %cst_93 {dimension_numbers = #tpu.dot_dimension_numbers<[1], [0], [0], [1], [0, 0, 1, 1], [], []>} : vector<16x32xf32>, vector<32x32xf32>, vector<16x32xf32> -> vector<16x32xf32>
    %c0_94 = arith.constant 0 : index
    %c0_95 = arith.constant 0 : index
    %116 = vector.load %arg25[%c0_94, %c0_95] : memref<1x32xf32, #tpu.memory_space<vmem>>, vector<1x32xf32>
    %117 = vector.broadcast %116 : vector<1x32xf32> to vector<16x32xf32>
    %118 = arith.addf %115, %117 : vector<16x32xf32>
    %cst_96 = arith.constant 0.000000e+00 : f32
    %119 = vector.broadcast %cst_96 : f32 to vector<16x32xf32>
    %120 = arith.cmpf ogt, %118, %119 : vector<16x32xf32>
    %cst_97 = arith.constant 0.00999999977 : f32
    %121 = vector.broadcast %cst_97 : f32 to vector<16x32xf32>
    %122 = arith.mulf %121, %118 : vector<16x32xf32>
    %123 = arith.select %120, %118, %122 : vector<16x32xi1>, vector<16x32xf32>
    %cst_98 = arith.constant dense<0.000000e+00> : vector<16x32xf32>
    %124 = tpu.matmul %6, %123, %cst_98 {dimension_numbers = #tpu.dot_dimension_numbers<[1], [0], [0], [1], [0, 0, 1, 1], [], []>} : vector<16x16xf32>, vector<16x32xf32>, vector<16x32xf32> -> vector<16x32xf32>
    %125 = vector.broadcast %7 : vector<16x1xf32> to vector<16x32xf32>
    %126 = arith.mulf %124, %125 : vector<16x32xf32>
    %c0_99 = arith.constant 0 : index
    %c0_100 = arith.constant 0 : index
    %127 = vector.load %arg26[%c0_99, %c0_100] : memref<32x32xf32, #tpu.memory_space<vmem>>, vector<32x32xf32>
    %cst_101 = arith.constant dense<0.000000e+00> : vector<16x32xf32>
    %128 = tpu.matmul %126, %127, %cst_101 {dimension_numbers = #tpu.dot_dimension_numbers<[1], [0], [0], [1], [0, 0, 1, 1], [], []>} : vector<16x32xf32>, vector<32x32xf32>, vector<16x32xf32> -> vector<16x32xf32>
    %c0_102 = arith.constant 0 : index
    %c0_103 = arith.constant 0 : index
    %129 = vector.load %arg27[%c0_102, %c0_103] : memref<1x32xf32, #tpu.memory_space<vmem>>, vector<1x32xf32>
    %130 = vector.broadcast %129 : vector<1x32xf32> to vector<16x32xf32>
    %131 = arith.addf %128, %130 : vector<16x32xf32>
    %cst_104 = arith.constant 0.000000e+00 : f32
    %132 = vector.broadcast %cst_104 : f32 to vector<16x32xf32>
    %133 = arith.cmpf ogt, %131, %132 : vector<16x32xf32>
    %cst_105 = arith.constant 0.00999999977 : f32
    %134 = vector.broadcast %cst_105 : f32 to vector<16x32xf32>
    %135 = arith.mulf %134, %131 : vector<16x32xf32>
    %136 = arith.select %133, %131, %135 : vector<16x32xi1>, vector<16x32xf32>
    %c0_106 = arith.constant 0 : index
    %c0_107 = arith.constant 0 : index
    %137 = vector.load %arg28[%c0_106, %c0_107] : memref<32x32xf32, #tpu.memory_space<vmem>>, vector<32x32xf32>
    %cst_108 = arith.constant dense<0.000000e+00> : vector<16x32xf32>
    %138 = tpu.matmul %136, %137, %cst_108 {dimension_numbers = #tpu.dot_dimension_numbers<[1], [0], [0], [1], [0, 0, 1, 1], [], []>} : vector<16x32xf32>, vector<32x32xf32>, vector<16x32xf32> -> vector<16x32xf32>
    %c0_109 = arith.constant 0 : index
    %c0_110 = arith.constant 0 : index
    %139 = vector.load %arg29[%c0_109, %c0_110] : memref<1x32xf32, #tpu.memory_space<vmem>>, vector<1x32xf32>
    %140 = vector.broadcast %139 : vector<1x32xf32> to vector<16x32xf32>
    %141 = arith.addf %138, %140 : vector<16x32xf32>
    %cst_111 = arith.constant 0.000000e+00 : f32
    %142 = vector.broadcast %cst_111 : f32 to vector<16x32xf32>
    %143 = arith.cmpf ogt, %141, %142 : vector<16x32xf32>
    %cst_112 = arith.constant 0.00999999977 : f32
    %144 = vector.broadcast %cst_112 : f32 to vector<16x32xf32>
    %145 = arith.mulf %144, %141 : vector<16x32xf32>
    %146 = arith.select %143, %141, %145 : vector<16x32xi1>, vector<16x32xf32>
    %cst_113 = arith.constant dense<0.000000e+00> : vector<16x32xf32>
    %147 = tpu.matmul %4, %146, %cst_113 {dimension_numbers = #tpu.dot_dimension_numbers<[1], [0], [0], [1], [0, 0, 1, 1], [], []>} : vector<16x16xf32>, vector<16x32xf32>, vector<16x32xf32> -> vector<16x32xf32>
    %c0_114 = arith.constant 0 : index
    %c0_115 = arith.constant 0 : index
    %148 = vector.load %arg19[%c0_114, %c0_115] : memref<32x32xf32, #tpu.memory_space<vmem>>, vector<32x32xf32>
    %cst_116 = arith.constant dense<0.000000e+00> : vector<16x32xf32>
    %149 = tpu.matmul %147, %148, %cst_116 {dimension_numbers = #tpu.dot_dimension_numbers<[1], [0], [0], [1], [0, 0, 1, 1], [], []>} : vector<16x32xf32>, vector<32x32xf32>, vector<16x32xf32> -> vector<16x32xf32>
    %cst_117 = arith.constant dense<0.000000e+00> : vector<16x32xf32>
    %150 = tpu.matmul %5, %146, %cst_117 {dimension_numbers = #tpu.dot_dimension_numbers<[1], [0], [0], [1], [0, 0, 1, 1], [], []>} : vector<16x16xf32>, vector<16x32xf32>, vector<16x32xf32> -> vector<16x32xf32>
    %c0_118 = arith.constant 0 : index
    %c0_119 = arith.constant 0 : index
    %151 = vector.load %arg20[%c0_118, %c0_119] : memref<32x32xf32, #tpu.memory_space<vmem>>, vector<32x32xf32>
    %cst_120 = arith.constant dense<0.000000e+00> : vector<16x32xf32>
    %152 = tpu.matmul %150, %151, %cst_120 {dimension_numbers = #tpu.dot_dimension_numbers<[1], [0], [0], [1], [0, 0, 1, 1], [], []>} : vector<16x32xf32>, vector<32x32xf32>, vector<16x32xf32> -> vector<16x32xf32>
    %153 = arith.addf %149, %152 : vector<16x32xf32>
    %154 = arith.addf %153, %97 : vector<16x32xf32>
    %c0_121 = arith.constant 0 : index
    %c0_122 = arith.constant 0 : index
    %155 = vector.load %arg23[%c0_121, %c0_122] : memref<1x32xf32, #tpu.memory_space<vmem>>, vector<1x32xf32>
    %156 = vector.broadcast %155 : vector<1x32xf32> to vector<16x32xf32>
    %157 = arith.addf %154, %156 : vector<16x32xf32>
    %cst_123 = arith.constant 0.000000e+00 : f32
    %158 = vector.broadcast %cst_123 : f32 to vector<16x32xf32>
    %159 = arith.cmpf ogt, %157, %158 : vector<16x32xf32>
    %cst_124 = arith.constant 0.00999999977 : f32
    %160 = vector.broadcast %cst_124 : f32 to vector<16x32xf32>
    %161 = arith.mulf %160, %157 : vector<16x32xf32>
    %162 = arith.select %159, %157, %161 : vector<16x32xi1>, vector<16x32xf32>
    %c0_125 = arith.constant 0 : index
    %c0_126 = arith.constant 0 : index
    %163 = vector.load %arg24[%c0_125, %c0_126] : memref<32x32xf32, #tpu.memory_space<vmem>>, vector<32x32xf32>
    %cst_127 = arith.constant dense<0.000000e+00> : vector<16x32xf32>
    %164 = tpu.matmul %162, %163, %cst_127 {dimension_numbers = #tpu.dot_dimension_numbers<[1], [0], [0], [1], [0, 0, 1, 1], [], []>} : vector<16x32xf32>, vector<32x32xf32>, vector<16x32xf32> -> vector<16x32xf32>
    %c0_128 = arith.constant 0 : index
    %c0_129 = arith.constant 0 : index
    %165 = vector.load %arg25[%c0_128, %c0_129] : memref<1x32xf32, #tpu.memory_space<vmem>>, vector<1x32xf32>
    %166 = vector.broadcast %165 : vector<1x32xf32> to vector<16x32xf32>
    %167 = arith.addf %164, %166 : vector<16x32xf32>
    %cst_130 = arith.constant 0.000000e+00 : f32
    %168 = vector.broadcast %cst_130 : f32 to vector<16x32xf32>
    %169 = arith.cmpf ogt, %167, %168 : vector<16x32xf32>
    %cst_131 = arith.constant 0.00999999977 : f32
    %170 = vector.broadcast %cst_131 : f32 to vector<16x32xf32>
    %171 = arith.mulf %170, %167 : vector<16x32xf32>
    %172 = arith.select %169, %167, %171 : vector<16x32xi1>, vector<16x32xf32>
    %cst_132 = arith.constant dense<0.000000e+00> : vector<16x32xf32>
    %173 = tpu.matmul %6, %172, %cst_132 {dimension_numbers = #tpu.dot_dimension_numbers<[1], [0], [0], [1], [0, 0, 1, 1], [], []>} : vector<16x16xf32>, vector<16x32xf32>, vector<16x32xf32> -> vector<16x32xf32>
    %174 = vector.broadcast %7 : vector<16x1xf32> to vector<16x32xf32>
    %175 = arith.mulf %173, %174 : vector<16x32xf32>
    %176 = arith.addf %126, %175 : vector<16x32xf32>
    %c0_133 = arith.constant 0 : index
    %c0_134 = arith.constant 0 : index
    %177 = vector.load %arg26[%c0_133, %c0_134] : memref<32x32xf32, #tpu.memory_space<vmem>>, vector<32x32xf32>
    %cst_135 = arith.constant dense<0.000000e+00> : vector<16x32xf32>
    %178 = tpu.matmul %176, %177, %cst_135 {dimension_numbers = #tpu.dot_dimension_numbers<[1], [0], [0], [1], [0, 0, 1, 1], [], []>} : vector<16x32xf32>, vector<32x32xf32>, vector<16x32xf32> -> vector<16x32xf32>
    %c0_136 = arith.constant 0 : index
    %c0_137 = arith.constant 0 : index
    %179 = vector.load %arg27[%c0_136, %c0_137] : memref<1x32xf32, #tpu.memory_space<vmem>>, vector<1x32xf32>
    %180 = vector.broadcast %179 : vector<1x32xf32> to vector<16x32xf32>
    %181 = arith.addf %178, %180 : vector<16x32xf32>
    %cst_138 = arith.constant 0.000000e+00 : f32
    %182 = vector.broadcast %cst_138 : f32 to vector<16x32xf32>
    %183 = arith.cmpf ogt, %181, %182 : vector<16x32xf32>
    %cst_139 = arith.constant 0.00999999977 : f32
    %184 = vector.broadcast %cst_139 : f32 to vector<16x32xf32>
    %185 = arith.mulf %184, %181 : vector<16x32xf32>
    %186 = arith.select %183, %181, %185 : vector<16x32xi1>, vector<16x32xf32>
    %c0_140 = arith.constant 0 : index
    %c0_141 = arith.constant 0 : index
    %187 = vector.load %arg28[%c0_140, %c0_141] : memref<32x32xf32, #tpu.memory_space<vmem>>, vector<32x32xf32>
    %cst_142 = arith.constant dense<0.000000e+00> : vector<16x32xf32>
    %188 = tpu.matmul %186, %187, %cst_142 {dimension_numbers = #tpu.dot_dimension_numbers<[1], [0], [0], [1], [0, 0, 1, 1], [], []>} : vector<16x32xf32>, vector<32x32xf32>, vector<16x32xf32> -> vector<16x32xf32>
    %c0_143 = arith.constant 0 : index
    %c0_144 = arith.constant 0 : index
    %189 = vector.load %arg29[%c0_143, %c0_144] : memref<1x32xf32, #tpu.memory_space<vmem>>, vector<1x32xf32>
    %190 = vector.broadcast %189 : vector<1x32xf32> to vector<16x32xf32>
    %191 = arith.addf %188, %190 : vector<16x32xf32>
    %cst_145 = arith.constant 0.000000e+00 : f32
    %192 = vector.broadcast %cst_145 : f32 to vector<16x32xf32>
    %193 = arith.cmpf ogt, %191, %192 : vector<16x32xf32>
    %cst_146 = arith.constant 0.00999999977 : f32
    %194 = vector.broadcast %cst_146 : f32 to vector<16x32xf32>
    %195 = arith.mulf %194, %191 : vector<16x32xf32>
    %196 = arith.select %193, %191, %195 : vector<16x32xi1>, vector<16x32xf32>
    %cst_147 = arith.constant dense<0.000000e+00> : vector<16x32xf32>
    %197 = tpu.matmul %4, %196, %cst_147 {dimension_numbers = #tpu.dot_dimension_numbers<[1], [0], [0], [1], [0, 0, 1, 1], [], []>} : vector<16x16xf32>, vector<16x32xf32>, vector<16x32xf32> -> vector<16x32xf32>
    %c0_148 = arith.constant 0 : index
    %c0_149 = arith.constant 0 : index
    %198 = vector.load %arg19[%c0_148, %c0_149] : memref<32x32xf32, #tpu.memory_space<vmem>>, vector<32x32xf32>
    %cst_150 = arith.constant dense<0.000000e+00> : vector<16x32xf32>
    %199 = tpu.matmul %197, %198, %cst_150 {dimension_numbers = #tpu.dot_dimension_numbers<[1], [0], [0], [1], [0, 0, 1, 1], [], []>} : vector<16x32xf32>, vector<32x32xf32>, vector<16x32xf32> -> vector<16x32xf32>
    %cst_151 = arith.constant dense<0.000000e+00> : vector<16x32xf32>
    %200 = tpu.matmul %5, %196, %cst_151 {dimension_numbers = #tpu.dot_dimension_numbers<[1], [0], [0], [1], [0, 0, 1, 1], [], []>} : vector<16x16xf32>, vector<16x32xf32>, vector<16x32xf32> -> vector<16x32xf32>
    %c0_152 = arith.constant 0 : index
    %c0_153 = arith.constant 0 : index
    %201 = vector.load %arg20[%c0_152, %c0_153] : memref<32x32xf32, #tpu.memory_space<vmem>>, vector<32x32xf32>
    %cst_154 = arith.constant dense<0.000000e+00> : vector<16x32xf32>
    %202 = tpu.matmul %200, %201, %cst_154 {dimension_numbers = #tpu.dot_dimension_numbers<[1], [0], [0], [1], [0, 0, 1, 1], [], []>} : vector<16x32xf32>, vector<32x32xf32>, vector<16x32xf32> -> vector<16x32xf32>
    %203 = arith.addf %199, %202 : vector<16x32xf32>
    %204 = arith.addf %203, %97 : vector<16x32xf32>
    %c0_155 = arith.constant 0 : index
    %c0_156 = arith.constant 0 : index
    %205 = vector.load %arg23[%c0_155, %c0_156] : memref<1x32xf32, #tpu.memory_space<vmem>>, vector<1x32xf32>
    %206 = vector.broadcast %205 : vector<1x32xf32> to vector<16x32xf32>
    %207 = arith.addf %204, %206 : vector<16x32xf32>
    %cst_157 = arith.constant 0.000000e+00 : f32
    %208 = vector.broadcast %cst_157 : f32 to vector<16x32xf32>
    %209 = arith.cmpf ogt, %207, %208 : vector<16x32xf32>
    %cst_158 = arith.constant 0.00999999977 : f32
    %210 = vector.broadcast %cst_158 : f32 to vector<16x32xf32>
    %211 = arith.mulf %210, %207 : vector<16x32xf32>
    %212 = arith.select %209, %207, %211 : vector<16x32xi1>, vector<16x32xf32>
    %c0_159 = arith.constant 0 : index
    %c0_160 = arith.constant 0 : index
    %213 = vector.load %arg24[%c0_159, %c0_160] : memref<32x32xf32, #tpu.memory_space<vmem>>, vector<32x32xf32>
    %cst_161 = arith.constant dense<0.000000e+00> : vector<16x32xf32>
    %214 = tpu.matmul %212, %213, %cst_161 {dimension_numbers = #tpu.dot_dimension_numbers<[1], [0], [0], [1], [0, 0, 1, 1], [], []>} : vector<16x32xf32>, vector<32x32xf32>, vector<16x32xf32> -> vector<16x32xf32>
    %c0_162 = arith.constant 0 : index
    %c0_163 = arith.constant 0 : index
    %215 = vector.load %arg25[%c0_162, %c0_163] : memref<1x32xf32, #tpu.memory_space<vmem>>, vector<1x32xf32>
    %216 = vector.broadcast %215 : vector<1x32xf32> to vector<16x32xf32>
    %217 = arith.addf %214, %216 : vector<16x32xf32>
    %cst_164 = arith.constant 0.000000e+00 : f32
    %218 = vector.broadcast %cst_164 : f32 to vector<16x32xf32>
    %219 = arith.cmpf ogt, %217, %218 : vector<16x32xf32>
    %cst_165 = arith.constant 0.00999999977 : f32
    %220 = vector.broadcast %cst_165 : f32 to vector<16x32xf32>
    %221 = arith.mulf %220, %217 : vector<16x32xf32>
    %222 = arith.select %219, %217, %221 : vector<16x32xi1>, vector<16x32xf32>
    %cst_166 = arith.constant dense<0.000000e+00> : vector<16x32xf32>
    %223 = tpu.matmul %6, %222, %cst_166 {dimension_numbers = #tpu.dot_dimension_numbers<[1], [0], [0], [1], [0, 0, 1, 1], [], []>} : vector<16x16xf32>, vector<16x32xf32>, vector<16x32xf32> -> vector<16x32xf32>
    %224 = vector.broadcast %7 : vector<16x1xf32> to vector<16x32xf32>
    %225 = arith.mulf %223, %224 : vector<16x32xf32>
    %226 = arith.addf %176, %225 : vector<16x32xf32>
    %c0_167 = arith.constant 0 : index
    %c0_168 = arith.constant 0 : index
    %227 = vector.load %arg30[%c0_167, %c0_168] : memref<32x32xf32, #tpu.memory_space<vmem>>, vector<32x32xf32>
    %cst_169 = arith.constant dense<0.000000e+00> : vector<16x32xf32>
    %228 = tpu.matmul %226, %227, %cst_169 {dimension_numbers = #tpu.dot_dimension_numbers<[1], [0], [0], [1], [0, 0, 1, 1], [], []>} : vector<16x32xf32>, vector<32x32xf32>, vector<16x32xf32> -> vector<16x32xf32>
    %c0_170 = arith.constant 0 : index
    %c0_171 = arith.constant 0 : index
    %229 = vector.load %arg31[%c0_170, %c0_171] : memref<1x32xf32, #tpu.memory_space<vmem>>, vector<1x32xf32>
    %230 = vector.broadcast %229 : vector<1x32xf32> to vector<16x32xf32>
    %231 = arith.addf %228, %230 : vector<16x32xf32>
    %cst_172 = arith.constant 0.000000e+00 : f32
    %232 = vector.broadcast %cst_172 : f32 to vector<16x32xf32>
    %233 = arith.cmpf ogt, %231, %232 : vector<16x32xf32>
    %cst_173 = arith.constant 0.00999999977 : f32
    %234 = vector.broadcast %cst_173 : f32 to vector<16x32xf32>
    %235 = arith.mulf %234, %231 : vector<16x32xf32>
    %236 = arith.select %233, %231, %235 : vector<16x32xi1>, vector<16x32xf32>
    %c0_174 = arith.constant 0 : index
    %c0_175 = arith.constant 0 : index
    %237 = vector.load %arg32[%c0_174, %c0_175] : memref<32x1xf32, #tpu.memory_space<vmem>>, vector<32x1xf32>
    %cst_176 = arith.constant dense<0.000000e+00> : vector<16x1xf32>
    %238 = tpu.matmul %236, %237, %cst_176 {dimension_numbers = #tpu.dot_dimension_numbers<[1], [0], [0], [1], [0, 0, 1, 1], [], []>} : vector<16x32xf32>, vector<32x1xf32>, vector<16x1xf32> -> vector<16x1xf32>
    %c0_177 = arith.constant 0 : index
    %c0_178 = arith.constant 0 : index
    %239 = vector.load %arg33[%c0_177, %c0_178] : memref<1x1xf32, #tpu.memory_space<vmem>>, vector<1x1xf32>
    %240 = vector.broadcast %239 : vector<1x1xf32> to vector<16x1xf32>
    %241 = arith.addf %238, %240 : vector<16x1xf32>
    %cst_179 = arith.constant 0.000000e+00 : f32
    %242 = vector.broadcast %cst_179 : f32 to vector<16x1xf32>
    %243 = arith.cmpf ogt, %241, %242 : vector<16x1xf32>
    %cst_180 = arith.constant 0.00999999977 : f32
    %244 = vector.broadcast %cst_180 : f32 to vector<16x1xf32>
    %245 = arith.mulf %244, %241 : vector<16x1xf32>
    %246 = arith.select %243, %241, %245 : vector<16x1xi1>, vector<16x1xf32>
    %c0_181 = arith.constant 0 : index
    %c0_182 = arith.constant 0 : index
    %247 = vector.load %arg34[%c0_181, %c0_182] : memref<16x1xf32, #tpu.memory_space<vmem>>, vector<16x1xf32>
    %248 = arith.mulf %246, %247 : vector<16x1xf32>
    %cst_183 = arith.constant dense<0.000000e+00> : vector<1xf32>
    %249 = vector.multi_reduction <add>, %248, %cst_183 [0] : vector<16x1xf32> to vector<1xf32>
    %250 = vector.shape_cast %249 : vector<1xf32> to vector<1x1xf32>
    %c0_184 = arith.constant 0 : index
    %c0_185 = arith.constant 0 : index
    %251 = vector.load %arg35[%c0_184, %c0_185] : memref<1x1xf32, #tpu.memory_space<vmem>>, vector<1x1xf32>
    %252 = arith.addf %250, %251 : vector<1x1xf32>
    %cst_186 = arith.constant 0.000000e+00 : f32
    %253 = vector.broadcast %cst_186 : f32 to vector<1x1xf32>
    %254 = arith.subf %253, %252 : vector<1x1xf32>
    %255 = math.exp %254 : vector<1x1xf32>
    %cst_187 = arith.constant 1.000000e+00 : f32
    %256 = vector.broadcast %cst_187 : f32 to vector<1x1xf32>
    %257 = arith.addf %256, %255 : vector<1x1xf32>
    %cst_188 = arith.constant 1.000000e+00 : f32
    %258 = vector.broadcast %cst_188 : f32 to vector<1x1xf32>
    %259 = arith.divf %258, %257 : vector<1x1xf32>
    %c0_189 = arith.constant 0 : index
    %c0_190 = arith.constant 0 : index
    %c0_191 = arith.constant 0 : index
    %260 = vector.load %arg36[%c0_189, %c0_190, %c0_191] : memref<1x1x1xf32, #tpu.memory_space<vmem>>, vector<1x1x1xf32>
    %261 = vector.shape_cast %260 : vector<1x1x1xf32> to vector<1x1xf32>
    %262 = vector.shape_cast %259 : vector<1x1xf32> to vector<1x1x1xf32>
    tpu.vector_store %arg36[%c0_189, %c0_190, %c0_191], %262 {strides = array<i32>} : memref<1x1x1xf32, #tpu.memory_space<vmem>>, vector<1x1x1xf32>,
    return
  }
  func.func @transform_0(%arg0: i32) -> (i32, i32, i32) {
    %c0_i32 = arith.constant 0 : i32
    %c0_i32_0 = arith.constant 0 : i32
    %c0_i32_1 = arith.constant 0 : i32
    return %arg0, %c0_i32, %c0_i32_0 : i32, i32, i32
  }
  func.func @transform_1(%arg0: i32) -> (i32, i32, i32) {
    %c0_i32 = arith.constant 0 : i32
    %c0_i32_0 = arith.constant 0 : i32
    %c0_i32_1 = arith.constant 0 : i32
    return %arg0, %c0_i32, %c0_i32_0 : i32, i32, i32
  }
  func.func @transform_2(%arg0: i32) -> (i32, i32) {
    %c0_i32 = arith.constant 0 : i32
    %c0_i32_0 = arith.constant 0 : i32
    %c0_i32_1 = arith.constant 0 : i32
    return %c0_i32, %c0_i32_0 : i32, i32
  }
  func.func @transform_3(%arg0: i32) -> (i32, i32) {
    %c0_i32 = arith.constant 0 : i32
    %c0_i32_0 = arith.constant 0 : i32
    %c0_i32_1 = arith.constant 0 : i32
    return %c0_i32, %c0_i32_0 : i32, i32
  }
  func.func @transform_4(%arg0: i32) -> (i32, i32) {
    %c0_i32 = arith.constant 0 : i32
    %c0_i32_0 = arith.constant 0 : i32
    %c0_i32_1 = arith.constant 0 : i32
    return %c0_i32, %c0_i32_0 : i32, i32
  }
  func.func @transform_5(%arg0: i32) -> (i32, i32) {
    %c0_i32 = arith.constant 0 : i32
    %c0_i32_0 = arith.constant 0 : i32
    %c0_i32_1 = arith.constant 0 : i32
    return %c0_i32, %c0_i32_0 : i32, i32
  }
  func.func @transform_6(%arg0: i32) -> (i32, i32) {
    %c0_i32 = arith.constant 0 : i32
    %c0_i32_0 = arith.constant 0 : i32
    %c0_i32_1 = arith.constant 0 : i32
    return %c0_i32, %c0_i32_0 : i32, i32
  }
  func.func @transform_7(%arg0: i32) -> (i32, i32) {
    %c0_i32 = arith.constant 0 : i32
    %c0_i32_0 = arith.constant 0 : i32
    %c0_i32_1 = arith.constant 0 : i32
    return %c0_i32, %c0_i32_0 : i32, i32
  }
  func.func @transform_8(%arg0: i32) -> (i32, i32) {
    %c0_i32 = arith.constant 0 : i32
    %c0_i32_0 = arith.constant 0 : i32
    %c0_i32_1 = arith.constant 0 : i32
    return %c0_i32, %c0_i32_0 : i32, i32
  }
  func.func @transform_9(%arg0: i32) -> (i32, i32) {
    %c0_i32 = arith.constant 0 : i32
    %c0_i32_0 = arith.constant 0 : i32
    %c0_i32_1 = arith.constant 0 : i32
    return %c0_i32, %c0_i32_0 : i32, i32
  }
  func.func @transform_10(%arg0: i32) -> (i32, i32) {
    %c0_i32 = arith.constant 0 : i32
    %c0_i32_0 = arith.constant 0 : i32
    %c0_i32_1 = arith.constant 0 : i32
    return %c0_i32, %c0_i32_0 : i32, i32
  }
  func.func @transform_11(%arg0: i32) -> (i32, i32) {
    %c0_i32 = arith.constant 0 : i32
    %c0_i32_0 = arith.constant 0 : i32
    %c0_i32_1 = arith.constant 0 : i32
    return %c0_i32, %c0_i32_0 : i32, i32
  }
  func.func @transform_12(%arg0: i32) -> (i32, i32) {
    %c0_i32 = arith.constant 0 : i32
    %c0_i32_0 = arith.constant 0 : i32
    %c0_i32_1 = arith.constant 0 : i32
    return %c0_i32, %c0_i32_0 : i32, i32
  }
  func.func @transform_13(%arg0: i32) -> (i32, i32) {
    %c0_i32 = arith.constant 0 : i32
    %c0_i32_0 = arith.constant 0 : i32
    %c0_i32_1 = arith.constant 0 : i32
    return %c0_i32, %c0_i32_0 : i32, i32
  }
  func.func @transform_14(%arg0: i32) -> (i32, i32) {
    %c0_i32 = arith.constant 0 : i32
    %c0_i32_0 = arith.constant 0 : i32
    %c0_i32_1 = arith.constant 0 : i32
    return %c0_i32, %c0_i32_0 : i32, i32
  }
  func.func @transform_15(%arg0: i32) -> (i32, i32) {
    %c0_i32 = arith.constant 0 : i32
    %c0_i32_0 = arith.constant 0 : i32
    %c0_i32_1 = arith.constant 0 : i32
    return %c0_i32, %c0_i32_0 : i32, i32
  }
  func.func @transform_16(%arg0: i32) -> (i32, i32) {
    %c0_i32 = arith.constant 0 : i32
    %c0_i32_0 = arith.constant 0 : i32
    %c0_i32_1 = arith.constant 0 : i32
    return %c0_i32, %c0_i32_0 : i32, i32
  }
  func.func @transform_17(%arg0: i32) -> (i32, i32) {
    %c0_i32 = arith.constant 0 : i32
    %c0_i32_0 = arith.constant 0 : i32
    %c0_i32_1 = arith.constant 0 : i32
    return %c0_i32, %c0_i32_0 : i32, i32
  }
  func.func @transform_18(%arg0: i32) -> (i32, i32) {
    %c0_i32 = arith.constant 0 : i32
    %c0_i32_0 = arith.constant 0 : i32
    %c0_i32_1 = arith.constant 0 : i32
    return %c0_i32, %c0_i32_0 : i32, i32
  }
  func.func @transform_19(%arg0: i32) -> (i32, i32) {
    %c0_i32 = arith.constant 0 : i32
    %c0_i32_0 = arith.constant 0 : i32
    %c0_i32_1 = arith.constant 0 : i32
    return %c0_i32, %c0_i32_0 : i32, i32
  }
  func.func @transform_20(%arg0: i32) -> (i32, i32) {
    %c0_i32 = arith.constant 0 : i32
    %c0_i32_0 = arith.constant 0 : i32
    %c0_i32_1 = arith.constant 0 : i32
    return %c0_i32, %c0_i32_0 : i32, i32
  }
  func.func @transform_21(%arg0: i32) -> (i32, i32) {
    %c0_i32 = arith.constant 0 : i32
    %c0_i32_0 = arith.constant 0 : i32
    %c0_i32_1 = arith.constant 0 : i32
    return %c0_i32, %c0_i32_0 : i32, i32
  }
  func.func @transform_22(%arg0: i32) -> (i32, i32) {
    %c0_i32 = arith.constant 0 : i32
    %c0_i32_0 = arith.constant 0 : i32
    %c0_i32_1 = arith.constant 0 : i32
    return %c0_i32, %c0_i32_0 : i32, i32
  }
  func.func @transform_23(%arg0: i32) -> (i32, i32) {
    %c0_i32 = arith.constant 0 : i32
    %c0_i32_0 = arith.constant 0 : i32
    %c0_i32_1 = arith.constant 0 : i32
    return %c0_i32, %c0_i32_0 : i32, i32
  }
  func.func @transform_24(%arg0: i32) -> (i32, i32) {
    %c0_i32 = arith.constant 0 : i32
    %c0_i32_0 = arith.constant 0 : i32
    %c0_i32_1 = arith.constant 0 : i32
    return %c0_i32, %c0_i32_0 : i32, i32
  }
  func.func @transform_25(%arg0: i32) -> (i32, i32) {
    %c0_i32 = arith.constant 0 : i32
    %c0_i32_0 = arith.constant 0 : i32
    %c0_i32_1 = arith.constant 0 : i32
    return %c0_i32, %c0_i32_0 : i32, i32
  }
  func.func @transform_26(%arg0: i32) -> (i32, i32) {
    %c0_i32 = arith.constant 0 : i32
    %c0_i32_0 = arith.constant 0 : i32
    %c0_i32_1 = arith.constant 0 : i32
    return %c0_i32, %c0_i32_0 : i32, i32
  }
  func.func @transform_27(%arg0: i32) -> (i32, i32) {
    %c0_i32 = arith.constant 0 : i32
    %c0_i32_0 = arith.constant 0 : i32
    %c0_i32_1 = arith.constant 0 : i32
    return %c0_i32, %c0_i32_0 : i32, i32
  }
  func.func @transform_28(%arg0: i32) -> (i32, i32) {
    %c0_i32 = arith.constant 0 : i32
    %c0_i32_0 = arith.constant 0 : i32
    %c0_i32_1 = arith.constant 0 : i32
    return %c0_i32, %c0_i32_0 : i32, i32
  }
  func.func @transform_29(%arg0: i32) -> (i32, i32) {
    %c0_i32 = arith.constant 0 : i32
    %c0_i32_0 = arith.constant 0 : i32
    %c0_i32_1 = arith.constant 0 : i32
    return %c0_i32, %c0_i32_0 : i32, i32
  }
  func.func @transform_30(%arg0: i32) -> (i32, i32) {
    %c0_i32 = arith.constant 0 : i32
    %c0_i32_0 = arith.constant 0 : i32
    %c0_i32_1 = arith.constant 0 : i32
    return %c0_i32, %c0_i32_0 : i32, i32
  }
  func.func @transform_31(%arg0: i32) -> (i32, i32) {
    %c0_i32 = arith.constant 0 : i32
    %c0_i32_0 = arith.constant 0 : i32
    %c0_i32_1 = arith.constant 0 : i32
    return %c0_i32, %c0_i32_0 : i32, i32
  }
  func.func @transform_32(%arg0: i32) -> (i32, i32) {
    %c0_i32 = arith.constant 0 : i32
    %c0_i32_0 = arith.constant 0 : i32
    %c0_i32_1 = arith.constant 0 : i32
    return %c0_i32, %c0_i32_0 : i32, i32
  }
  func.func @transform_33(%arg0: i32) -> (i32, i32) {
    %c0_i32 = arith.constant 0 : i32
    %c0_i32_0 = arith.constant 0 : i32
    %c0_i32_1 = arith.constant 0 : i32
    return %c0_i32, %c0_i32_0 : i32, i32
  }
  func.func @transform_34(%arg0: i32) -> (i32, i32) {
    %c0_i32 = arith.constant 0 : i32
    %c0_i32_0 = arith.constant 0 : i32
    %c0_i32_1 = arith.constant 0 : i32
    return %c0_i32, %c0_i32_0 : i32, i32
  }
  func.func @transform_35(%arg0: i32) -> (i32, i32, i32) {
    %c0_i32 = arith.constant 0 : i32
    %c0_i32_0 = arith.constant 0 : i32
    %c0_i32_1 = arith.constant 0 : i32
    return %arg0, %c0_i32, %c0_i32_0 : i32, i32, i32
  }
}

</mosaic_0001>

<llo_original>
// kernel: forward.1
$region0: #{forward.1}
  #allocation0 [shape = 'u32[]', space=smem, size = 0x4, offset = 0x4, fixed_abs, tag = 'smem constant byte address 0x4 - core index']
  #allocation1 [shape = 'u32[144,128]{1,0:T(1,128)}', space=vmem, size = 0x12000, scoped, tag = 'internal scratch']
  #allocation2 [shape = 'f32[1,1]{1,0:T(1,128)S(1)}', space=vmem, size = 0x200, scoped, tag = 'scoped memory for forward.1']
  #allocation3 [shape = 'f32[1,1]{1,0:T(1,128)S(1)}', space=vmem, size = 0x200, scoped, tag = 'scoped memory for forward.1']
  %s0 = inlined_call_operand.smem [shape: u32[36], index: -1, kind: input, shape index: {}]
  %s1 = sld [smem:[%s0]]
  %s2 = scalar_lea.smem %s0, 1
  %s3 = sld [smem:[%s2]]
  %s4 = scalar_lea.smem %s0, 2
  %s5 = sld [smem:[%s4]]
  %s6 = scalar_lea.smem %s0, 3
  %s7 = sld [smem:[%s6]]
  %s8 = scalar_lea.smem %s0, 4
  %s9 = sld [smem:[%s8]]
  %s10 = scalar_lea.smem %s0, 5
  %s11 = sld [smem:[%s10]]
  %s12 = scalar_lea.smem %s0, 6
  %s13 = sld [smem:[%s12]]
  %s14 = scalar_lea.smem %s0, 7
  %s15 = sld [smem:[%s14]]
  %s16 = scalar_lea.smem %s0, 8
  %s17 = sld [smem:[%s16]]
  %s18 = scalar_lea.smem %s0, 9
  %s19 = sld [smem:[%s18]]
  %s20 = scalar_lea.smem %s0, 10
  %s21 = sld [smem:[%s20]]
  %s22 = scalar_lea.smem %s0, 11
  %s23 = sld [smem:[%s22]]
  %s24 = scalar_lea.smem %s0, 12
  %s25 = sld [smem:[%s24]]
  %s26 = scalar_lea.smem %s0, 13
  %s27 = sld [smem:[%s26]]
  %s28 = scalar_lea.smem %s0, 14
  %s29 = sld [smem:[%s28]]
  %s30 = scalar_lea.smem %s0, 15
  %s31 = sld [smem:[%s30]]
  %s32 = scalar_lea.smem %s0, 16
  %s33 = sld [smem:[%s32]]
  %s34 = scalar_lea.smem %s0, 17
  %s35 = sld [smem:[%s34]]
  %s36 = scalar_lea.smem %s0, 18
  %s37 = sld [smem:[%s36]]
  %s38 = scalar_lea.smem %s0, 19
  %s39 = sld [smem:[%s38]]
  %s40 = scalar_lea.smem %s0, 20
  %s41 = sld [smem:[%s40]]
  %s42 = scalar_lea.smem %s0, 21
  %s43 = sld [smem:[%s42]]
  %s44 = scalar_lea.smem %s0, 22
  %s45 = sld [smem:[%s44]]
  %s46 = scalar_lea.smem %s0, 23
  %s47 = sld [smem:[%s46]]
  %s48 = scalar_lea.smem %s0, 24
  %s49 = sld [smem:[%s48]]
  %s50 = scalar_lea.smem %s0, 25
  %s51 = sld [smem:[%s50]]
  %s52 = scalar_lea.smem %s0, 26
  %s53 = sld [smem:[%s52]]
  %s54 = scalar_lea.smem %s0, 27
  %s55 = sld [smem:[%s54]]
  %s56 = scalar_lea.smem %s0, 28
  %s57 = sld [smem:[%s56]]
  %s58 = scalar_lea.smem %s0, 29
  %s59 = sld [smem:[%s58]]
  %s60 = scalar_lea.smem %s0, 30
  %s61 = sld [smem:[%s60]]
  %s62 = scalar_lea.smem %s0, 31
  %s63 = sld [smem:[%s62]]
  %s64 = scalar_lea.smem %s0, 32
  %s65 = sld [smem:[%s64]]
  %s66 = scalar_lea.smem %s0, 33
  %s67 = sld [smem:[%s66]]
  %s68 = scalar_lea.smem %s0, 34
  %s69 = sld [smem:[%s68]]
  %s70 = scalar_lea.smem %s0, 35
  %s71 = sld [smem:[%s70]]
  %s72 = sld [smem:[#allocation0]]
  $region249: #{forward.1} parent=0
    _
  %s74 = ssub.s32 1, %s72
  %s75 = scalar_select 0, %s74, %s72
  %v76 = vstv %s65
  %77 = vst [vmem:[#allocation2] sm:$0x1] %v76
  %v78 = vstv %s69
  %79 = vst [vmem:[#allocation3] sm:$0x1] %v78
  $region1: #{forward.1} parent=0
    #allocation4 [shape = 'u8[8192]{0}', space=vmem, size = 0x2000, scoped, tag = 'input window, operand 3, single buffered']
    #allocation5 [shape = 's32[2]{0}', space=sflag, size = 0x8, scoped, tag = 'scoped memory for forward.1']
    #allocation6 [shape = 'u8[8192]{0}', space=vmem, size = 0x2000, scoped, tag = 'input window, operand 4, single buffered']
    #allocation7 [shape = 's32[1]{0}', space=sflag, size = 0x4, scoped, tag = 'scoped memory for forward.1']
    #allocation8 [shape = 'u8[8192]{0}', space=vmem, size = 0x2000, scoped, tag = 'input window, operand 6, single buffered']
    #allocation9 [shape = 'u8[8192]{0}', space=vmem, size = 0x2000, scoped, tag = 'input window, operand 7, single buffered']
    #allocation10 [shape = 's32[1]{0}', space=sflag, size = 0x4, scoped, tag = 'scoped memory for forward.1']
    #allocation11 [shape = 'u8[512]{0}', space=vmem, size = 0x400, scoped, tag = 'input window, operand 8, single buffered']
    #allocation12 [shape = 'u8[12288]{0}', space=vmem, size = 0x3000, scoped, tag = 'input window, operand 9, single buffered']
    #allocation13 [shape = 's32[1]{0}', space=sflag, size = 0x4, scoped, tag = 'scoped memory for forward.1']
    #allocation14 [shape = 'u8[512]{0}', space=vmem, size = 0x400, scoped, tag = 'input window, operand 10, single buffered']
    #allocation15 [shape = 'u8[512]{0}', space=vmem, size = 0x400, scoped, tag = 'input window, operand 12, single buffered']
    #allocation16 [shape = 's32[1]{0}', space=sflag, size = 0x4, scoped, tag = 'scoped memory for forward.1']
    #allocation17 [shape = 'u8[512]{0}', space=vmem, size = 0x400, scoped, tag = 'input window, operand 15, single buffered']
    #allocation18 [shape = 'u8[512]{0}', space=vmem, size = 0x400, scoped, tag = 'input window, operand 17, single buffered']
    #allocation19 [shape = 's32[1]{0}', space=sflag, size = 0x4, scoped, tag = 'scoped memory for forward.1']
    #allocation20 [shape = 'u8[1024]{0}', space=vmem, size = 0x400, scoped, tag = 'input window, operand 20, single buffered']
    #allocation21 [shape = 'u8[1024]{0}', space=vmem, size = 0x400, scoped, tag = 'input window, operand 21, single buffered']
    #allocation22 [shape = 's32[1]{0}', space=sflag, size = 0x4, scoped, tag = 'scoped memory for forward.1']
    #allocation23 [shape = 'u8[512]{0}', space=vmem, size = 0x400, scoped, tag = 'input window, operand 22, single buffered']
    #allocation24 [shape = 'u8[512]{0}', space=vmem, size = 0x400, scoped, tag = 'input window, operand 24, single buffered']
    #allocation25 [shape = 's32[1]{0}', space=sflag, size = 0x4, scoped, tag = 'scoped memory for forward.1']
    #allocation26 [shape = 'u8[512]{0}', space=vmem, size = 0x400, scoped, tag = 'input window, operand 26, single buffered']
    #allocation27 [shape = 'u8[16384]{0}', space=vmem, size = 0x4000, scoped, tag = 'input window, operand 27, single buffered']
    #allocation28 [shape = 's32[1]{0}', space=sflag, size = 0x4, scoped, tag = 'scoped memory for forward.1']
    #allocation29 [shape = 'u8[512]{0}', space=vmem, size = 0x400, scoped, tag = 'input window, operand 28, single buffered']
    #allocation30 [shape = 'u8[16384]{0}', space=vmem, size = 0x4000, scoped, tag = 'input window, operand 29, single buffered']
    #allocation31 [shape = 's32[1]{0}', space=sflag, size = 0x4, scoped, tag = 'scoped memory for forward.1']
    #allocation32 [shape = 'u8[512]{0}', space=vmem, size = 0x400, scoped, tag = 'input window, operand 30, single buffered']
    %80 = vsyncpa [#allocation5], 0
    %81 = vsyncpa [#allocation7], 0
    %82 = vsyncpa [#allocation10], 0
    %83 = vsyncpa [#allocation13], 0
    %84 = vsyncpa [#allocation16], 0
    %85 = vsyncpa [#allocation19], 0
    %86 = vsyncpa [#allocation22], 0
    %87 = vsyncpa [#allocation25], 0
    %88 = vsyncpa [#allocation28], 0
    %89 = vsyncpa [#allocation31], 0
    loop: start=0, step=1, limit=4
    $region2: #{forward.1} parent=1 // loop_pre_header
      _
    $region3: #{forward.1} parent=1 // loop_header
      %s91 = sphi 0, %s95
      %p92 = scmp.ge.s32.totalorder %s91, 4
      %s101 = sphi 0, %s103
      %s104 = sphi 0, %s101
      %s105 = sphi 0, %s104
      %s121 = sphi 0, %s105
      %s127 = sphi 0, %s129
      %s130 = sphi 0, %s127
      %s131 = sphi 0, %s130
      %s147 = sphi 0, %s131
      %s151 = sphi 0, %s151
      %s153 = sphi 0, %s151
      %s154 = sphi 0, %s153
      %s168 = sphi 0, %s154
      %s172 = sphi 0, %s172
      %s174 = sphi 0, %s172
      %s175 = sphi 0, %s174
      %s189 = sphi 0, %s175
      %s193 = sphi 0, %s193
      %s195 = sphi 0, %s193
      %s196 = sphi 0, %s195
      %s210 = sphi 0, %s196
      %s214 = sphi 0, %s214
      %s216 = sphi 0, %s214
      %s217 = sphi 0, %s216
      %s231 = sphi 0, %s217
      %s235 = sphi 0, %s235
      %s237 = sphi 0, %s235
      %s238 = sphi 0, %s237
      %s252 = sphi 0, %s238
      %s256 = sphi 0, %s256
      %s258 = sphi 0, %s256
      %s259 = sphi 0, %s258
      %s273 = sphi 0, %s259
      %s277 = sphi 0, %s277
      %s279 = sphi 0, %s277
      %s280 = sphi 0, %s279
      %s294 = sphi 0, %s280
      %s298 = sphi 0, %s298
      %s300 = sphi 0, %s298
      %s301 = sphi 0, %s300
      %s315 = sphi 0, %s301
      %s319 = sphi 0, %s319
      %s321 = sphi 0, %s319
      %s322 = sphi 0, %s321
      %s336 = sphi 0, %s322
      %s340 = sphi 0, %s340
      %s342 = sphi 0, %s340
      %s343 = sphi 0, %s342
      %s357 = sphi 0, %s343
      %s361 = sphi 0, %s361
      %s363 = sphi 0, %s361
      %s364 = sphi 0, %s363
      %s378 = sphi 0, %s364
      %s382 = sphi 0, %s382
      %s384 = sphi 0, %s382
      %s385 = sphi 0, %s384
      %s399 = sphi 0, %s385
      %s403 = sphi 0, %s403
      %s405 = sphi 0, %s403
      %s406 = sphi 0, %s405
      %s420 = sphi 0, %s406
      %s424 = sphi 0, %s424
      %s426 = sphi 0, %s424
      %s427 = sphi 0, %s426
      %s441 = sphi 0, %s427
      %s445 = sphi 0, %s445
      %s447 = sphi 0, %s445
      %s448 = sphi 0, %s447
      %s462 = sphi 0, %s448
      %s466 = sphi 0, %s466
      %s468 = sphi 0, %s466
      %s469 = sphi 0, %s468
      %s483 = sphi 0, %s469
      %s487 = sphi 0, %s487
      %s489 = sphi 0, %s487
      %s490 = sphi 0, %s489
      %s504 = sphi 0, %s490
      %s508 = sphi 0, %s508
      %s510 = sphi 0, %s508
      %s511 = sphi 0, %s510
      %s525 = sphi 0, %s511
      %s529 = sphi 0, %s529
      %s531 = sphi 0, %s529
      %s532 = sphi 0, %s531
      %s546 = sphi 0, %s532
      %s550 = sphi 0, %s550
      %s552 = sphi 0, %s550
      %s553 = sphi 0, %s552
      %s567 = sphi 0, %s553
      %s571 = sphi 0, %s571
      %s573 = sphi 0, %s571
      %s574 = sphi 0, %s573
      %s588 = sphi 0, %s574
      %s592 = sphi 0, %s592
      %s594 = sphi 0, %s592
      %s595 = sphi 0, %s594
      %s609 = sphi 0, %s595
      %s613 = sphi 0, %s613
      %s615 = sphi 0, %s613
      %s616 = sphi 0, %s615
      %s630 = sphi 0, %s616
      %s634 = sphi 0, %s634
      %s636 = sphi 0, %s634
      %s637 = sphi 0, %s636
      %s651 = sphi 0, %s637
      %s655 = sphi 0, %s655
      %s657 = sphi 0, %s655
      %s658 = sphi 0, %s657
      %s672 = sphi 0, %s658
      %s676 = sphi 0, %s676
      %s678 = sphi 0, %s676
      %s679 = sphi 0, %s678
      %s693 = sphi 0, %s679
      %s697 = sphi 0, %s697
      %s699 = sphi 0, %s697
      %s700 = sphi 0, %s699
      %s714 = sphi 0, %s700
      %s718 = sphi 0, %s718
      %s720 = sphi 0, %s718
      %s721 = sphi 0, %s720
      %s735 = sphi 0, %s721
      %s739 = sphi 0, %s739
      %s741 = sphi 0, %s739
      %s742 = sphi 0, %s741
      %s756 = sphi 0, %s742
      %s760 = sphi 0, %s760
      %s762 = sphi 0, %s760
      %s763 = sphi 0, %s762
      %s777 = sphi 0, %s763
      %s781 = sphi 0, %s781
      %s783 = sphi 0, %s781
      %s784 = sphi 0, %s783
      %s798 = sphi 0, %s784
      %s802 = sphi 0, %s802
      %s804 = sphi 0, %s802
      %s805 = sphi 0, %s804
      %s819 = sphi 0, %s805
      %s823 = sphi 0, %s823
      %s825 = sphi 0, %s823
      %s826 = sphi 0, %s825
      %s840 = sphi 0, %s826
      %s846 = sphi 0, %s848
      %s849 = sphi 0, %s846
      %s850 = sphi 0, %s849
      %s866 = sphi 0, %s850
    $region4: #{forward.1} parent=1 // loop_header_branch
      %94 = sbr.rel (%p92) target = $region8
    $region5: #{forward.1} parent=1 // loop_body
      %s96 = ssub.s32 %s91, 1
      %s97 = ssub.s32 %s91, 2
      %s98 = sadd.s32 %s91, 1
      %s99 = ssub.s32 %s91, %s98
      %p100 = scmp.eq.s32.totalorder %s99, 0
      %s102 = sadd.s32 %s101, 1
      %s103 = scalar_select %p100, %s101, %s102
      %p106 = pneg %p100
      %p107 = scmp.eq.s32.totalorder %s91, 1
      %p108 = por %p106, %p107
      %p109 = scmp.ne.s32.totalorder %s101, %s104
      %p110 = scmp.eq.s32.totalorder %s91, 0
      %p111 = por %p109, %p110
      %p112 = scmp.ne.s32.totalorder %s101, %s104
      %p113 = scmp.eq.s32.totalorder %s96, 1
      %p114 = por %p112, %p113
      %p115 = scmp.ne.s32.totalorder %s104, %s105
      %p116 = scmp.eq.s32.totalorder %s96, 0
      %p117 = por %p115, %p116
      %p118 = scmp.ne.s32.totalorder %s104, %s105
      %p119 = scmp.eq.s32.totalorder %s97, 1
      %p120 = por %p118, %p119
      %p122 = scmp.ne.s32.totalorder %s105, %s121
      %p123 = scmp.eq.s32.totalorder %s97, 0
      %p124 = por %p122, %p123
      %s125 = ssub.s32 %s91, %s98
      %p126 = scmp.eq.s32.totalorder %s125, 0
      %s128 = sadd.s32 %s127, 1
      %s129 = scalar_select %p126, %s127, %s128
      %p132 = pneg %p126
      %p133 = scmp.eq.s32.totalorder %s91, 1
      %p134 = por %p132, %p133
      %p135 = scmp.ne.s32.totalorder %s127, %s130
      %p136 = scmp.eq.s32.totalorder %s91, 0
      %p137 = por %p135, %p136
      %p138 = scmp.ne.s32.totalorder %s127, %s130
      %p139 = scmp.eq.s32.totalorder %s96, 1
      %p140 = por %p138, %p139
      %p141 = scmp.ne.s32.totalorder %s130, %s131
      %p142 = scmp.eq.s32.totalorder %s96, 0
      %p143 = por %p141, %p142
      %p144 = scmp.ne.s32.totalorder %s130, %s131
      %p145 = scmp.eq.s32.totalorder %s97, 1
      %p146 = por %p144, %p145
      %p148 = scmp.ne.s32.totalorder %s131, %s147
      %p149 = scmp.eq.s32.totalorder %s97, 0
      %p150 = por %p148, %p149
      %s152 = sadd.s32 %s151, 1
      %p155 = scmp.eq.s32.totalorder %s91, 1
      %p156 = scmp.ne.s32.totalorder %s151, %s153
      %p157 = scmp.eq.s32.totalorder %s91, 0
      %p158 = por %p156, %p157
      %p159 = scmp.ne.s32.totalorder %s151, %s153
      %p160 = scmp.eq.s32.totalorder %s96, 1
      %p161 = por %p159, %p160
      %p162 = scmp.ne.s32.totalorder %s153, %s154
      %p163 = scmp.eq.s32.totalorder %s96, 0
      %p164 = por %p162, %p163
      %p165 = scmp.ne.s32.totalorder %s153, %s154
      %p166 = scmp.eq.s32.totalorder %s97, 1
      %p167 = por %p165, %p166
      %p169 = scmp.ne.s32.totalorder %s154, %s168
      %p170 = scmp.eq.s32.totalorder %s97, 0
      %p171 = por %p169, %p170
      %s173 = sadd.s32 %s172, 1
      %p176 = scmp.eq.s32.totalorder %s91, 1
      %p177 = scmp.ne.s32.totalorder %s172, %s174
      %p178 = scmp.eq.s32.totalorder %s91, 0
      %p179 = por %p177, %p178
      %p180 = scmp.ne.s32.totalorder %s172, %s174
      %p181 = scmp.eq.s32.totalorder %s96, 1
      %p182 = por %p180, %p181
      %p183 = scmp.ne.s32.totalorder %s174, %s175
      %p184 = scmp.eq.s32.totalorder %s96, 0
      %p185 = por %p183, %p184
      %p186 = scmp.ne.s32.totalorder %s174, %s175
      %p187 = scmp.eq.s32.totalorder %s97, 1
      %p188 = por %p186, %p187
      %p190 = scmp.ne.s32.totalorder %s175, %s189
      %p191 = scmp.eq.s32.totalorder %s97, 0
      %p192 = por %p190, %p191
      %s194 = sadd.s32 %s193, 1
      %p197 = scmp.eq.s32.totalorder %s91, 1
      %p198 = scmp.ne.s32.totalorder %s193, %s195
      %p199 = scmp.eq.s32.totalorder %s91, 0
      %p200 = por %p198, %p199
      %p201 = scmp.ne.s32.totalorder %s193, %s195
      %p202 = scmp.eq.s32.totalorder %s96, 1
      %p203 = por %p201, %p202
      %p204 = scmp.ne.s32.totalorder %s195, %s196
      %p205 = scmp.eq.s32.totalorder %s96, 0
      %p206 = por %p204, %p205
      %p207 = scmp.ne.s32.totalorder %s195, %s196
      %p208 = scmp.eq.s32.totalorder %s97, 1
      %p209 = por %p207, %p208
      %p211 = scmp.ne.s32.totalorder %s196, %s210
      %p212 = scmp.eq.s32.totalorder %s97, 0
      %p213 = por %p211, %p212
      %s215 = sadd.s32 %s214, 1
      %p218 = scmp.eq.s32.totalorder %s91, 1
      %p219 = scmp.ne.s32.totalorder %s214, %s216
      %p220 = scmp.eq.s32.totalorder %s91, 0
      %p221 = por %p219, %p220
      %p222 = scmp.ne.s32.totalorder %s214, %s216
      %p223 = scmp.eq.s32.totalorder %s96, 1
      %p224 = por %p222, %p223
      %p225 = scmp.ne.s32.totalorder %s216, %s217
      %p226 = scmp.eq.s32.totalorder %s96, 0
      %p227 = por %p225, %p226
      %p228 = scmp.ne.s32.totalorder %s216, %s217
      %p229 = scmp.eq.s32.totalorder %s97, 1
      %p230 = por %p228, %p229
      %p232 = scmp.ne.s32.totalorder %s217, %s231
      %p233 = scmp.eq.s32.totalorder %s97, 0
      %p234 = por %p232, %p233
      %s236 = sadd.s32 %s235, 1
      %p239 = scmp.eq.s32.totalorder %s91, 1
      %p240 = scmp.ne.s32.totalorder %s235, %s237
      %p241 = scmp.eq.s32.totalorder %s91, 0
      %p242 = por %p240, %p241
      %p243 = scmp.ne.s32.totalorder %s235, %s237
      %p244 = scmp.eq.s32.totalorder %s96, 1
      %p245 = por %p243, %p244
      %p246 = scmp.ne.s32.totalorder %s237, %s238
      %p247 = scmp.eq.s32.totalorder %s96, 0
      %p248 = por %p246, %p247
      %p249 = scmp.ne.s32.totalorder %s237, %s238
      %p250 = scmp.eq.s32.totalorder %s97, 1
      %p251 = por %p249, %p250
      %p253 = scmp.ne.s32.totalorder %s238, %s252
      %p254 = scmp.eq.s32.totalorder %s97, 0
      %p255 = por %p253, %p254
      %s257 = sadd.s32 %s256, 1
      %p260 = scmp.eq.s32.totalorder %s91, 1
      %p261 = scmp.ne.s32.totalorder %s256, %s258
      %p262 = scmp.eq.s32.totalorder %s91, 0
      %p263 = por %p261, %p262
      %p264 = scmp.ne.s32.totalorder %s256, %s258
      %p265 = scmp.eq.s32.totalorder %s96, 1
      %p266 = por %p264, %p265
      %p267 = scmp.ne.s32.totalorder %s258, %s259
      %p268 = scmp.eq.s32.totalorder %s96, 0
      %p269 = por %p267, %p268
      %p270 = scmp.ne.s32.totalorder %s258, %s259
      %p271 = scmp.eq.s32.totalorder %s97, 1
      %p272 = por %p270, %p271
      %p274 = scmp.ne.s32.totalorder %s259, %s273
      %p275 = scmp.eq.s32.totalorder %s97, 0
      %p276 = por %p274, %p275
      %s278 = sadd.s32 %s277, 1
      %p281 = scmp.eq.s32.totalorder %s91, 1
      %p282 = scmp.ne.s32.totalorder %s277, %s279
      %p283 = scmp.eq.s32.totalorder %s91, 0
      %p284 = por %p282, %p283
      %p285 = scmp.ne.s32.totalorder %s277, %s279
      %p286 = scmp.eq.s32.totalorder %s96, 1
      %p287 = por %p285, %p286
      %p288 = scmp.ne.s32.totalorder %s279, %s280
      %p289 = scmp.eq.s32.totalorder %s96, 0
      %p290 = por %p288, %p289
      %p291 = scmp.ne.s32.totalorder %s279, %s280
      %p292 = scmp.eq.s32.totalorder %s97, 1
      %p293 = por %p291, %p292
      %p295 = scmp.ne.s32.totalorder %s280, %s294
      %p296 = scmp.eq.s32.totalorder %s97, 0
      %p297 = por %p295, %p296
      %s299 = sadd.s32 %s298, 1
      %p302 = scmp.eq.s32.totalorder %s91, 1
      %p303 = scmp.ne.s32.totalorder %s298, %s300
      %p304 = scmp.eq.s32.totalorder %s91, 0
      %p305 = por %p303, %p304
      %p306 = scmp.ne.s32.totalorder %s298, %s300
      %p307 = scmp.eq.s32.totalorder %s96, 1
      %p308 = por %p306, %p307
      %p309 = scmp.ne.s32.totalorder %s300, %s301
      %p310 = scmp.eq.s32.totalorder %s96, 0
      %p311 = por %p309, %p310
      %p312 = scmp.ne.s32.totalorder %s300, %s301
      %p313 = scmp.eq.s32.totalorder %s97, 1
      %p314 = por %p312, %p313
      %p316 = scmp.ne.s32.totalorder %s301, %s315
      %p317 = scmp.eq.s32.totalorder %s97, 0
      %p318 = por %p316, %p317
      %s320 = sadd.s32 %s319, 1
      %p323 = scmp.eq.s32.totalorder %s91, 1
      %p324 = scmp.ne.s32.totalorder %s319, %s321
      %p325 = scmp.eq.s32.totalorder %s91, 0
      %p326 = por %p324, %p325
      %p327 = scmp.ne.s32.totalorder %s319, %s321
      %p328 = scmp.eq.s32.totalorder %s96, 1
      %p329 = por %p327, %p328
      %p330 = scmp.ne.s32.totalorder %s321, %s322
      %p331 = scmp.eq.s32.totalorder %s96, 0
      %p332 = por %p330, %p331
      %p333 = scmp.ne.s32.totalorder %s321, %s322
      %p334 = scmp.eq.s32.totalorder %s97, 1
      %p335 = por %p333, %p334
      %p337 = scmp.ne.s32.totalorder %s322, %s336
      %p338 = scmp.eq.s32.totalorder %s97, 0
      %p339 = por %p337, %p338
      %s341 = sadd.s32 %s340, 1
      %p344 = scmp.eq.s32.totalorder %s91, 1
      %p345 = scmp.ne.s32.totalorder %s340, %s342
      %p346 = scmp.eq.s32.totalorder %s91, 0
      %p347 = por %p345, %p346
      %p348 = scmp.ne.s32.totalorder %s340, %s342
      %p349 = scmp.eq.s32.totalorder %s96, 1
      %p350 = por %p348, %p349
      %p351 = scmp.ne.s32.totalorder %s342, %s343
      %p352 = scmp.eq.s32.totalorder %s96, 0
      %p353 = por %p351, %p352
      %p354 = scmp.ne.s32.totalorder %s342, %s343
      %p355 = scmp.eq.s32.totalorder %s97, 1
      %p356 = por %p354, %p355
      %p358 = scmp.ne.s32.totalorder %s343, %s357
      %p359 = scmp.eq.s32.totalorder %s97, 0
      %p360 = por %p358, %p359
      %s362 = sadd.s32 %s361, 1
      %p365 = scmp.eq.s32.totalorder %s91, 1
      %p366 = scmp.ne.s32.totalorder %s361, %s363
      %p367 = scmp.eq.s32.totalorder %s91, 0
      %p368 = por %p366, %p367
      %p369 = scmp.ne.s32.totalorder %s361, %s363
      %p370 = scmp.eq.s32.totalorder %s96, 1
      %p371 = por %p369, %p370
      %p372 = scmp.ne.s32.totalorder %s363, %s364
      %p373 = scmp.eq.s32.totalorder %s96, 0
      %p374 = por %p372, %p373
      %p375 = scmp.ne.s32.totalorder %s363, %s364
      %p376 = scmp.eq.s32.totalorder %s97, 1
      %p377 = por %p375, %p376
      %p379 = scmp.ne.s32.totalorder %s364, %s378
      %p380 = scmp.eq.s32.totalorder %s97, 0
      %p381 = por %p379, %p380
      %s383 = sadd.s32 %s382, 1
      %p386 = scmp.eq.s32.totalorder %s91, 1
      %p387 = scmp.ne.s32.totalorder %s382, %s384
      %p388 = scmp.eq.s32.totalorder %s91, 0
      %p389 = por %p387, %p388
      %p390 = scmp.ne.s32.totalorder %s382, %s384
      %p391 = scmp.eq.s32.totalorder %s96, 1
      %p392 = por %p390, %p391
      %p393 = scmp.ne.s32.totalorder %s384, %s385
      %p394 = scmp.eq.s32.totalorder %s96, 0
      %p395 = por %p393, %p394
      %p396 = scmp.ne.s32.totalorder %s384, %s385
      %p397 = scmp.eq.s32.totalorder %s97, 1
      %p398 = por %p396, %p397
      %p400 = scmp.ne.s32.totalorder %s385, %s399
      %p401 = scmp.eq.s32.totalorder %s97, 0
      %p402 = por %p400, %p401
      %s404 = sadd.s32 %s403, 1
      %p407 = scmp.eq.s32.totalorder %s91, 1
      %p408 = scmp.ne.s32.totalorder %s403, %s405
      %p409 = scmp.eq.s32.totalorder %s91, 0
      %p410 = por %p408, %p409
      %p411 = scmp.ne.s32.totalorder %s403, %s405
      %p412 = scmp.eq.s32.totalorder %s96, 1
      %p413 = por %p411, %p412
      %p414 = scmp.ne.s32.totalorder %s405, %s406
      %p415 = scmp.eq.s32.totalorder %s96, 0
      %p416 = por %p414, %p415
      %p417 = scmp.ne.s32.totalorder %s405, %s406
      %p418 = scmp.eq.s32.totalorder %s97, 1
      %p419 = por %p417, %p418
      %p421 = scmp.ne.s32.totalorder %s406, %s420
      %p422 = scmp.eq.s32.totalorder %s97, 0
      %p423 = por %p421, %p422
      %s425 = sadd.s32 %s424, 1
      %p428 = scmp.eq.s32.totalorder %s91, 1
      %p429 = scmp.ne.s32.totalorder %s424, %s426
      %p430 = scmp.eq.s32.totalorder %s91, 0
      %p431 = por %p429, %p430
      %p432 = scmp.ne.s32.totalorder %s424, %s426
      %p433 = scmp.eq.s32.totalorder %s96, 1
      %p434 = por %p432, %p433
      %p435 = scmp.ne.s32.totalorder %s426, %s427
      %p436 = scmp.eq.s32.totalorder %s96, 0
      %p437 = por %p435, %p436
      %p438 = scmp.ne.s32.totalorder %s426, %s427
      %p439 = scmp.eq.s32.totalorder %s97, 1
      %p440 = por %p438, %p439
      %p442 = scmp.ne.s32.totalorder %s427, %s441
      %p443 = scmp.eq.s32.totalorder %s97, 0
      %p444 = por %p442, %p443
      %s446 = sadd.s32 %s445, 1
      %p449 = scmp.eq.s32.totalorder %s91, 1
      %p450 = scmp.ne.s32.totalorder %s445, %s447
      %p451 = scmp.eq.s32.totalorder %s91, 0
      %p452 = por %p450, %p451
      %p453 = scmp.ne.s32.totalorder %s445, %s447
      %p454 = scmp.eq.s32.totalorder %s96, 1
      %p455 = por %p453, %p454
      %p456 = scmp.ne.s32.totalorder %s447, %s448
      %p457 = scmp.eq.s32.totalorder %s96, 0
      %p458 = por %p456, %p457
      %p459 = scmp.ne.s32.totalorder %s447, %s448
      %p460 = scmp.eq.s32.totalorder %s97, 1
      %p461 = por %p459, %p460
      %p463 = scmp.ne.s32.totalorder %s448, %s462
      %p464 = scmp.eq.s32.totalorder %s97, 0
      %p465 = por %p463, %p464
      %s467 = sadd.s32 %s466, 1
      %p470 = scmp.eq.s32.totalorder %s91, 1
      %p471 = scmp.ne.s32.totalorder %s466, %s468
      %p472 = scmp.eq.s32.totalorder %s91, 0
      %p473 = por %p471, %p472
      %p474 = scmp.ne.s32.totalorder %s466, %s468
      %p475 = scmp.eq.s32.totalorder %s96, 1
      %p476 = por %p474, %p475
      %p477 = scmp.ne.s32.totalorder %s468, %s469
      %p478 = scmp.eq.s32.totalorder %s96, 0
      %p479 = por %p477, %p478
      %p480 = scmp.ne.s32.totalorder %s468, %s469
      %p481 = scmp.eq.s32.totalorder %s97, 1
      %p482 = por %p480, %p481
      %p484 = scmp.ne.s32.totalorder %s469, %s483
      %p485 = scmp.eq.s32.totalorder %s97, 0
      %p486 = por %p484, %p485
      %s488 = sadd.s32 %s487, 1
      %p491 = scmp.eq.s32.totalorder %s91, 1
      %p492 = scmp.ne.s32.totalorder %s487, %s489
      %p493 = scmp.eq.s32.totalorder %s91, 0
      %p494 = por %p492, %p493
      %p495 = scmp.ne.s32.totalorder %s487, %s489
      %p496 = scmp.eq.s32.totalorder %s96, 1
      %p497 = por %p495, %p496
      %p498 = scmp.ne.s32.totalorder %s489, %s490
      %p499 = scmp.eq.s32.totalorder %s96, 0
      %p500 = por %p498, %p499
      %p501 = scmp.ne.s32.totalorder %s489, %s490
      %p502 = scmp.eq.s32.totalorder %s97, 1
      %p503 = por %p501, %p502
      %p505 = scmp.ne.s32.totalorder %s490, %s504
      %p506 = scmp.eq.s32.totalorder %s97, 0
      %p507 = por %p505, %p506
      %s509 = sadd.s32 %s508, 1
      %p512 = scmp.eq.s32.totalorder %s91, 1
      %p513 = scmp.ne.s32.totalorder %s508, %s510
      %p514 = scmp.eq.s32.totalorder %s91, 0
      %p515 = por %p513, %p514
      %p516 = scmp.ne.s32.totalorder %s508, %s510
      %p517 = scmp.eq.s32.totalorder %s96, 1
      %p518 = por %p516, %p517
      %p519 = scmp.ne.s32.totalorder %s510, %s511
      %p520 = scmp.eq.s32.totalorder %s96, 0
      %p521 = por %p519, %p520
      %p522 = scmp.ne.s32.totalorder %s510, %s511
      %p523 = scmp.eq.s32.totalorder %s97, 1
      %p524 = por %p522, %p523
      %p526 = scmp.ne.s32.totalorder %s511, %s525
      %p527 = scmp.eq.s32.totalorder %s97, 0
      %p528 = por %p526, %p527
      %s530 = sadd.s32 %s529, 1
      %p533 = scmp.eq.s32.totalorder %s91, 1
      %p534 = scmp.ne.s32.totalorder %s529, %s531
      %p535 = scmp.eq.s32.totalorder %s91, 0
      %p536 = por %p534, %p535
      %p537 = scmp.ne.s32.totalorder %s529, %s531
      %p538 = scmp.eq.s32.totalorder %s96, 1
      %p539 = por %p537, %p538
      %p540 = scmp.ne.s32.totalorder %s531, %s532
      %p541 = scmp.eq.s32.totalorder %s96, 0
      %p542 = por %p540, %p541
      %p543 = scmp.ne.s32.totalorder %s531, %s532
      %p544 = scmp.eq.s32.totalorder %s97, 1
      %p545 = por %p543, %p544
      %p547 = scmp.ne.s32.totalorder %s532, %s546
      %p548 = scmp.eq.s32.totalorder %s97, 0
      %p549 = por %p547, %p548
      %s551 = sadd.s32 %s550, 1
      %p554 = scmp.eq.s32.totalorder %s91, 1
      %p555 = scmp.ne.s32.totalorder %s550, %s552
      %p556 = scmp.eq.s32.totalorder %s91, 0
      %p557 = por %p555, %p556
      %p558 = scmp.ne.s32.totalorder %s550, %s552
      %p559 = scmp.eq.s32.totalorder %s96, 1
      %p560 = por %p558, %p559
      %p561 = scmp.ne.s32.totalorder %s552, %s553
      %p562 = scmp.eq.s32.totalorder %s96, 0
      %p563 = por %p561, %p562
      %p564 = scmp.ne.s32.totalorder %s552, %s553
      %p565 = scmp.eq.s32.totalorder %s97, 1
      %p566 = por %p564, %p565
      %p568 = scmp.ne.s32.totalorder %s553, %s567
      %p569 = scmp.eq.s32.totalorder %s97, 0
      %p570 = por %p568, %p569
      %s572 = sadd.s32 %s571, 1
      %p575 = scmp.eq.s32.totalorder %s91, 1
      %p576 = scmp.ne.s32.totalorder %s571, %s573
      %p577 = scmp.eq.s32.totalorder %s91, 0
      %p578 = por %p576, %p577
      %p579 = scmp.ne.s32.totalorder %s571, %s573
      %p580 = scmp.eq.s32.totalorder %s96, 1
      %p581 = por %p579, %p580
      %p582 = scmp.ne.s32.totalorder %s573, %s574
      %p583 = scmp.eq.s32.totalorder %s96, 0
      %p584 = por %p582, %p583
      %p585 = scmp.ne.s32.totalorder %s573, %s574
      %p586 = scmp.eq.s32.totalorder %s97, 1
      %p587 = por %p585, %p586
      %p589 = scmp.ne.s32.totalorder %s574, %s588
      %p590 = scmp.eq.s32.totalorder %s97, 0
      %p591 = por %p589, %p590
      %s593 = sadd.s32 %s592, 1
      %p596 = scmp.eq.s32.totalorder %s91, 1
      %p597 = scmp.ne.s32.totalorder %s592, %s594
      %p598 = scmp.eq.s32.totalorder %s91, 0
      %p599 = por %p597, %p598
      %p600 = scmp.ne.s32.totalorder %s592, %s594
      %p601 = scmp.eq.s32.totalorder %s96, 1
      %p602 = por %p600, %p601
      %p603 = scmp.ne.s32.totalorder %s594, %s595
      %p604 = scmp.eq.s32.totalorder %s96, 0
      %p605 = por %p603, %p604
      %p606 = scmp.ne.s32.totalorder %s594, %s595
      %p607 = scmp.eq.s32.totalorder %s97, 1
      %p608 = por %p606, %p607
      %p610 = scmp.ne.s32.totalorder %s595, %s609
      %p611 = scmp.eq.s32.totalorder %s97, 0
      %p612 = por %p610, %p611
      %s614 = sadd.s32 %s613, 1
      %p617 = scmp.eq.s32.totalorder %s91, 1
      %p618 = scmp.ne.s32.totalorder %s613, %s615
      %p619 = scmp.eq.s32.totalorder %s91, 0
      %p620 = por %p618, %p619
      %p621 = scmp.ne.s32.totalorder %s613, %s615
      %p622 = scmp.eq.s32.totalorder %s96, 1
      %p623 = por %p621, %p622
      %p624 = scmp.ne.s32.totalorder %s615, %s616
      %p625 = scmp.eq.s32.totalorder %s96, 0
      %p626 = por %p624, %p625
      %p627 = scmp.ne.s32.totalorder %s615, %s616
      %p628 = scmp.eq.s32.totalorder %s97, 1
      %p629 = por %p627, %p628
      %p631 = scmp.ne.s32.totalorder %s616, %s630
      %p632 = scmp.eq.s32.totalorder %s97, 0
      %p633 = por %p631, %p632
      %s635 = sadd.s32 %s634, 1
      %p638 = scmp.eq.s32.totalorder %s91, 1
      %p639 = scmp.ne.s32.totalorder %s634, %s636
      %p640 = scmp.eq.s32.totalorder %s91, 0
      %p641 = por %p639, %p640
      %p642 = scmp.ne.s32.totalorder %s634, %s636
      %p643 = scmp.eq.s32.totalorder %s96, 1
      %p644 = por %p642, %p643
      %p645 = scmp.ne.s32.totalorder %s636, %s637
      %p646 = scmp.eq.s32.totalorder %s96, 0
      %p647 = por %p645, %p646
      %p648 = scmp.ne.s32.totalorder %s636, %s637
      %p649 = scmp.eq.s32.totalorder %s97, 1
      %p650 = por %p648, %p649
      %p652 = scmp.ne.s32.totalorder %s637, %s651
      %p653 = scmp.eq.s32.totalorder %s97, 0
      %p654 = por %p652, %p653
      %s656 = sadd.s32 %s655, 1
      %p659 = scmp.eq.s32.totalorder %s91, 1
      %p660 = scmp.ne.s32.totalorder %s655, %s657
      %p661 = scmp.eq.s32.totalorder %s91, 0
      %p662 = por %p660, %p661
      %p663 = scmp.ne.s32.totalorder %s655, %s657
      %p664 = scmp.eq.s32.totalorder %s96, 1
      %p665 = por %p663, %p664
      %p666 = scmp.ne.s32.totalorder %s657, %s658
      %p667 = scmp.eq.s32.totalorder %s96, 0
      %p668 = por %p666, %p667
      %p669 = scmp.ne.s32.totalorder %s657, %s658
      %p670 = scmp.eq.s32.totalorder %s97, 1
      %p671 = por %p669, %p670
      %p673 = scmp.ne.s32.totalorder %s658, %s672
      %p674 = scmp.eq.s32.totalorder %s97, 0
      %p675 = por %p673, %p674
      %s677 = sadd.s32 %s676, 1
      %p680 = scmp.eq.s32.totalorder %s91, 1
      %p681 = scmp.ne.s32.totalorder %s676, %s678
      %p682 = scmp.eq.s32.totalorder %s91, 0
      %p683 = por %p681, %p682
      %p684 = scmp.ne.s32.totalorder %s676, %s678
      %p685 = scmp.eq.s32.totalorder %s96, 1
      %p686 = por %p684, %p685
      %p687 = scmp.ne.s32.totalorder %s678, %s679
      %p688 = scmp.eq.s32.totalorder %s96, 0
      %p689 = por %p687, %p688
      %p690 = scmp.ne.s32.totalorder %s678, %s679
      %p691 = scmp.eq.s32.totalorder %s97, 1
      %p692 = por %p690, %p691
      %p694 = scmp.ne.s32.totalorder %s679, %s693
      %p695 = scmp.eq.s32.totalorder %s97, 0
      %p696 = por %p694, %p695
      %s698 = sadd.s32 %s697, 1
      %p701 = scmp.eq.s32.totalorder %s91, 1
      %p702 = scmp.ne.s32.totalorder %s697, %s699
      %p703 = scmp.eq.s32.totalorder %s91, 0
      %p704 = por %p702, %p703
      %p705 = scmp.ne.s32.totalorder %s697, %s699
      %p706 = scmp.eq.s32.totalorder %s96, 1
      %p707 = por %p705, %p706
      %p708 = scmp.ne.s32.totalorder %s699, %s700
      %p709 = scmp.eq.s32.totalorder %s96, 0
      %p710 = por %p708, %p709
      %p711 = scmp.ne.s32.totalorder %s699, %s700
      %p712 = scmp.eq.s32.totalorder %s97, 1
      %p713 = por %p711, %p712
      %p715 = scmp.ne.s32.totalorder %s700, %s714
      %p716 = scmp.eq.s32.totalorder %s97, 0
      %p717 = por %p715, %p716
      %s719 = sadd.s32 %s718, 1
      %p722 = scmp.eq.s32.totalorder %s91, 1
      %p723 = scmp.ne.s32.totalorder %s718, %s720
      %p724 = scmp.eq.s32.totalorder %s91, 0
      %p725 = por %p723, %p724
      %p726 = scmp.ne.s32.totalorder %s718, %s720
      %p727 = scmp.eq.s32.totalorder %s96, 1
      %p728 = por %p726, %p727
      %p729 = scmp.ne.s32.totalorder %s720, %s721
      %p730 = scmp.eq.s32.totalorder %s96, 0
      %p731 = por %p729, %p730
      %p732 = scmp.ne.s32.totalorder %s720, %s721
      %p733 = scmp.eq.s32.totalorder %s97, 1
      %p734 = por %p732, %p733
      %p736 = scmp.ne.s32.totalorder %s721, %s735
      %p737 = scmp.eq.s32.totalorder %s97, 0
      %p738 = por %p736, %p737
      %s740 = sadd.s32 %s739, 1
      %p743 = scmp.eq.s32.totalorder %s91, 1
      %p744 = scmp.ne.s32.totalorder %s739, %s741
      %p745 = scmp.eq.s32.totalorder %s91, 0
      %p746 = por %p744, %p745
      %p747 = scmp.ne.s32.totalorder %s739, %s741
      %p748 = scmp.eq.s32.totalorder %s96, 1
      %p749 = por %p747, %p748
      %p750 = scmp.ne.s32.totalorder %s741, %s742
      %p751 = scmp.eq.s32.totalorder %s96, 0
      %p752 = por %p750, %p751
      %p753 = scmp.ne.s32.totalorder %s741, %s742
      %p754 = scmp.eq.s32.totalorder %s97, 1
      %p755 = por %p753, %p754
      %p757 = scmp.ne.s32.totalorder %s742, %s756
      %p758 = scmp.eq.s32.totalorder %s97, 0
      %p759 = por %p757, %p758
      %s761 = sadd.s32 %s760, 1
      %p764 = scmp.eq.s32.totalorder %s91, 1
      %p765 = scmp.ne.s32.totalorder %s760, %s762
      %p766 = scmp.eq.s32.totalorder %s91, 0
      %p767 = por %p765, %p766
      %p768 = scmp.ne.s32.totalorder %s760, %s762
      %p769 = scmp.eq.s32.totalorder %s96, 1
      %p770 = por %p768, %p769
      %p771 = scmp.ne.s32.totalorder %s762, %s763
      %p772 = scmp.eq.s32.totalorder %s96, 0
      %p773 = por %p771, %p772
      %p774 = scmp.ne.s32.totalorder %s762, %s763
      %p775 = scmp.eq.s32.totalorder %s97, 1
      %p776 = por %p774, %p775
      %p778 = scmp.ne.s32.totalorder %s763, %s777
      %p779 = scmp.eq.s32.totalorder %s97, 0
      %p780 = por %p778, %p779
      %s782 = sadd.s32 %s781, 1
      %p785 = scmp.eq.s32.totalorder %s91, 1
      %p786 = scmp.ne.s32.totalorder %s781, %s783
      %p787 = scmp.eq.s32.totalorder %s91, 0
      %p788 = por %p786, %p787
      %p789 = scmp.ne.s32.totalorder %s781, %s783
      %p790 = scmp.eq.s32.totalorder %s96, 1
      %p791 = por %p789, %p790
      %p792 = scmp.ne.s32.totalorder %s783, %s784
      %p793 = scmp.eq.s32.totalorder %s96, 0
      %p794 = por %p792, %p793
      %p795 = scmp.ne.s32.totalorder %s783, %s784
      %p796 = scmp.eq.s32.totalorder %s97, 1
      %p797 = por %p795, %p796
      %p799 = scmp.ne.s32.totalorder %s784, %s798
      %p800 = scmp.eq.s32.totalorder %s97, 0
      %p801 = por %p799, %p800
      %s803 = sadd.s32 %s802, 1
      %p806 = scmp.eq.s32.totalorder %s91, 1
      %p807 = scmp.ne.s32.totalorder %s802, %s804
      %p808 = scmp.eq.s32.totalorder %s91, 0
      %p809 = por %p807, %p808
      %p810 = scmp.ne.s32.totalorder %s802, %s804
      %p811 = scmp.eq.s32.totalorder %s96, 1
      %p812 = por %p810, %p811
      %p813 = scmp.ne.s32.totalorder %s804, %s805
      %p814 = scmp.eq.s32.totalorder %s96, 0
      %p815 = por %p813, %p814
      %p816 = scmp.ne.s32.totalorder %s804, %s805
      %p817 = scmp.eq.s32.totalorder %s97, 1
      %p818 = por %p816, %p817
      %p820 = scmp.ne.s32.totalorder %s805, %s819
      %p821 = scmp.eq.s32.totalorder %s97, 0
      %p822 = por %p820, %p821
      %s824 = sadd.s32 %s823, 1
      %p827 = scmp.eq.s32.totalorder %s91, 1
      %p828 = scmp.ne.s32.totalorder %s823, %s825
      %p829 = scmp.eq.s32.totalorder %s91, 0
      %p830 = por %p828, %p829
      %p831 = scmp.ne.s32.totalorder %s823, %s825
      %p832 = scmp.eq.s32.totalorder %s96, 1
      %p833 = por %p831, %p832
      %p834 = scmp.ne.s32.totalorder %s825, %s826
      %p835 = scmp.eq.s32.totalorder %s96, 0
      %p836 = por %p834, %p835
      %p837 = scmp.ne.s32.totalorder %s825, %s826
      %p838 = scmp.eq.s32.totalorder %s97, 1
      %p839 = por %p837, %p838
      %p841 = scmp.ne.s32.totalorder %s826, %s840
      %p842 = scmp.eq.s32.totalorder %s97, 0
      %p843 = por %p841, %p842
      %s844 = ssub.s32 %s91, %s98
      %p845 = scmp.eq.s32.totalorder %s844, 0
      %s847 = sadd.s32 %s846, 1
      %s848 = scalar_select %p845, %s846, %s847
      %p851 = pneg %p845
      %p852 = scmp.eq.s32.totalorder %s91, 1
      %p853 = por %p851, %p852
      %p854 = scmp.ne.s32.totalorder %s846, %s849
      %p855 = scmp.eq.s32.totalorder %s91, 0
      %p856 = por %p854, %p855
      %p857 = scmp.ne.s32.totalorder %s846, %s849
      %p858 = scmp.eq.s32.totalorder %s96, 1
      %p859 = por %p857, %p858
      %p860 = scmp.ne.s32.totalorder %s849, %s850
      %p861 = scmp.eq.s32.totalorder %s96, 0
      %p862 = por %p860, %p861
      %p863 = scmp.ne.s32.totalorder %s849, %s850
      %p864 = scmp.eq.s32.totalorder %s97, 1
      %p865 = por %p863, %p864
      %p867 = scmp.ne.s32.totalorder %s850, %s866
      %p868 = scmp.eq.s32.totalorder %s97, 0
      %p869 = por %p867, %p868
      %p870 = scmp.le.s32.totalorder 1, %s91
      %p871 = scmp.lt.s32.totalorder %s91, 3
      %p872 = pnand %p870, %p871
      %p873 = pneg %p872
      // Predicated region
      $region9: #{forward.1} parent=5 // pred_check
        _
      $region10: #{forward.1} parent=5 // pred_check_branch
        %875 = sbr.rel (%p872) target = $region12
      $region11: #{forward.1} parent=5 // pred_region
        %s876 = ssub.s32 %s91, 1
        // Predicated region
        $region13: #{forward.1} parent=11 // pred_check
          %p877 = pneg %p164
        $region14: #{forward.1} parent=11 // pred_check_branch
          %879 = sbr.rel (%p877) target = $region16
        $region15: #{forward.1} parent=11 // pred_region
          _
        $region16: #{forward.1} parent=11 // pred_fallthru
          _
        // Predicated region
        $region17: #{forward.1} parent=11 // pred_check
          %p880 = pneg %p185
        $region18: #{forward.1} parent=11 // pred_check_branch
          %882 = sbr.rel (%p880) target = $region20
        $region19: #{forward.1} parent=11 // pred_region
          %s884 = ssub.s32 256, 256
          %885 = vsyncadd [#allocation5], %s884
          %s886 = sshll.u32 [#allocation4], 4
          %s887 = int_to_ptr.vmem [resolvable:$true] %s886
          %892 = dma.hbm_to_vmem [thread:$0]  %s7, 256, %s887, [#allocation5], 128, 128, 8
        $region20: #{forward.1} parent=11 // pred_fallthru
          _
        // Predicated region
        $region21: #{forward.1} parent=11 // pred_check
          %p893 = pneg %p206
        $region22: #{forward.1} parent=11 // pred_check_branch
          %895 = sbr.rel (%p893) target = $region24
        $region23: #{forward.1} parent=11 // pred_region
          %s897 = ssub.s32 256, 256
          %898 = vsyncadd [#allocation7], %s897
          %s899 = sshll.u32 [#allocation6], 4
          %s900 = int_to_ptr.vmem [resolvable:$true] %s899
          %905 = dma.hbm_to_vmem [thread:$0]  %s9, 256, %s900, [#allocation7], 128, 128, 8
        $region24: #{forward.1} parent=11 // pred_fallthru
          _
        // Predicated region
        $region25: #{forward.1} parent=11 // pred_check
          %p906 = pneg %p227
        $region26: #{forward.1} parent=11 // pred_check_branch
          %908 = sbr.rel (%p906) target = $region28
        $region27: #{forward.1} parent=11 // pred_region
          _
        $region28: #{forward.1} parent=11 // pred_fallthru
          _
        // Predicated region
        $region29: #{forward.1} parent=11 // pred_check
          %p909 = pneg %p248
        $region30: #{forward.1} parent=11 // pred_check_branch
          %911 = sbr.rel (%p909) target = $region32
        $region31: #{forward.1} parent=11 // pred_region
          %s913 = ssub.s32 256, 256
          %914 = vsyncadd [#allocation7], %s913
          %s915 = sshll.u32 [#allocation8], 4
          %s916 = int_to_ptr.vmem [resolvable:$true] %s915
          %921 = dma.hbm_to_vmem [thread:$0]  %s13, 256, %s916, [#allocation7], 128, 128, 8
        $region32: #{forward.1} parent=11 // pred_fallthru
          _
        // Predicated region
        $region33: #{forward.1} parent=11 // pred_check
          %p922 = pneg %p269
        $region34: #{forward.1} parent=11 // pred_check_branch
          %924 = sbr.rel (%p922) target = $region36
        $region35: #{forward.1} parent=11 // pred_region
          %s926 = ssub.s32 256, 256
          %927 = vsyncadd [#allocation10], %s926
          %s928 = sshll.u32 [#allocation9], 4
          %s929 = int_to_ptr.vmem [resolvable:$true] %s928
          %934 = dma.hbm_to_vmem [thread:$0]  %s15, 256, %s929, [#allocation10], 128, 128, 8
        $region36: #{forward.1} parent=11 // pred_fallthru
          _
        // Predicated region
        $region37: #{forward.1} parent=11 // pred_check
          %p935 = pneg %p290
        $region38: #{forward.1} parent=11 // pred_check_branch
          %937 = sbr.rel (%p935) target = $region40
        $region39: #{forward.1} parent=11 // pred_region
          %s939 = ssub.s32 16, 16
          %940 = vsyncadd [#allocation10], %s939
          %s942 = sshll.u32 [#allocation11], 4
          %s943 = int_to_ptr.vmem [resolvable:$true] %s942
          %945 = dma.hbm_to_vmem [thread:$0]  %s17, 16, %s943, [#allocation10]
        $region40: #{forward.1} parent=11 // pred_fallthru
          _
        // Predicated region
        $region41: #{forward.1} parent=11 // pred_check
          %p946 = pneg %p311
        $region42: #{forward.1} parent=11 // pred_check_branch
          %948 = sbr.rel (%p946) target = $region44
        $region43: #{forward.1} parent=11 // pred_region
          %s950 = ssub.s32 384, 384
          %951 = vsyncadd [#allocation13], %s950
          %s952 = sshll.u32 [#allocation12], 4
          %s953 = int_to_ptr.vmem [resolvable:$true] %s952
          %958 = dma.hbm_to_vmem [thread:$0]  %s19, 384, %s953, [#allocation13], 128, 128, 8
        $region44: #{forward.1} parent=11 // pred_fallthru
          _
        // Predicated region
        $region45: #{forward.1} parent=11 // pred_check
          %p959 = pneg %p332
        $region46: #{forward.1} parent=11 // pred_check_branch
          %961 = sbr.rel (%p959) target = $region48
        $region47: #{forward.1} parent=11 // pred_region
          %s963 = ssub.s32 16, 16
          %964 = vsyncadd [#allocation13], %s963
          %s966 = sshll.u32 [#allocation14], 4
          %s967 = int_to_ptr.vmem [resolvable:$true] %s966
          %969 = dma.hbm_to_vmem [thread:$0]  %s21, 16, %s967, [#allocation13]
        $region48: #{forward.1} parent=11 // pred_fallthru
          _
        // Predicated region
        $region49: #{forward.1} parent=11 // pred_check
          %p970 = pneg %p353
        $region50: #{forward.1} parent=11 // pred_check_branch
          %972 = sbr.rel (%p970) target = $region52
        $region51: #{forward.1} parent=11 // pred_region
          _
        $region52: #{forward.1} parent=11 // pred_fallthru
          _
        // Predicated region
        $region53: #{forward.1} parent=11 // pred_check
          %p973 = pneg %p374
        $region54: #{forward.1} parent=11 // pred_check_branch
          %975 = sbr.rel (%p973) target = $region56
        $region55: #{forward.1} parent=11 // pred_region
          %s977 = ssub.s32 16, 16
          %978 = vsyncadd [#allocation16], %s977
          %s980 = sshll.u32 [#allocation15], 4
          %s981 = int_to_ptr.vmem [resolvable:$true] %s980
          %983 = dma.hbm_to_vmem [thread:$0]  %s25, 16, %s981, [#allocation16]
        $region56: #{forward.1} parent=11 // pred_fallthru
          _
        // Predicated region
        $region57: #{forward.1} parent=11 // pred_check
          %p984 = pneg %p395
        $region58: #{forward.1} parent=11 // pred_check_branch
          %986 = sbr.rel (%p984) target = $region60
        $region59: #{forward.1} parent=11 // pred_region
          _
        $region60: #{forward.1} parent=11 // pred_fallthru
          _
        // Predicated region
        $region61: #{forward.1} parent=11 // pred_check
          %p987 = pneg %p416
        $region62: #{forward.1} parent=11 // pred_check_branch
          %989 = sbr.rel (%p987) target = $region64
        $region63: #{forward.1} parent=11 // pred_region
          _
        $region64: #{forward.1} parent=11 // pred_fallthru
          _
        // Predicated region
        $region65: #{forward.1} parent=11 // pred_check
          %p990 = pneg %p437
        $region66: #{forward.1} parent=11 // pred_check_branch
          %992 = sbr.rel (%p990) target = $region68
        $region67: #{forward.1} parent=11 // pred_region
          %s994 = ssub.s32 16, 16
          %995 = vsyncadd [#allocation16], %s994
          %s997 = sshll.u32 [#allocation17], 4
          %s998 = int_to_ptr.vmem [resolvable:$true] %s997
          %1000 = dma.hbm_to_vmem [thread:$0]  %s31, 16, %s998, [#allocation16]
        $region68: #{forward.1} parent=11 // pred_fallthru
          _
        // Predicated region
        $region69: #{forward.1} parent=11 // pred_check
          %p1001 = pneg %p458
        $region70: #{forward.1} parent=11 // pred_check_branch
          %1003 = sbr.rel (%p1001) target = $region72
        $region71: #{forward.1} parent=11 // pred_region
          _
        $region72: #{forward.1} parent=11 // pred_fallthru
          _
        // Predicated region
        $region73: #{forward.1} parent=11 // pred_check
          %p1004 = pneg %p479
        $region74: #{forward.1} parent=11 // pred_check_branch
          %1006 = sbr.rel (%p1004) target = $region76
        $region75: #{forward.1} parent=11 // pred_region
          %s1008 = ssub.s32 16, 16
          %1009 = vsyncadd [#allocation19], %s1008
          %s1011 = sshll.u32 [#allocation18], 4
          %s1012 = int_to_ptr.vmem [resolvable:$true] %s1011
          %1014 = dma.hbm_to_vmem [thread:$0]  %s35, 16, %s1012, [#allocation19]
        $region76: #{forward.1} parent=11 // pred_fallthru
          _
        // Predicated region
        $region77: #{forward.1} parent=11 // pred_check
          %p1015 = pneg %p500
        $region78: #{forward.1} parent=11 // pred_check_branch
          %1017 = sbr.rel (%p1015) target = $region80
        $region79: #{forward.1} parent=11 // pred_region
          _
        $region80: #{forward.1} parent=11 // pred_fallthru
          _
        // Predicated region
        $region81: #{forward.1} parent=11 // pred_check
          %p1018 = pneg %p521
        $region82: #{forward.1} parent=11 // pred_check_branch
          %1020 = sbr.rel (%p1018) target = $region84
        $region83: #{forward.1} parent=11 // pred_region
          _
        $region84: #{forward.1} parent=11 // pred_fallthru
          _
        // Predicated region
        $region85: #{forward.1} parent=11 // pred_check
          %p1021 = pneg %p542
        $region86: #{forward.1} parent=11 // pred_check_branch
          %1023 = sbr.rel (%p1021) target = $region88
        $region87: #{forward.1} parent=11 // pred_region
          %s1025 = ssub.s32 32, 32
          %1026 = vsyncadd [#allocation19], %s1025
          %s1028 = sshll.u32 [#allocation20], 4
          %s1029 = int_to_ptr.vmem [resolvable:$true] %s1028
          %1031 = dma.hbm_to_vmem [thread:$0]  %s41, 32, %s1029, [#allocation19]
        $region88: #{forward.1} parent=11 // pred_fallthru
          _
        // Predicated region
        $region89: #{forward.1} parent=11 // pred_check
          %p1032 = pneg %p563
        $region90: #{forward.1} parent=11 // pred_check_branch
          %1034 = sbr.rel (%p1032) target = $region92
        $region91: #{forward.1} parent=11 // pred_region
          %s1036 = ssub.s32 32, 32
          %1037 = vsyncadd [#allocation22], %s1036
          %s1039 = sshll.u32 [#allocation21], 4
          %s1040 = int_to_ptr.vmem [resolvable:$true] %s1039
          %1042 = dma.hbm_to_vmem [thread:$0]  %s43, 32, %s1040, [#allocation22]
        $region92: #{forward.1} parent=11 // pred_fallthru
          _
        // Predicated region
        $region93: #{forward.1} parent=11 // pred_check
          %p1043 = pneg %p584
        $region94: #{forward.1} parent=11 // pred_check_branch
          %1045 = sbr.rel (%p1043) target = $region96
        $region95: #{forward.1} parent=11 // pred_region
          %s1047 = ssub.s32 16, 16
          %1048 = vsyncadd [#allocation22], %s1047
          %s1050 = sshll.u32 [#allocation23], 4
          %s1051 = int_to_ptr.vmem [resolvable:$true] %s1050
          %1053 = dma.hbm_to_vmem [thread:$0]  %s45, 16, %s1051, [#allocation22]
        $region96: #{forward.1} parent=11 // pred_fallthru
          _
        // Predicated region
        $region97: #{forward.1} parent=11 // pred_check
          %p1054 = pneg %p605
        $region98: #{forward.1} parent=11 // pred_check_branch
          %1056 = sbr.rel (%p1054) target = $region100
        $region99: #{forward.1} parent=11 // pred_region
          _
        $region100: #{forward.1} parent=11 // pred_fallthru
          _
        // Predicated region
        $region101: #{forward.1} parent=11 // pred_check
          %p1057 = pneg %p626
        $region102: #{forward.1} parent=11 // pred_check_branch
          %1059 = sbr.rel (%p1057) target = $region104
        $region103: #{forward.1} parent=11 // pred_region
          %s1061 = ssub.s32 16, 16
          %1062 = vsyncadd [#allocation25], %s1061
          %s1064 = sshll.u32 [#allocation24], 4
          %s1065 = int_to_ptr.vmem [resolvable:$true] %s1064
          %1067 = dma.hbm_to_vmem [thread:$0]  %s49, 16, %s1065, [#allocation25]
        $region104: #{forward.1} parent=11 // pred_fallthru
          _
        // Predicated region
        $region105: #{forward.1} parent=11 // pred_check
          %p1068 = pneg %p647
        $region106: #{forward.1} parent=11 // pred_check_branch
          %1070 = sbr.rel (%p1068) target = $region108
        $region107: #{forward.1} parent=11 // pred_region
          _
        $region108: #{forward.1} parent=11 // pred_fallthru
          _
        // Predicated region
        $region109: #{forward.1} parent=11 // pred_check
          %p1071 = pneg %p668
        $region110: #{forward.1} parent=11 // pred_check_branch
          %1073 = sbr.rel (%p1071) target = $region112
        $region111: #{forward.1} parent=11 // pred_region
          %s1075 = ssub.s32 16, 16
          %1076 = vsyncadd [#allocation25], %s1075
          %s1078 = sshll.u32 [#allocation26], 4
          %s1079 = int_to_ptr.vmem [resolvable:$true] %s1078
          %1081 = dma.hbm_to_vmem [thread:$0]  %s53, 16, %s1079, [#allocation25]
        $region112: #{forward.1} parent=11 // pred_fallthru
          _
        // Predicated region
        $region113: #{forward.1} parent=11 // pred_check
          %p1082 = pneg %p689
        $region114: #{forward.1} parent=11 // pred_check_branch
          %1084 = sbr.rel (%p1082) target = $region116
        $region115: #{forward.1} parent=11 // pred_region
          %s1086 = ssub.s32 512, 512
          %1087 = vsyncadd [#allocation28], %s1086
          %s1088 = sshll.u32 [#allocation27], 4
          %s1089 = int_to_ptr.vmem [resolvable:$true] %s1088
          %1094 = dma.hbm_to_vmem [thread:$0]  %s55, 512, %s1089, [#allocation28], 128, 128, 8
        $region116: #{forward.1} parent=11 // pred_fallthru
          _
        // Predicated region
        $region117: #{forward.1} parent=11 // pred_check
          %p1095 = pneg %p710
        $region118: #{forward.1} parent=11 // pred_check_branch
          %1097 = sbr.rel (%p1095) target = $region120
        $region119: #{forward.1} parent=11 // pred_region
          %s1099 = ssub.s32 16, 16
          %1100 = vsyncadd [#allocation28], %s1099
          %s1102 = sshll.u32 [#allocation29], 4
          %s1103 = int_to_ptr.vmem [resolvable:$true] %s1102
          %1105 = dma.hbm_to_vmem [thread:$0]  %s57, 16, %s1103, [#allocation28]
        $region120: #{forward.1} parent=11 // pred_fallthru
          _
        // Predicated region
        $region121: #{forward.1} parent=11 // pred_check
          %p1106 = pneg %p731
        $region122: #{forward.1} parent=11 // pred_check_branch
          %1108 = sbr.rel (%p1106) target = $region124
        $region123: #{forward.1} parent=11 // pred_region
          %s1110 = ssub.s32 512, 512
          %1111 = vsyncadd [#allocation31], %s1110
          %s1112 = sshll.u32 [#allocation30], 4
          %s1113 = int_to_ptr.vmem [resolvable:$true] %s1112
          %1118 = dma.hbm_to_vmem [thread:$0]  %s59, 512, %s1113, [#allocation31], 128, 128, 8
        $region124: #{forward.1} parent=11 // pred_fallthru
          _
        // Predicated region
        $region125: #{forward.1} parent=11 // pred_check
          %p1119 = pneg %p752
        $region126: #{forward.1} parent=11 // pred_check_branch
          %1121 = sbr.rel (%p1119) target = $region128
        $region127: #{forward.1} parent=11 // pred_region
          %s1123 = ssub.s32 16, 16
          %1124 = vsyncadd [#allocation31], %s1123
          %s1126 = sshll.u32 [#allocation32], 4
          %s1127 = int_to_ptr.vmem [resolvable:$true] %s1126
          %1129 = dma.hbm_to_vmem [thread:$0]  %s61, 16, %s1127, [#allocation31]
        $region128: #{forward.1} parent=11 // pred_fallthru
          _
        // Predicated region
        $region129: #{forward.1} parent=11 // pred_check
          %p1130 = pneg %p773
        $region130: #{forward.1} parent=11 // pred_check_branch
          %1132 = sbr.rel (%p1130) target = $region132
        $region131: #{forward.1} parent=11 // pred_region
          _
        $region132: #{forward.1} parent=11 // pred_fallthru
          _
        // Predicated region
        $region133: #{forward.1} parent=11 // pred_check
          %p1133 = pneg %p794
        $region134: #{forward.1} parent=11 // pred_check_branch
          %1135 = sbr.rel (%p1133) target = $region136
        $region135: #{forward.1} parent=11 // pred_region
          _
        $region136: #{forward.1} parent=11 // pred_fallthru
          _
        // Predicated region
        $region137: #{forward.1} parent=11 // pred_check
          %p1136 = pneg %p815
        $region138: #{forward.1} parent=11 // pred_check_branch
          %1138 = sbr.rel (%p1136) target = $region140
        $region139: #{forward.1} parent=11 // pred_region
          _
        $region140: #{forward.1} parent=11 // pred_fallthru
          _
        // Predicated region
        $region141: #{forward.1} parent=11 // pred_check
          %p1139 = pneg %p836
        $region142: #{forward.1} parent=11 // pred_check_branch
          %1141 = sbr.rel (%p1139) target = $region144
        $region143: #{forward.1} parent=11 // pred_region
          _
        $region144: #{forward.1} parent=11 // pred_fallthru
          _
      $region12: #{forward.1} parent=5 // pred_fallthru
        _
      %p1142 = scmp.lt.s32.totalorder %s91, 2
      // Predicated region
      $region145: #{forward.1} parent=5 // pred_check
        %p1143 = pneg %p1142
      $region146: #{forward.1} parent=5 // pred_check_branch
        %1145 = sbr.rel (%p1143) target = $region148
      $region147: #{forward.1} parent=5 // pred_region
        // Predicated region
        $region149: #{forward.1} parent=147 // pred_check
          %p1146 = pneg %p111
        $region150: #{forward.1} parent=147 // pred_check_branch
          %1148 = sbr.rel (%p1146) target = $region152
        $region151: #{forward.1} parent=147 // pred_region
          %p1149 = scmp.lt.s32.totalorder %s91, 1
          %s1150 = scalar_select %p1149, %s91, 1
          %s1151 = smul.addr %s1150, 2
          %s1152 = smul.addr %s1151, 8
          %s1153 = scalar_lea.vmem %s1, %s1152
        $region152: #{forward.1} parent=147 // pred_fallthru
          _
        // Predicated region
        $region153: #{forward.1} parent=147 // pred_check
          %p1154 = pneg %p137
        $region154: #{forward.1} parent=147 // pred_check_branch
          %1156 = sbr.rel (%p1154) target = $region156
        $region155: #{forward.1} parent=147 // pred_region
          %p1157 = scmp.lt.s32.totalorder %s91, 1
          %s1158 = scalar_select %p1157, %s91, 1
          %s1159 = smul.addr %s1158, 2
          %s1160 = smul.addr %s1159, 8
          %s1161 = scalar_lea.vmem %s3, %s1160
        $region156: #{forward.1} parent=147 // pred_fallthru
          _
      $region148: #{forward.1} parent=5 // pred_fallthru
        _
      %p1162 = scmp.le.s32.totalorder 1, %s91
      %p1163 = scmp.lt.s32.totalorder %s91, 3
      %p1164 = pnand %p1162, %p1163
      %p1165 = pneg %p1164
      // Predicated region
      $region157: #{forward.1} parent=5 // pred_check
        _
      $region158: #{forward.1} parent=5 // pred_check_branch
        %1167 = sbr.rel (%p1164) target = $region160
      $region159: #{forward.1} parent=5 // pred_region
        %s1168 = ssub.s32 %s91, 1
        // Predicated region
        $region161: #{forward.1} parent=159 // pred_check
          %p1169 = pneg %p185
        $region162: #{forward.1} parent=159 // pred_check_branch
          %1171 = sbr.rel (%p1169) target = $region164
        $region163: #{forward.1} parent=159 // pred_region
          %1172 = dma.done [#allocation5], 256
        $region164: #{forward.1} parent=159 // pred_fallthru
          _
        // Predicated region
        $region165: #{forward.1} parent=159 // pred_check
          %p1173 = pneg %p206
        $region166: #{forward.1} parent=159 // pred_check_branch
          %1175 = sbr.rel (%p1173) target = $region168
        $region167: #{forward.1} parent=159 // pred_region
          %1176 = dma.done [#allocation7], 256
        $region168: #{forward.1} parent=159 // pred_fallthru
          _
        // Predicated region
        $region169: #{forward.1} parent=159 // pred_check
          %p1177 = pneg %p248
        $region170: #{forward.1} parent=159 // pred_check_branch
          %1179 = sbr.rel (%p1177) target = $region172
        $region171: #{forward.1} parent=159 // pred_region
          %1180 = dma.done [#allocation7], 256
        $region172: #{forward.1} parent=159 // pred_fallthru
          _
        // Predicated region
        $region173: #{forward.1} parent=159 // pred_check
          %p1181 = pneg %p269
        $region174: #{forward.1} parent=159 // pred_check_branch
          %1183 = sbr.rel (%p1181) target = $region176
        $region175: #{forward.1} parent=159 // pred_region
          %1184 = dma.done [#allocation10], 256
        $region176: #{forward.1} parent=159 // pred_fallthru
          _
        // Predicated region
        $region177: #{forward.1} parent=159 // pred_check
          %p1185 = pneg %p290
        $region178: #{forward.1} parent=159 // pred_check_branch
          %1187 = sbr.rel (%p1185) target = $region180
        $region179: #{forward.1} parent=159 // pred_region
          %1188 = dma.done [#allocation10], 16
        $region180: #{forward.1} parent=159 // pred_fallthru
          _
        // Predicated region
        $region181: #{forward.1} parent=159 // pred_check
          %p1189 = pneg %p311
        $region182: #{forward.1} parent=159 // pred_check_branch
          %1191 = sbr.rel (%p1189) target = $region184
        $region183: #{forward.1} parent=159 // pred_region
          %1192 = dma.done [#allocation13], 384
        $region184: #{forward.1} parent=159 // pred_fallthru
          _
        // Predicated region
        $region185: #{forward.1} parent=159 // pred_check
          %p1193 = pneg %p332
        $region186: #{forward.1} parent=159 // pred_check_branch
          %1195 = sbr.rel (%p1193) target = $region188
        $region187: #{forward.1} parent=159 // pred_region
          %1196 = dma.done [#allocation13], 16
        $region188: #{forward.1} parent=159 // pred_fallthru
          _
        // Predicated region
        $region189: #{forward.1} parent=159 // pred_check
          %p1197 = pneg %p374
        $region190: #{forward.1} parent=159 // pred_check_branch
          %1199 = sbr.rel (%p1197) target = $region192
        $region191: #{forward.1} parent=159 // pred_region
          %1200 = dma.done [#allocation16], 16
        $region192: #{forward.1} parent=159 // pred_fallthru
          _
        // Predicated region
        $region193: #{forward.1} parent=159 // pred_check
          %p1201 = pneg %p437
        $region194: #{forward.1} parent=159 // pred_check_branch
          %1203 = sbr.rel (%p1201) target = $region196
        $region195: #{forward.1} parent=159 // pred_region
          %1204 = dma.done [#allocation16], 16
        $region196: #{forward.1} parent=159 // pred_fallthru
          _
        // Predicated region
        $region197: #{forward.1} parent=159 // pred_check
          %p1205 = pneg %p479
        $region198: #{forward.1} parent=159 // pred_check_branch
          %1207 = sbr.rel (%p1205) target = $region200
        $region199: #{forward.1} parent=159 // pred_region
          %1208 = dma.done [#allocation19], 16
        $region200: #{forward.1} parent=159 // pred_fallthru
          _
        // Predicated region
        $region201: #{forward.1} parent=159 // pred_check
          %p1209 = pneg %p542
        $region202: #{forward.1} parent=159 // pred_check_branch
          %1211 = sbr.rel (%p1209) target = $region204
        $region203: #{forward.1} parent=159 // pred_region
          %1212 = dma.done [#allocation19], 32
        $region204: #{forward.1} parent=159 // pred_fallthru
          _
        // Predicated region
        $region205: #{forward.1} parent=159 // pred_check
          %p1213 = pneg %p563
        $region206: #{forward.1} parent=159 // pred_check_branch
          %1215 = sbr.rel (%p1213) target = $region208
        $region207: #{forward.1} parent=159 // pred_region
          %1216 = dma.done [#allocation22], 32
        $region208: #{forward.1} parent=159 // pred_fallthru
          _
        // Predicated region
        $region209: #{forward.1} parent=159 // pred_check
          %p1217 = pneg %p584
        $region210: #{forward.1} parent=159 // pred_check_branch
          %1219 = sbr.rel (%p1217) target = $region212
        $region211: #{forward.1} parent=159 // pred_region
          %1220 = dma.done [#allocation22], 16
        $region212: #{forward.1} parent=159 // pred_fallthru
          _
        // Predicated region
        $region213: #{forward.1} parent=159 // pred_check
          %p1221 = pneg %p626
        $region214: #{forward.1} parent=159 // pred_check_branch
          %1223 = sbr.rel (%p1221) target = $region216
        $region215: #{forward.1} parent=159 // pred_region
          %1224 = dma.done [#allocation25], 16
        $region216: #{forward.1} parent=159 // pred_fallthru
          _
        // Predicated region
        $region217: #{forward.1} parent=159 // pred_check
          %p1225 = pneg %p668
        $region218: #{forward.1} parent=159 // pred_check_branch
          %1227 = sbr.rel (%p1225) target = $region220
        $region219: #{forward.1} parent=159 // pred_region
          %1228 = dma.done [#allocation25], 16
        $region220: #{forward.1} parent=159 // pred_fallthru
          _
        // Predicated region
        $region221: #{forward.1} parent=159 // pred_check
          %p1229 = pneg %p689
        $region222: #{forward.1} parent=159 // pred_check_branch
          %1231 = sbr.rel (%p1229) target = $region224
        $region223: #{forward.1} parent=159 // pred_region
          %1232 = dma.done [#allocation28], 512
        $region224: #{forward.1} parent=159 // pred_fallthru
          _
        // Predicated region
        $region225: #{forward.1} parent=159 // pred_check
          %p1233 = pneg %p710
        $region226: #{forward.1} parent=159 // pred_check_branch
          %1235 = sbr.rel (%p1233) target = $region228
        $region227: #{forward.1} parent=159 // pred_region
          %1236 = dma.done [#allocation28], 16
        $region228: #{forward.1} parent=159 // pred_fallthru
          _
        // Predicated region
        $region229: #{forward.1} parent=159 // pred_check
          %p1237 = pneg %p731
        $region230: #{forward.1} parent=159 // pred_check_branch
          %1239 = sbr.rel (%p1237) target = $region232
        $region231: #{forward.1} parent=159 // pred_region
          %1240 = dma.done [#allocation31], 512
        $region232: #{forward.1} parent=159 // pred_fallthru
          _
        // Predicated region
        $region233: #{forward.1} parent=159 // pred_check
          %p1241 = pneg %p752
        $region234: #{forward.1} parent=159 // pred_check_branch
          %1243 = sbr.rel (%p1241) target = $region236
        $region235: #{forward.1} parent=159 // pred_region
          %1244 = dma.done [#allocation31], 16
        $region236: #{forward.1} parent=159 // pred_fallthru
          _
        %p1245 = scmp.lt.s32.totalorder %s96, 1
        %s1246 = scalar_select %p1245, %s96, 1
        %s1247 = smul.addr %s1246, 2
        %s1248 = smul.addr %s1247, 8
        %s1249 = scalar_lea.vmem %s1, %s1248
        %p1250 = pneg %p117
        %p1251 = pneg %p114
        %p1252 = scmp.lt.s32.totalorder %s96, 1
        %s1253 = scalar_select %p1252, %s96, 1
        %s1254 = smul.addr %s1253, 2
        %s1255 = smul.addr %s1254, 8
        %s1256 = scalar_lea.vmem %s3, %s1255
        %p1257 = pneg %p143
        %p1258 = pneg %p140
        %p1259 = pneg %p164
        %p1260 = pneg %p161
        %p1261 = pneg %p185
        %p1262 = pneg %p182
        %p1263 = pneg %p206
        %p1264 = pneg %p203
        %p1265 = pneg %p227
        %p1266 = pneg %p224
        %p1267 = pneg %p248
        %p1268 = pneg %p245
        %p1269 = pneg %p269
        %p1270 = pneg %p266
        %p1271 = pneg %p290
        %p1272 = pneg %p287
        %p1273 = pneg %p311
        %p1274 = pneg %p308
        %p1275 = pneg %p332
        %p1276 = pneg %p329
        %p1277 = pneg %p353
        %p1278 = pneg %p350
        %p1279 = pneg %p374
        %p1280 = pneg %p371
        %p1281 = pneg %p395
        %p1282 = pneg %p392
        %p1283 = pneg %p416
        %p1284 = pneg %p413
        %p1285 = pneg %p437
        %p1286 = pneg %p434
        %p1287 = pneg %p458
        %p1288 = pneg %p455
        %p1289 = pneg %p479
        %p1290 = pneg %p476
        %p1291 = pneg %p500
        %p1292 = pneg %p497
        %p1293 = pneg %p521
        %p1294 = pneg %p518
        %p1295 = pneg %p542
        %p1296 = pneg %p539
        %p1297 = pneg %p563
        %p1298 = pneg %p560
        %p1299 = pneg %p584
        %p1300 = pneg %p581
        %p1301 = pneg %p605
        %p1302 = pneg %p602
        %p1303 = pneg %p626
        %p1304 = pneg %p623
        %p1305 = pneg %p647
        %p1306 = pneg %p644
        %p1307 = pneg %p668
        %p1308 = pneg %p665
        %p1309 = pneg %p689
        %p1310 = pneg %p686
        %p1311 = pneg %p710
        %p1312 = pneg %p707
        %p1313 = pneg %p731
        %p1314 = pneg %p728
        %p1315 = pneg %p752
        %p1316 = pneg %p749
        %p1317 = pneg %p773
        %p1318 = pneg %p770
        %p1319 = pneg %p794
        %p1320 = pneg %p791
        %p1321 = pneg %p815
        %p1322 = pneg %p812
        %p1323 = pneg %p836
        %p1324 = pneg %p833
        %p1325 = pneg %p862
        %p1326 = pneg %p859
        %p1327 = scmp.lt.s32.totalorder %s96, 1
        %s1328 = scalar_select %p1327, %s96, 1
        %s1329 = scalar_lea.vmem %s71, %s1328
        %p1330 = scmp.lt.s32.totalorder %s96, 1
        %s1331 = scalar_select %p1330, %s96, 1
        %s1332 = smul.addr %s1331, 2
        %s1333 = smul.addr %s1332, 8
        %s1334 = scalar_lea.vmem %s1, %s1333
        %p1335 = scmp.lt.s32.totalorder %s96, 1
        %s1336 = scalar_select %p1335, %s96, 1
        %s1337 = smul.addr %s1336, 2
        %s1338 = smul.addr %s1337, 8
        %s1339 = scalar_lea.vmem %s3, %s1338
        %p1340 = scmp.lt.s32.totalorder %s96, 1
        %s1341 = scalar_select %p1340, %s96, 1
        %s1342 = scalar_lea.vmem %s71, %s1341
        %v1343 = vld [vmem:[%s1334] sm:$0xff]
        %v1344 = vld [vmem:[%s1334 + $0x8] sm:$0xff]
        %v1345 = vld [vmem:[%s1339] sm:$0xff]
        %v1346 = vld [vmem:[%s1339 + $0x8] sm:$0xff]
        %v1347 = vld [vmem:[%s5] sm:$0xff]
        %v1348 = vld [vmem:[%s5 + $0x8] sm:$0xff]
        %v1349 = vld [vmem:[#allocation4] sm:$0xff]
        %v1350 = vld [vmem:[#allocation4 + $0x8] sm:$0xff]
        %v1351 = vld [vmem:[#allocation6] sm:$0xff]
        %v1352 = vld [vmem:[#allocation6 + $0x8] sm:$0xff]
        %v1353 = vld [vmem:[%s11] sm:$0xff]
        %v1354 = vld [vmem:[%s11 + $0x8] sm:$0xff]
        %v1355 = vld [vmem:[#allocation8] sm:$0xff]
        %v1356 = vld [vmem:[#allocation8 + $0x8] sm:$0x3f]
        %v1357 = vld [vmem:[#allocation11] sm:$0x1]
        %v1359 = vlaneseq
        %v1360 = vshrl.u32 %v1359, 7
        %v1361 = vsub.s32 0, %v1360
        %v1362 = vrot.slane %v1357, %v1361
        %vm1364 = vcmask 113664
        %v1366 = vsel %vm1364, %v1343, 0
        %v1369 = vsel %vm1364, %v1344, 0
        %vm1371 = vcmask 1045504
        %v1373 = vsel %vm1371, %v1356, 0
        %1375 = vmatprep.subr.mxu0 0.0
        %1376 = vmatpush1.msra.mxu0 %v1355
        %1377 = vmatprep.subr.mxu0 0.0
        %1378 = vmatpush1.msra.mxu0 %v1373
        %1379 = vmatprep.subr.mxu0 0.0
        %1380 = vmatpush1.msra.mxu0 0.0
        %1381 = vmatprep.subr.mxu0 0.0
        %1382 = vmatpush1.msra.mxu0 0.0
        %1383 = vmatprep.subr.mxu0 0.0
        %1384 = vmatpush1.msra.mxu0 0.0
        %1385 = vmatprep.subr.mxu0 0.0
        %1386 = vmatpush1.msra.mxu0 0.0
        %1387 = vmatprep.subr.mxu0 0.0
        %1388 = vmatpush1.msra.mxu0 0.0
        %1389 = vmatprep.subr.mxu0 0.0
        %1390 = vmatpush1.msra.mxu0 0.0
        %1391 = vmatprep.subr.mxu0 0.0
        %1392 = vmatpush1.msra.mxu0 0.0
        %1393 = vmatprep.subr.mxu0 0.0
        %1394 = vmatpush1.msra.mxu0 0.0
        %1395 = vmatprep.subr.mxu0 0.0
        %1396 = vmatpush1.msra.mxu0 0.0
        %1397 = vmatprep.subr.mxu0 0.0
        %1398 = vmatpush1.msra.mxu0 0.0
        %1399 = vmatprep.subr.mxu0 0.0
        %1400 = vmatpush1.msra.mxu0 0.0
        %1401 = vmatprep.subr.mxu0 0.0
        %1402 = vmatpush1.msra.mxu0 0.0
        %1403 = vmatprep.subr.mxu0 0.0
        %1404 = vmatpush1.msra.mxu0 0.0
        %1405 = vmatprep.subr.mxu0 0.0
        %1406 = vmatpush1.msra.mxu0 0.0
        %1407 = vmatprep.subr.mxu0 0.0
        %1408 = vmatpush1.msra.mxu0 0.0
        %1409 = vmatprep.subr.mxu0 0.0
        %1410 = vmatpush1.msra.mxu0 0.0
        %1411 = vmatprep.subr.mxu0 0.0
        %1412 = vmatpush1.msra.mxu0 0.0
        %1413 = vmatprep.subr.mxu0 0.0
        %1414 = vmatpush1.msra.mxu0 0.0
        %1415 = vmatprep.subr.mxu0 0.0
        %1416 = vmatpush1.msra.mxu0 0.0
        %1417 = vmatprep.subr.mxu0 0.0
        %1418 = vmatpush1.msra.mxu0 0.0
        %1419 = vmatprep.subr.mxu0 0.0
        %1420 = vmatpush1.msra.mxu0 0.0
        %1421 = vmatprep.subr.mxu0 0.0
        %1422 = vmatpush1.msra.mxu0 0.0
        %1423 = vmatprep.subr.mxu0 0.0
        %1424 = vmatpush1.msra.mxu0 0.0
        %1425 = vmatprep.subr.mxu0 0.0
        %1426 = vmatpush1.msra.mxu0 0.0
        %1427 = vmatprep.subr.mxu0 0.0
        %1428 = vmatpush1.msra.mxu0 0.0
        %1429 = vmatprep.subr.mxu0 0.0
        %1430 = vmatpush1.msra.mxu0 0.0
        %1431 = vmatprep.subr.mxu0 0.0
        %1432 = vmatpush1.msra.mxu0 0.0
        %1433 = vmatprep.subr.mxu0 0.0
        %1434 = vmatpush1.msra.mxu0 0.0
        %1435 = vmatprep.subr.mxu0 0.0
        %1436 = vmatpush1.msra.mxu0 0.0
        %1437 = vmatprep.subr.mxu0 0.0
        %1438 = vmatpush1.msra.mxu0 0.0
        %1439 = vmatprep.mubr.f32.mxu0 0.0
        %1440 = vmatmul.mubr.f32.gmra.mrb[0].mxu0 %v1366
        %v1441 = vpop.f32.mrb[0].mxu0
        %v1442 = vadd.f32 %v1362, %v1441
        %v1443 = vpop.f32.mrb[0].mxu0
        %1444 = vmatprep.mubr.f32.mxu0 0.0
        %1445 = vmatmul.mubr.f32.gmra.mrb[0].mxu0 %v1369
        %v1446 = vpop.f32.mrb[0].mxu0
        %v1447 = vadd.f32 %v1362, %v1446
        %v1448 = vpop.f32.mrb[0].mxu0
        %1449 = vdwg.mxu0
        %vm1450 = vcmp.gt.f32.partialorder %v1442, 0.0
        %vm1451 = vcmp.gt.f32.partialorder %v1447, 0.0
        %v1452 = vmul.f32 %v1442, 0.01
        %v1453 = vmul.f32 %v1447, 0.01
        %v1454 = vsel %vm1450, %v1442, %v1452
        %v1455 = vsel %vm1451, %v1447, %v1453
        %v1456 = vld [vmem:[#allocation12] sm:$0xff]
        %v1457 = vld [vmem:[#allocation12 + $0x8] sm:$0xff]
        %v1458 = vld [vmem:[#allocation12 + $0x10] sm:$0xff]
        %v1459 = vld [vmem:[#allocation14] sm:$0x1]
        %v1461 = vlaneseq
        %v1462 = vshrl.u32 %v1461, 7
        %v1463 = vsub.s32 0, %v1462
        %v1464 = vrot.slane %v1459, %v1463
        %vm1466 = vcmask 195584
        %v1468 = vsel %vm1466, %v1454, 0
        %v1471 = vsel %vm1466, %v1455, 0
        %1473 = vmatprep.subr.mxu0 0.0
        %1474 = vmatpush1.msra.mxu0 %v1456
        %1475 = vmatprep.subr.mxu0 0.0
        %1476 = vmatpush1.msra.mxu0 %v1457
        %1477 = vmatprep.subr.mxu0 0.0
        %1478 = vmatpush1.msra.mxu0 %v1458
        %1479 = vmatprep.subr.mxu0 0.0
        %1480 = vmatpush1.msra.mxu0 0.0
        %1481 = vmatprep.subr.mxu0 0.0
        %1482 = vmatpush1.msra.mxu0 0.0
        %1483 = vmatprep.subr.mxu0 0.0
        %1484 = vmatpush1.msra.mxu0 0.0
        %1485 = vmatprep.subr.mxu0 0.0
        %1486 = vmatpush1.msra.mxu0 0.0
        %1487 = vmatprep.subr.mxu0 0.0
        %1488 = vmatpush1.msra.mxu0 0.0
        %1489 = vmatprep.subr.mxu0 0.0
        %1490 = vmatpush1.msra.mxu0 0.0
        %1491 = vmatprep.subr.mxu0 0.0
        %1492 = vmatpush1.msra.mxu0 0.0
        %1493 = vmatprep.subr.mxu0 0.0
        %1494 = vmatpush1.msra.mxu0 0.0
        %1495 = vmatprep.subr.mxu0 0.0
        %1496 = vmatpush1.msra.mxu0 0.0
        %1497 = vmatprep.subr.mxu0 0.0
        %1498 = vmatpush1.msra.mxu0 0.0
        %1499 = vmatprep.subr.mxu0 0.0
        %1500 = vmatpush1.msra.mxu0 0.0
        %1501 = vmatprep.subr.mxu0 0.0
        %1502 = vmatpush1.msra.mxu0 0.0
        %1503 = vmatprep.subr.mxu0 0.0
        %1504 = vmatpush1.msra.mxu0 0.0
        %1505 = vmatprep.subr.mxu0 0.0
        %1506 = vmatpush1.msra.mxu0 0.0
        %1507 = vmatprep.subr.mxu0 0.0
        %1508 = vmatpush1.msra.mxu0 0.0
        %1509 = vmatprep.subr.mxu0 0.0
        %1510 = vmatpush1.msra.mxu0 0.0
        %1511 = vmatprep.subr.mxu0 0.0
        %1512 = vmatpush1.msra.mxu0 0.0
        %1513 = vmatprep.subr.mxu0 0.0
        %1514 = vmatpush1.msra.mxu0 0.0
        %1515 = vmatprep.subr.mxu0 0.0
        %1516 = vmatpush1.msra.mxu0 0.0
        %1517 = vmatprep.subr.mxu0 0.0
        %1518 = vmatpush1.msra.mxu0 0.0
        %1519 = vmatprep.subr.mxu0 0.0
        %1520 = vmatpush1.msra.mxu0 0.0
        %1521 = vmatprep.subr.mxu0 0.0
        %1522 = vmatpush1.msra.mxu0 0.0
        %1523 = vmatprep.subr.mxu0 0.0
        %1524 = vmatpush1.msra.mxu0 0.0
        %1525 = vmatprep.subr.mxu0 0.0
        %1526 = vmatpush1.msra.mxu0 0.0
        %1527 = vmatprep.subr.mxu0 0.0
        %1528 = vmatpush1.msra.mxu0 0.0
        %1529 = vmatprep.subr.mxu0 0.0
        %1530 = vmatpush1.msra.mxu0 0.0
        %1531 = vmatprep.subr.mxu0 0.0
        %1532 = vmatpush1.msra.mxu0 0.0
        %1533 = vmatprep.subr.mxu0 0.0
        %1534 = vmatpush1.msra.mxu0 0.0
        %1535 = vmatprep.subr.mxu0 0.0
        %1536 = vmatpush1.msra.mxu0 0.0
        %1537 = vmatprep.mubr.f32.mxu0 0.0
        %1538 = vmatmul.mubr.f32.gmra.mrb[0].mxu0 %v1468
        %v1539 = vpop.f32.mrb[0].mxu0
        %v1540 = vadd.f32 %v1464, %v1539
        %v1541 = vpop.f32.mrb[0].mxu0
        %1542 = vmatprep.mubr.f32.mxu0 0.0
        %1543 = vmatmul.mubr.f32.gmra.mrb[0].mxu0 %v1471
        %v1544 = vpop.f32.mrb[0].mxu0
        %v1545 = vadd.f32 %v1464, %v1544
        %v1546 = vpop.f32.mrb[0].mxu0
        %1547 = vdwg.mxu0
        %vm1548 = vcmp.gt.f32.partialorder %v1540, 0.0
        %vm1549 = vcmp.gt.f32.partialorder %v1545, 0.0
        %v1550 = vmul.f32 %v1540, 0.01
        %v1551 = vmul.f32 %v1545, 0.01
        %v1552 = vsel %vm1548, %v1540, %v1550
        %v1553 = vsel %vm1549, %v1545, %v1551
        %v1554 = vld [vmem:[%s23] sm:$0xff]
        %v1555 = vld [vmem:[%s23 + $0x8] sm:$0xff]
        %v1556 = vld [vmem:[%s23 + $0x10] sm:$0xff]
        %v1557 = vld [vmem:[%s23 + $0x18] sm:$0xff]
        %v1558 = vld [vmem:[#allocation15] sm:$0x1]
        %v1560 = vlaneseq
        %v1561 = vshrl.u32 %v1560, 7
        %v1562 = vsub.s32 0, %v1561
        %v1563 = vrot.slane %v1558, %v1562
        %vm1565 = vcmask 261120
        %v1567 = vsel %vm1565, %v1552, 0
        %v1570 = vsel %vm1565, %v1553, 0
        %1572 = vmatprep.subr.mxu0 0.0
        %1573 = vmatpush1.msra.mxu0 %v1554
        %1574 = vmatprep.subr.mxu0 0.0
        %1575 = vmatpush1.msra.mxu0 %v1555
        %1576 = vmatprep.subr.mxu0 0.0
        %1577 = vmatpush1.msra.mxu0 %v1556
        %1578 = vmatprep.subr.mxu0 0.0
        %1579 = vmatpush1.msra.mxu0 %v1557
        %1580 = vmatprep.subr.mxu0 0.0
        %1581 = vmatpush1.msra.mxu0 0.0
        %1582 = vmatprep.subr.mxu0 0.0
        %1583 = vmatpush1.msra.mxu0 0.0
        %1584 = vmatprep.subr.mxu0 0.0
        %1585 = vmatpush1.msra.mxu0 0.0
        %1586 = vmatprep.subr.mxu0 0.0
        %1587 = vmatpush1.msra.mxu0 0.0
        %1588 = vmatprep.subr.mxu0 0.0
        %1589 = vmatpush1.msra.mxu0 0.0
        %1590 = vmatprep.subr.mxu0 0.0
        %1591 = vmatpush1.msra.mxu0 0.0
        %1592 = vmatprep.subr.mxu0 0.0
        %1593 = vmatpush1.msra.mxu0 0.0
        %1594 = vmatprep.subr.mxu0 0.0
        %1595 = vmatpush1.msra.mxu0 0.0
        %1596 = vmatprep.subr.mxu0 0.0
        %1597 = vmatpush1.msra.mxu0 0.0
        %1598 = vmatprep.subr.mxu0 0.0
        %1599 = vmatpush1.msra.mxu0 0.0
        %1600 = vmatprep.subr.mxu0 0.0
        %1601 = vmatpush1.msra.mxu0 0.0
        %1602 = vmatprep.subr.mxu0 0.0
        %1603 = vmatpush1.msra.mxu0 0.0
        %1604 = vmatprep.subr.mxu0 0.0
        %1605 = vmatpush1.msra.mxu0 0.0
        %1606 = vmatprep.subr.mxu0 0.0
        %1607 = vmatpush1.msra.mxu0 0.0
        %1608 = vmatprep.subr.mxu0 0.0
        %1609 = vmatpush1.msra.mxu0 0.0
        %1610 = vmatprep.subr.mxu0 0.0
        %1611 = vmatpush1.msra.mxu0 0.0
        %1612 = vmatprep.subr.mxu0 0.0
        %1613 = vmatpush1.msra.mxu0 0.0
        %1614 = vmatprep.subr.mxu0 0.0
        %1615 = vmatpush1.msra.mxu0 0.0
        %1616 = vmatprep.subr.mxu0 0.0
        %1617 = vmatpush1.msra.mxu0 0.0
        %1618 = vmatprep.subr.mxu0 0.0
        %1619 = vmatpush1.msra.mxu0 0.0
        %1620 = vmatprep.subr.mxu0 0.0
        %1621 = vmatpush1.msra.mxu0 0.0
        %1622 = vmatprep.subr.mxu0 0.0
        %1623 = vmatpush1.msra.mxu0 0.0
        %1624 = vmatprep.subr.mxu0 0.0
        %1625 = vmatpush1.msra.mxu0 0.0
        %1626 = vmatprep.subr.mxu0 0.0
        %1627 = vmatpush1.msra.mxu0 0.0
        %1628 = vmatprep.subr.mxu0 0.0
        %1629 = vmatpush1.msra.mxu0 0.0
        %1630 = vmatprep.subr.mxu0 0.0
        %1631 = vmatpush1.msra.mxu0 0.0
        %1632 = vmatprep.subr.mxu0 0.0
        %1633 = vmatpush1.msra.mxu0 0.0
        %1634 = vmatprep.subr.mxu0 0.0
        %1635 = vmatpush1.msra.mxu0 0.0
        %1636 = vmatprep.mubr.f32.mxu0 0.0
        %1637 = vmatmul.mubr.f32.gmra.mrb[0].mxu0 %v1567
        %v1638 = vpop.f32.mrb[0].mxu0
        %v1639 = vadd.f32 %v1563, %v1638
        %v1640 = vpop.f32.mrb[0].mxu0
        %1641 = vmatprep.mubr.f32.mxu0 0.0
        %1642 = vmatmul.mubr.f32.gmra.mrb[0].mxu0 %v1570
        %v1643 = vpop.f32.mrb[0].mxu0
        %v1644 = vadd.f32 %v1563, %v1643
        %v1645 = vpop.f32.mrb[0].mxu0
        %1646 = vdwg.mxu0
        %vm1647 = vcmp.gt.f32.partialorder %v1639, 0.0
        %vm1648 = vcmp.gt.f32.partialorder %v1644, 0.0
        %v1649 = vmul.f32 %v1639, 0.01
        %v1650 = vmul.f32 %v1644, 0.01
        %v1651 = vsel %vm1647, %v1639, %v1649
        %v1652 = vsel %vm1648, %v1644, %v1650
        %v1653 = vld [vmem:[#allocation9] sm:$0xff]
        %v1654 = vld [vmem:[#allocation9 + $0x8] sm:$0x3f]
        %v1656 = vsel %vm1371, %v1654, 0
        %1658 = vmatprep.subr.mxu0 0.0
        %1659 = vmatpush1.msra.mxu0 %v1653
        %1660 = vmatprep.subr.mxu0 0.0
        %1661 = vmatpush1.msra.mxu0 %v1656
        %1662 = vmatprep.subr.mxu0 0.0
        %1663 = vmatpush1.msra.mxu0 0.0
        %1664 = vmatprep.subr.mxu0 0.0
        %1665 = vmatpush1.msra.mxu0 0.0
        %1666 = vmatprep.subr.mxu0 0.0
        %1667 = vmatpush1.msra.mxu0 0.0
        %1668 = vmatprep.subr.mxu0 0.0
        %1669 = vmatpush1.msra.mxu0 0.0
        %1670 = vmatprep.subr.mxu0 0.0
        %1671 = vmatpush1.msra.mxu0 0.0
        %1672 = vmatprep.subr.mxu0 0.0
        %1673 = vmatpush1.msra.mxu0 0.0
        %1674 = vmatprep.subr.mxu0 0.0
        %1675 = vmatpush1.msra.mxu0 0.0
        %1676 = vmatprep.subr.mxu0 0.0
        %1677 = vmatpush1.msra.mxu0 0.0
        %1678 = vmatprep.subr.mxu0 0.0
        %1679 = vmatpush1.msra.mxu0 0.0
        %1680 = vmatprep.subr.mxu0 0.0
        %1681 = vmatpush1.msra.mxu0 0.0
        %1682 = vmatprep.subr.mxu0 0.0
        %1683 = vmatpush1.msra.mxu0 0.0
        %1684 = vmatprep.subr.mxu0 0.0
        %1685 = vmatpush1.msra.mxu0 0.0
        %1686 = vmatprep.subr.mxu0 0.0
        %1687 = vmatpush1.msra.mxu0 0.0
        %1688 = vmatprep.subr.mxu0 0.0
        %1689 = vmatpush1.msra.mxu0 0.0
        %1690 = vmatprep.subr.mxu0 0.0
        %1691 = vmatpush1.msra.mxu0 0.0
        %1692 = vmatprep.subr.mxu0 0.0
        %1693 = vmatpush1.msra.mxu0 0.0
        %1694 = vmatprep.subr.mxu0 0.0
        %1695 = vmatpush1.msra.mxu0 0.0
        %1696 = vmatprep.subr.mxu0 0.0
        %1697 = vmatpush1.msra.mxu0 0.0
        %1698 = vmatprep.subr.mxu0 0.0
        %1699 = vmatpush1.msra.mxu0 0.0
        %1700 = vmatprep.subr.mxu0 0.0
        %1701 = vmatpush1.msra.mxu0 0.0
        %1702 = vmatprep.subr.mxu0 0.0
        %1703 = vmatpush1.msra.mxu0 0.0
        %1704 = vmatprep.subr.mxu0 0.0
        %1705 = vmatpush1.msra.mxu0 0.0
        %1706 = vmatprep.subr.mxu0 0.0
        %1707 = vmatpush1.msra.mxu0 0.0
        %1708 = vmatprep.subr.mxu0 0.0
        %1709 = vmatpush1.msra.mxu0 0.0
        %1710 = vmatprep.subr.mxu0 0.0
        %1711 = vmatpush1.msra.mxu0 0.0
        %1712 = vmatprep.subr.mxu0 0.0
        %1713 = vmatpush1.msra.mxu0 0.0
        %1714 = vmatprep.subr.mxu0 0.0
        %1715 = vmatpush1.msra.mxu0 0.0
        %1716 = vmatprep.subr.mxu0 0.0
        %1717 = vmatpush1.msra.mxu0 0.0
        %1718 = vmatprep.subr.mxu0 0.0
        %1719 = vmatpush1.msra.mxu0 0.0
        %1720 = vmatprep.subr.mxu0 0.0
        %1721 = vmatpush1.msra.mxu0 0.0
        %1722 = vmatprep.mubr.f32.mxu0 0.0
        %1723 = vmatmul.mubr.f32.gmra.mrb[0].mxu0 %v1366
        %v1724 = vpop.f32.mrb[0].mxu0
        %v1725 = vadd.f32 %v1362, %v1724
        %v1726 = vpop.f32.mrb[0].mxu0
        %1727 = vmatprep.mubr.f32.mxu0 0.0
        %1728 = vmatmul.mubr.f32.gmra.mrb[0].mxu0 %v1369
        %v1729 = vpop.f32.mrb[0].mxu0
        %v1730 = vadd.f32 %v1362, %v1729
        %v1731 = vpop.f32.mrb[0].mxu0
        %1732 = vdwg.mxu0
        %vm1733 = vcmp.gt.f32.partialorder %v1725, 0.0
        %vm1734 = vcmp.gt.f32.partialorder %v1730, 0.0
        %v1735 = vmul.f32 %v1725, 0.01
        %v1736 = vmul.f32 %v1730, 0.01
        %v1737 = vsel %vm1733, %v1725, %v1735
        %v1738 = vsel %vm1734, %v1730, %v1736
        %v1740 = vsel %vm1466, %v1737, 0
        %v1743 = vsel %vm1466, %v1738, 0
        %1745 = vmatprep.subr.mxu0 0.0
        %1746 = vmatpush1.msra.mxu0 %v1456
        %1747 = vmatprep.subr.mxu0 0.0
        %1748 = vmatpush1.msra.mxu0 %v1457
        %1749 = vmatprep.subr.mxu0 0.0
        %1750 = vmatpush1.msra.mxu0 %v1458
        %1751 = vmatprep.subr.mxu0 0.0
        %1752 = vmatpush1.msra.mxu0 0.0
        %1753 = vmatprep.subr.mxu0 0.0
        %1754 = vmatpush1.msra.mxu0 0.0
        %1755 = vmatprep.subr.mxu0 0.0
        %1756 = vmatpush1.msra.mxu0 0.0
        %1757 = vmatprep.subr.mxu0 0.0
        %1758 = vmatpush1.msra.mxu0 0.0
        %1759 = vmatprep.subr.mxu0 0.0
        %1760 = vmatpush1.msra.mxu0 0.0
        %1761 = vmatprep.subr.mxu0 0.0
        %1762 = vmatpush1.msra.mxu0 0.0
        %1763 = vmatprep.subr.mxu0 0.0
        %1764 = vmatpush1.msra.mxu0 0.0
        %1765 = vmatprep.subr.mxu0 0.0
        %1766 = vmatpush1.msra.mxu0 0.0
        %1767 = vmatprep.subr.mxu0 0.0
        %1768 = vmatpush1.msra.mxu0 0.0
        %1769 = vmatprep.subr.mxu0 0.0
        %1770 = vmatpush1.msra.mxu0 0.0
        %1771 = vmatprep.subr.mxu0 0.0
        %1772 = vmatpush1.msra.mxu0 0.0
        %1773 = vmatprep.subr.mxu0 0.0
        %1774 = vmatpush1.msra.mxu0 0.0
        %1775 = vmatprep.subr.mxu0 0.0
        %1776 = vmatpush1.msra.mxu0 0.0
        %1777 = vmatprep.subr.mxu0 0.0
        %1778 = vmatpush1.msra.mxu0 0.0
        %1779 = vmatprep.subr.mxu0 0.0
        %1780 = vmatpush1.msra.mxu0 0.0
        %1781 = vmatprep.subr.mxu0 0.0
        %1782 = vmatpush1.msra.mxu0 0.0
        %1783 = vmatprep.subr.mxu0 0.0
        %1784 = vmatpush1.msra.mxu0 0.0
        %1785 = vmatprep.subr.mxu0 0.0
        %1786 = vmatpush1.msra.mxu0 0.0
        %1787 = vmatprep.subr.mxu0 0.0
        %1788 = vmatpush1.msra.mxu0 0.0
        %1789 = vmatprep.subr.mxu0 0.0
        %1790 = vmatpush1.msra.mxu0 0.0
        %1791 = vmatprep.subr.mxu0 0.0
        %1792 = vmatpush1.msra.mxu0 0.0
        %1793 = vmatprep.subr.mxu0 0.0
        %1794 = vmatpush1.msra.mxu0 0.0
        %1795 = vmatprep.subr.mxu0 0.0
        %1796 = vmatpush1.msra.mxu0 0.0
        %1797 = vmatprep.subr.mxu0 0.0
        %1798 = vmatpush1.msra.mxu0 0.0
        %1799 = vmatprep.subr.mxu0 0.0
        %1800 = vmatpush1.msra.mxu0 0.0
        %1801 = vmatprep.subr.mxu0 0.0
        %1802 = vmatpush1.msra.mxu0 0.0
        %1803 = vmatprep.subr.mxu0 0.0
        %1804 = vmatpush1.msra.mxu0 0.0
        %1805 = vmatprep.subr.mxu0 0.0
        %1806 = vmatpush1.msra.mxu0 0.0
        %1807 = vmatprep.subr.mxu0 0.0
        %1808 = vmatpush1.msra.mxu0 0.0
        %1809 = vmatprep.mubr.f32.mxu0 0.0
        %1810 = vmatmul.mubr.f32.gmra.mrb[0].mxu0 %v1740
        %v1811 = vpop.f32.mrb[0].mxu0
        %v1812 = vadd.f32 %v1464, %v1811
        %v1813 = vpop.f32.mrb[0].mxu0
        %1814 = vmatprep.mubr.f32.mxu0 0.0
        %1815 = vmatmul.mubr.f32.gmra.mrb[0].mxu0 %v1743
        %v1816 = vpop.f32.mrb[0].mxu0
        %v1817 = vadd.f32 %v1464, %v1816
        %v1818 = vpop.f32.mrb[0].mxu0
        %1819 = vdwg.mxu0
        %vm1820 = vcmp.gt.f32.partialorder %v1812, 0.0
        %vm1821 = vcmp.gt.f32.partialorder %v1817, 0.0
        %v1822 = vmul.f32 %v1812, 0.01
        %v1823 = vmul.f32 %v1817, 0.01
        %v1824 = vsel %vm1820, %v1812, %v1822
        %v1825 = vsel %vm1821, %v1817, %v1823
        %v1827 = vsel %vm1565, %v1824, 0
        %v1830 = vsel %vm1565, %v1825, 0
        %1832 = vmatprep.subr.mxu0 0.0
        %1833 = vmatpush1.msra.mxu0 %v1554
        %1834 = vmatprep.subr.mxu0 0.0
        %1835 = vmatpush1.msra.mxu0 %v1555
        %1836 = vmatprep.subr.mxu0 0.0
        %1837 = vmatpush1.msra.mxu0 %v1556
        %1838 = vmatprep.subr.mxu0 0.0
        %1839 = vmatpush1.msra.mxu0 %v1557
        %1840 = vmatprep.subr.mxu0 0.0
        %1841 = vmatpush1.msra.mxu0 0.0
        %1842 = vmatprep.subr.mxu0 0.0
        %1843 = vmatpush1.msra.mxu0 0.0
        %1844 = vmatprep.subr.mxu0 0.0
        %1845 = vmatpush1.msra.mxu0 0.0
        %1846 = vmatprep.subr.mxu0 0.0
        %1847 = vmatpush1.msra.mxu0 0.0
        %1848 = vmatprep.subr.mxu0 0.0
        %1849 = vmatpush1.msra.mxu0 0.0
        %1850 = vmatprep.subr.mxu0 0.0
        %1851 = vmatpush1.msra.mxu0 0.0
        %1852 = vmatprep.subr.mxu0 0.0
        %1853 = vmatpush1.msra.mxu0 0.0
        %1854 = vmatprep.subr.mxu0 0.0
        %1855 = vmatpush1.msra.mxu0 0.0
        %1856 = vmatprep.subr.mxu0 0.0
        %1857 = vmatpush1.msra.mxu0 0.0
        %1858 = vmatprep.subr.mxu0 0.0
        %1859 = vmatpush1.msra.mxu0 0.0
        %1860 = vmatprep.subr.mxu0 0.0
        %1861 = vmatpush1.msra.mxu0 0.0
        %1862 = vmatprep.subr.mxu0 0.0
        %1863 = vmatpush1.msra.mxu0 0.0
        %1864 = vmatprep.subr.mxu0 0.0
        %1865 = vmatpush1.msra.mxu0 0.0
        %1866 = vmatprep.subr.mxu0 0.0
        %1867 = vmatpush1.msra.mxu0 0.0
        %1868 = vmatprep.subr.mxu0 0.0
        %1869 = vmatpush1.msra.mxu0 0.0
        %1870 = vmatprep.subr.mxu0 0.0
        %1871 = vmatpush1.msra.mxu0 0.0
        %1872 = vmatprep.subr.mxu0 0.0
        %1873 = vmatpush1.msra.mxu0 0.0
        %1874 = vmatprep.subr.mxu0 0.0
        %1875 = vmatpush1.msra.mxu0 0.0
        %1876 = vmatprep.subr.mxu0 0.0
        %1877 = vmatpush1.msra.mxu0 0.0
        %1878 = vmatprep.subr.mxu0 0.0
        %1879 = vmatpush1.msra.mxu0 0.0
        %1880 = vmatprep.subr.mxu0 0.0
        %1881 = vmatpush1.msra.mxu0 0.0
        %1882 = vmatprep.subr.mxu0 0.0
        %1883 = vmatpush1.msra.mxu0 0.0
        %1884 = vmatprep.subr.mxu0 0.0
        %1885 = vmatpush1.msra.mxu0 0.0
        %1886 = vmatprep.subr.mxu0 0.0
        %1887 = vmatpush1.msra.mxu0 0.0
        %1888 = vmatprep.subr.mxu0 0.0
        %1889 = vmatpush1.msra.mxu0 0.0
        %1890 = vmatprep.subr.mxu0 0.0
        %1891 = vmatpush1.msra.mxu0 0.0
        %1892 = vmatprep.subr.mxu0 0.0
        %1893 = vmatpush1.msra.mxu0 0.0
        %1894 = vmatprep.subr.mxu0 0.0
        %1895 = vmatpush1.msra.mxu0 0.0
        %1896 = vmatprep.mubr.f32.mxu0 0.0
        %1897 = vmatmul.mubr.f32.gmra.mrb[0].mxu0 %v1827
        %v1898 = vpop.f32.mrb[0].mxu0
        %v1899 = vadd.f32 %v1563, %v1898
        %v1900 = vpop.f32.mrb[0].mxu0
        %1901 = vmatprep.mubr.f32.mxu0 0.0
        %1902 = vmatmul.mubr.f32.gmra.mrb[0].mxu0 %v1830
        %v1903 = vpop.f32.mrb[0].mxu0
        %v1904 = vadd.f32 %v1563, %v1903
        %v1905 = vpop.f32.mrb[0].mxu0
        %1906 = vdwg.mxu0
        %vm1907 = vcmp.gt.f32.partialorder %v1899, 0.0
        %vm1908 = vcmp.gt.f32.partialorder %v1904, 0.0
        %v1909 = vmul.f32 %v1899, 0.01
        %v1910 = vmul.f32 %v1904, 0.01
        %v1911 = vsel %vm1907, %v1899, %v1909
        %v1912 = vsel %vm1908, %v1904, %v1910
        %v1913 = vld [vmem:[%s27] sm:$0xff]
        %v1914 = vld [vmem:[%s27 + $0x8] sm:$0xff]
        %v1915 = vld [vmem:[%s27 + $0x10] sm:$0xff]
        %v1916 = vld [vmem:[%s27 + $0x18] sm:$0xff]
        %v1917 = vld [vmem:[%s29] sm:$0xff]
        %v1918 = vld [vmem:[%s29 + $0x8] sm:$0xff]
        %v1919 = vld [vmem:[%s29 + $0x10] sm:$0xff]
        %v1920 = vld [vmem:[%s29 + $0x18] sm:$0xff]
        %v1922 = vsel %vm1565, %v1911, 0
        %v1925 = vsel %vm1565, %v1912, 0
        %1927 = vmatprep.subr.mxu0 0.0
        %1928 = vmatpush1.msra.mxu0 %v1917
        %1929 = vmatprep.subr.mxu0 0.0
        %1930 = vmatpush1.msra.mxu0 %v1918
        %1931 = vmatprep.subr.mxu0 0.0
        %1932 = vmatpush1.msra.mxu0 %v1919
        %1933 = vmatprep.subr.mxu0 0.0
        %1934 = vmatpush1.msra.mxu0 %v1920
        %1935 = vmatprep.subr.mxu0 0.0
        %1936 = vmatpush1.msra.mxu0 0.0
        %1937 = vmatprep.subr.mxu0 0.0
        %1938 = vmatpush1.msra.mxu0 0.0
        %1939 = vmatprep.subr.mxu0 0.0
        %1940 = vmatpush1.msra.mxu0 0.0
        %1941 = vmatprep.subr.mxu0 0.0
        %1942 = vmatpush1.msra.mxu0 0.0
        %1943 = vmatprep.subr.mxu0 0.0
        %1944 = vmatpush1.msra.mxu0 0.0
        %1945 = vmatprep.subr.mxu0 0.0
        %1946 = vmatpush1.msra.mxu0 0.0
        %1947 = vmatprep.subr.mxu0 0.0
        %1948 = vmatpush1.msra.mxu0 0.0
        %1949 = vmatprep.subr.mxu0 0.0
        %1950 = vmatpush1.msra.mxu0 0.0
        %1951 = vmatprep.subr.mxu0 0.0
        %1952 = vmatpush1.msra.mxu0 0.0
        %1953 = vmatprep.subr.mxu0 0.0
        %1954 = vmatpush1.msra.mxu0 0.0
        %1955 = vmatprep.subr.mxu0 0.0
        %1956 = vmatpush1.msra.mxu0 0.0
        %1957 = vmatprep.subr.mxu0 0.0
        %1958 = vmatpush1.msra.mxu0 0.0
        %1959 = vmatprep.subr.mxu0 0.0
        %1960 = vmatpush1.msra.mxu0 0.0
        %1961 = vmatprep.subr.mxu0 0.0
        %1962 = vmatpush1.msra.mxu0 0.0
        %1963 = vmatprep.subr.mxu0 0.0
        %1964 = vmatpush1.msra.mxu0 0.0
        %1965 = vmatprep.subr.mxu0 0.0
        %1966 = vmatpush1.msra.mxu0 0.0
        %1967 = vmatprep.subr.mxu0 0.0
        %1968 = vmatpush1.msra.mxu0 0.0
        %1969 = vmatprep.subr.mxu0 0.0
        %1970 = vmatpush1.msra.mxu0 0.0
        %1971 = vmatprep.subr.mxu0 0.0
        %1972 = vmatpush1.msra.mxu0 0.0
        %1973 = vmatprep.subr.mxu0 0.0
        %1974 = vmatpush1.msra.mxu0 0.0
        %1975 = vmatprep.subr.mxu0 0.0
        %1976 = vmatpush1.msra.mxu0 0.0
        %1977 = vmatprep.subr.mxu0 0.0
        %1978 = vmatpush1.msra.mxu0 0.0
        %1979 = vmatprep.subr.mxu0 0.0
        %1980 = vmatpush1.msra.mxu0 0.0
        %1981 = vmatprep.subr.mxu0 0.0
        %1982 = vmatpush1.msra.mxu0 0.0
        %1983 = vmatprep.subr.mxu0 0.0
        %1984 = vmatpush1.msra.mxu0 0.0
        %1985 = vmatprep.subr.mxu0 0.0
        %1986 = vmatpush1.msra.mxu0 0.0
        %1987 = vmatprep.subr.mxu0 0.0
        %1988 = vmatpush1.msra.mxu0 0.0
        %1989 = vmatprep.subr.mxu0 0.0
        %1990 = vmatpush1.msra.mxu0 0.0
        %1991 = vmatprep.mubr.f32.mxu0 0.0
        %1992 = vmatmul.mubr.f32.gmra.mrb[0].mxu0 %v1922
        %v1993 = vpop.f32.mrb[0].mxu0
        %v1994 = vadd.f32 0.0, %v1993
        %v1995 = vpop.f32.mrb[0].mxu0
        %1996 = vmatprep.mubr.f32.mxu0 0.0
        %1997 = vmatmul.mubr.f32.gmra.mrb[0].mxu0 %v1925
        %v1998 = vpop.f32.mrb[0].mxu0
        %v1999 = vadd.f32 0.0, %v1998
        %v2000 = vpop.f32.mrb[0].mxu0
        %2001 = vdwg.mxu0
        %v2003 = vsel %vm1565, %v1651, 0
        %v2006 = vsel %vm1565, %v1652, 0
        %2008 = vmatprep.subr.mxu0 0.0
        %2009 = vmatpush1.msra.mxu0 %v1913
        %2010 = vmatprep.subr.mxu0 0.0
        %2011 = vmatpush1.msra.mxu0 %v1914
        %2012 = vmatprep.subr.mxu0 0.0
        %2013 = vmatpush1.msra.mxu0 %v1915
        %2014 = vmatprep.subr.mxu0 0.0
        %2015 = vmatpush1.msra.mxu0 %v1916
        %2016 = vmatprep.subr.mxu0 0.0
        %2017 = vmatpush1.msra.mxu0 0.0
        %2018 = vmatprep.subr.mxu0 0.0
        %2019 = vmatpush1.msra.mxu0 0.0
        %2020 = vmatprep.subr.mxu0 0.0
        %2021 = vmatpush1.msra.mxu0 0.0
        %2022 = vmatprep.subr.mxu0 0.0
        %2023 = vmatpush1.msra.mxu0 0.0
        %2024 = vmatprep.subr.mxu0 0.0
        %2025 = vmatpush1.msra.mxu0 0.0
        %2026 = vmatprep.subr.mxu0 0.0
        %2027 = vmatpush1.msra.mxu0 0.0
        %2028 = vmatprep.subr.mxu0 0.0
        %2029 = vmatpush1.msra.mxu0 0.0
        %2030 = vmatprep.subr.mxu0 0.0
        %2031 = vmatpush1.msra.mxu0 0.0
        %2032 = vmatprep.subr.mxu0 0.0
        %2033 = vmatpush1.msra.mxu0 0.0
        %2034 = vmatprep.subr.mxu0 0.0
        %2035 = vmatpush1.msra.mxu0 0.0
        %2036 = vmatprep.subr.mxu0 0.0
        %2037 = vmatpush1.msra.mxu0 0.0
        %2038 = vmatprep.subr.mxu0 0.0
        %2039 = vmatpush1.msra.mxu0 0.0
        %2040 = vmatprep.subr.mxu0 0.0
        %2041 = vmatpush1.msra.mxu0 0.0
        %2042 = vmatprep.subr.mxu0 0.0
        %2043 = vmatpush1.msra.mxu0 0.0
        %2044 = vmatprep.subr.mxu0 0.0
        %2045 = vmatpush1.msra.mxu0 0.0
        %2046 = vmatprep.subr.mxu0 0.0
        %2047 = vmatpush1.msra.mxu0 0.0
        %2048 = vmatprep.subr.mxu0 0.0
        %2049 = vmatpush1.msra.mxu0 0.0
        %2050 = vmatprep.subr.mxu0 0.0
        %2051 = vmatpush1.msra.mxu0 0.0
        %2052 = vmatprep.subr.mxu0 0.0
        %2053 = vmatpush1.msra.mxu0 0.0
        %2054 = vmatprep.subr.mxu0 0.0
        %2055 = vmatpush1.msra.mxu0 0.0
        %2056 = vmatprep.subr.mxu0 0.0
        %2057 = vmatpush1.msra.mxu0 0.0
        %2058 = vmatprep.subr.mxu0 0.0
        %2059 = vmatpush1.msra.mxu0 0.0
        %2060 = vmatprep.subr.mxu0 0.0
        %2061 = vmatpush1.msra.mxu0 0.0
        %2062 = vmatprep.subr.mxu0 0.0
        %2063 = vmatpush1.msra.mxu0 0.0
        %2064 = vmatprep.subr.mxu0 0.0
        %2065 = vmatpush1.msra.mxu0 0.0
        %2066 = vmatprep.subr.mxu0 0.0
        %2067 = vmatpush1.msra.mxu0 0.0
        %2068 = vmatprep.subr.mxu0 0.0
        %2069 = vmatpush1.msra.mxu0 0.0
        %2070 = vmatprep.subr.mxu0 0.0
        %2071 = vmatpush1.msra.mxu0 0.0
        %2072 = vmatprep.mubr.f32.mxu0 0.0
        %2073 = vmatmul.mubr.f32.gmra.mrb[0].mxu0 %v2003
        %v2074 = vpop.f32.mrb[0].mxu0
        %v2075 = vadd.f32 %v1994, %v2074
        %v2076 = vpop.f32.mrb[0].mxu0
        %2077 = vmatprep.mubr.f32.mxu0 0.0
        %2078 = vmatmul.mubr.f32.gmra.mrb[0].mxu0 %v2006
        %v2079 = vpop.f32.mrb[0].mxu0
        %v2080 = vadd.f32 %v1999, %v2079
        %v2081 = vpop.f32.mrb[0].mxu0
        %2082 = vdwg.mxu0
        %v2083 = vld [vmem:[#allocation17] sm:$0x1]
        %v2085 = vlaneseq
        %v2086 = vshrl.u32 %v2085, 7
        %v2087 = vsub.s32 0, %v2086
        %v2088 = vrot.slane %v2083, %v2087
        %v2090 = vadd.f32 %v2075, %v2088
        %v2091 = vadd.f32 %v2080, %v2088
        %vm2092 = vcmp.gt.f32.partialorder %v2090, 0.0
        %vm2093 = vcmp.gt.f32.partialorder %v2091, 0.0
        %v2094 = vmul.f32 %v2090, 0.01
        %v2095 = vmul.f32 %v2091, 0.01
        %v2096 = vsel %vm2092, %v2090, %v2094
        %v2097 = vsel %vm2093, %v2091, %v2095
        %v2098 = vld [vmem:[%s33] sm:$0xff]
        %v2099 = vld [vmem:[%s33 + $0x8] sm:$0xff]
        %v2100 = vld [vmem:[%s33 + $0x10] sm:$0xff]
        %v2101 = vld [vmem:[%s33 + $0x18] sm:$0xff]
        %v2102 = vld [vmem:[#allocation18] sm:$0x1]
        %v2104 = vlaneseq
        %v2105 = vshrl.u32 %v2104, 7
        %v2106 = vsub.s32 0, %v2105
        %v2107 = vrot.slane %v2102, %v2106
        %v2110 = vsel %vm1565, %v2096, 0
        %v2113 = vsel %vm1565, %v2097, 0
        %2115 = vmatprep.subr.mxu0 0.0
        %2116 = vmatpush1.msra.mxu0 %v2098
        %2117 = vmatprep.subr.mxu0 0.0
        %2118 = vmatpush1.msra.mxu0 %v2099
        %2119 = vmatprep.subr.mxu0 0.0
        %2120 = vmatpush1.msra.mxu0 %v2100
        %2121 = vmatprep.subr.mxu0 0.0
        %2122 = vmatpush1.msra.mxu0 %v2101
        %2123 = vmatprep.subr.mxu0 0.0
        %2124 = vmatpush1.msra.mxu0 0.0
        %2125 = vmatprep.subr.mxu0 0.0
        %2126 = vmatpush1.msra.mxu0 0.0
        %2127 = vmatprep.subr.mxu0 0.0
        %2128 = vmatpush1.msra.mxu0 0.0
        %2129 = vmatprep.subr.mxu0 0.0
        %2130 = vmatpush1.msra.mxu0 0.0
        %2131 = vmatprep.subr.mxu0 0.0
        %2132 = vmatpush1.msra.mxu0 0.0
        %2133 = vmatprep.subr.mxu0 0.0
        %2134 = vmatpush1.msra.mxu0 0.0
        %2135 = vmatprep.subr.mxu0 0.0
        %2136 = vmatpush1.msra.mxu0 0.0
        %2137 = vmatprep.subr.mxu0 0.0
        %2138 = vmatpush1.msra.mxu0 0.0
        %2139 = vmatprep.subr.mxu0 0.0
        %2140 = vmatpush1.msra.mxu0 0.0
        %2141 = vmatprep.subr.mxu0 0.0
        %2142 = vmatpush1.msra.mxu0 0.0
        %2143 = vmatprep.subr.mxu0 0.0
        %2144 = vmatpush1.msra.mxu0 0.0
        %2145 = vmatprep.subr.mxu0 0.0
        %2146 = vmatpush1.msra.mxu0 0.0
        %2147 = vmatprep.subr.mxu0 0.0
        %2148 = vmatpush1.msra.mxu0 0.0
        %2149 = vmatprep.subr.mxu0 0.0
        %2150 = vmatpush1.msra.mxu0 0.0
        %2151 = vmatprep.subr.mxu0 0.0
        %2152 = vmatpush1.msra.mxu0 0.0
        %2153 = vmatprep.subr.mxu0 0.0
        %2154 = vmatpush1.msra.mxu0 0.0
        %2155 = vmatprep.subr.mxu0 0.0
        %2156 = vmatpush1.msra.mxu0 0.0
        %2157 = vmatprep.subr.mxu0 0.0
        %2158 = vmatpush1.msra.mxu0 0.0
        %2159 = vmatprep.subr.mxu0 0.0
        %2160 = vmatpush1.msra.mxu0 0.0
        %2161 = vmatprep.subr.mxu0 0.0
        %2162 = vmatpush1.msra.mxu0 0.0
        %2163 = vmatprep.subr.mxu0 0.0
        %2164 = vmatpush1.msra.mxu0 0.0
        %2165 = vmatprep.subr.mxu0 0.0
        %2166 = vmatpush1.msra.mxu0 0.0
        %2167 = vmatprep.subr.mxu0 0.0
        %2168 = vmatpush1.msra.mxu0 0.0
        %2169 = vmatprep.subr.mxu0 0.0
        %2170 = vmatpush1.msra.mxu0 0.0
        %2171 = vmatprep.subr.mxu0 0.0
        %2172 = vmatpush1.msra.mxu0 0.0
        %2173 = vmatprep.subr.mxu0 0.0
        %2174 = vmatpush1.msra.mxu0 0.0
        %2175 = vmatprep.subr.mxu0 0.0
        %2176 = vmatpush1.msra.mxu0 0.0
        %2177 = vmatprep.subr.mxu0 0.0
        %2178 = vmatpush1.msra.mxu0 0.0
        %2179 = vmatprep.mubr.f32.mxu0 0.0
        %2180 = vmatmul.mubr.f32.gmra.mrb[0].mxu0 %v2110
        %v2181 = vpop.f32.mrb[0].mxu0
        %v2182 = vadd.f32 %v2107, %v2181
        %v2183 = vpop.f32.mrb[0].mxu0
        %2184 = vmatprep.mubr.f32.mxu0 0.0
        %2185 = vmatmul.mubr.f32.gmra.mrb[0].mxu0 %v2113
        %v2186 = vpop.f32.mrb[0].mxu0
        %v2187 = vadd.f32 %v2107, %v2186
        %v2188 = vpop.f32.mrb[0].mxu0
        %2189 = vdwg.mxu0
        %vm2190 = vcmp.gt.f32.partialorder %v2182, 0.0
        %vm2191 = vcmp.gt.f32.partialorder %v2187, 0.0
        %v2192 = vmul.f32 %v2182, 0.01
        %v2193 = vmul.f32 %v2187, 0.01
        %v2194 = vsel %vm2190, %v2182, %v2192
        %v2195 = vsel %vm2191, %v2187, %v2193
        %vm2196 = vcmask 130048
        %v2198 = vsel %vm2196, %v1347, 0
        %v2201 = vsel %vm2196, %v1348, 0
        %2203 = vmatprep.subr.mxu0 0.0
        %2204 = vmatpush1.msra.mxu0 %v1345
        %2205 = vmatprep.subr.mxu0 0.0
        %2206 = vmatpush1.msra.mxu0 %v1346
        %2207 = vmatprep.subr.mxu0 0.0
        %2208 = vmatpush1.msra.mxu0 0.0
        %2209 = vmatprep.subr.mxu0 0.0
        %2210 = vmatpush1.msra.mxu0 0.0
        %2211 = vmatprep.subr.mxu0 0.0
        %2212 = vmatpush1.msra.mxu0 0.0
        %2213 = vmatprep.subr.mxu0 0.0
        %2214 = vmatpush1.msra.mxu0 0.0
        %2215 = vmatprep.subr.mxu0 0.0
        %2216 = vmatpush1.msra.mxu0 0.0
        %2217 = vmatprep.subr.mxu0 0.0
        %2218 = vmatpush1.msra.mxu0 0.0
        %2219 = vmatprep.subr.mxu0 0.0
        %2220 = vmatpush1.msra.mxu0 0.0
        %2221 = vmatprep.subr.mxu0 0.0
        %2222 = vmatpush1.msra.mxu0 0.0
        %2223 = vmatprep.subr.mxu0 0.0
        %2224 = vmatpush1.msra.mxu0 0.0
        %2225 = vmatprep.subr.mxu0 0.0
        %2226 = vmatpush1.msra.mxu0 0.0
        %2227 = vmatprep.subr.mxu0 0.0
        %2228 = vmatpush1.msra.mxu0 0.0
        %2229 = vmatprep.subr.mxu0 0.0
        %2230 = vmatpush1.msra.mxu0 0.0
        %2231 = vmatprep.subr.mxu0 0.0
        %2232 = vmatpush1.msra.mxu0 0.0
        %2233 = vmatprep.subr.mxu0 0.0
        %2234 = vmatpush1.msra.mxu0 0.0
        %2235 = vmatprep.subr.mxu0 0.0
        %2236 = vmatpush1.msra.mxu0 0.0
        %2237 = vmatprep.subr.mxu0 0.0
        %2238 = vmatpush1.msra.mxu0 0.0
        %2239 = vmatprep.subr.mxu0 0.0
        %2240 = vmatpush1.msra.mxu0 0.0
        %2241 = vmatprep.subr.mxu0 0.0
        %2242 = vmatpush1.msra.mxu0 0.0
        %2243 = vmatprep.subr.mxu0 0.0
        %2244 = vmatpush1.msra.mxu0 0.0
        %2245 = vmatprep.subr.mxu0 0.0
        %2246 = vmatpush1.msra.mxu0 0.0
        %2247 = vmatprep.subr.mxu0 0.0
        %2248 = vmatpush1.msra.mxu0 0.0
        %2249 = vmatprep.subr.mxu0 0.0
        %2250 = vmatpush1.msra.mxu0 0.0
        %2251 = vmatprep.subr.mxu0 0.0
        %2252 = vmatpush1.msra.mxu0 0.0
        %2253 = vmatprep.subr.mxu0 0.0
        %2254 = vmatpush1.msra.mxu0 0.0
        %2255 = vmatprep.subr.mxu0 0.0
        %2256 = vmatpush1.msra.mxu0 0.0
        %2257 = vmatprep.subr.mxu0 0.0
        %2258 = vmatpush1.msra.mxu0 0.0
        %2259 = vmatprep.subr.mxu0 0.0
        %2260 = vmatpush1.msra.mxu0 0.0
        %2261 = vmatprep.subr.mxu0 0.0
        %2262 = vmatpush1.msra.mxu0 0.0
        %2263 = vmatprep.subr.mxu0 0.0
        %2264 = vmatpush1.msra.mxu0 0.0
        %2265 = vmatprep.subr.mxu0 0.0
        %2266 = vmatpush1.msra.mxu0 0.0
        %2267 = vmatprep.mubr.f32.mxu0 0.0
        %2268 = vmatmul.mubr.f32.gmra.mrb[0].mxu0 %v2198
        %v2269 = vpop.f32.mrb[0].mxu0
        %v2270 = vadd.f32 0.0, %v2269
        %v2271 = vpop.f32.mrb[0].mxu0
        %2272 = vmatprep.mubr.f32.mxu0 0.0
        %2273 = vmatmul.mubr.f32.gmra.mrb[0].mxu0 %v2201
        %v2274 = vpop.f32.mrb[0].mxu0
        %v2275 = vadd.f32 0.0, %v2274
        %v2276 = vpop.f32.mrb[0].mxu0
        %2277 = vdwg.mxu0
        %v2278 = vld [vmem:[#allocation20] sm:$0x3]
        %v2280 = vsel %vm2196, %v1349, 0
        %v2283 = vsel %vm2196, %v1350, 0
        %2285 = vmatprep.subr.mxu0 0.0
        %2286 = vmatpush1.msra.mxu0 %v1345
        %2287 = vmatprep.subr.mxu0 0.0
        %2288 = vmatpush1.msra.mxu0 %v1346
        %2289 = vmatprep.subr.mxu0 0.0
        %2290 = vmatpush1.msra.mxu0 0.0
        %2291 = vmatprep.subr.mxu0 0.0
        %2292 = vmatpush1.msra.mxu0 0.0
        %2293 = vmatprep.subr.mxu0 0.0
        %2294 = vmatpush1.msra.mxu0 0.0
        %2295 = vmatprep.subr.mxu0 0.0
        %2296 = vmatpush1.msra.mxu0 0.0
        %2297 = vmatprep.subr.mxu0 0.0
        %2298 = vmatpush1.msra.mxu0 0.0
        %2299 = vmatprep.subr.mxu0 0.0
        %2300 = vmatpush1.msra.mxu0 0.0
        %2301 = vmatprep.subr.mxu0 0.0
        %2302 = vmatpush1.msra.mxu0 0.0
        %2303 = vmatprep.subr.mxu0 0.0
        %2304 = vmatpush1.msra.mxu0 0.0
        %2305 = vmatprep.subr.mxu0 0.0
        %2306 = vmatpush1.msra.mxu0 0.0
        %2307 = vmatprep.subr.mxu0 0.0
        %2308 = vmatpush1.msra.mxu0 0.0
        %2309 = vmatprep.subr.mxu0 0.0
        %2310 = vmatpush1.msra.mxu0 0.0
        %2311 = vmatprep.subr.mxu0 0.0
        %2312 = vmatpush1.msra.mxu0 0.0
        %2313 = vmatprep.subr.mxu0 0.0
        %2314 = vmatpush1.msra.mxu0 0.0
        %2315 = vmatprep.subr.mxu0 0.0
        %2316 = vmatpush1.msra.mxu0 0.0
        %2317 = vmatprep.subr.mxu0 0.0
        %2318 = vmatpush1.msra.mxu0 0.0
        %2319 = vmatprep.subr.mxu0 0.0
        %2320 = vmatpush1.msra.mxu0 0.0
        %2321 = vmatprep.subr.mxu0 0.0
        %2322 = vmatpush1.msra.mxu0 0.0
        %2323 = vmatprep.subr.mxu0 0.0
        %2324 = vmatpush1.msra.mxu0 0.0
        %2325 = vmatprep.subr.mxu0 0.0
        %2326 = vmatpush1.msra.mxu0 0.0
        %2327 = vmatprep.subr.mxu0 0.0
        %2328 = vmatpush1.msra.mxu0 0.0
        %2329 = vmatprep.subr.mxu0 0.0
        %2330 = vmatpush1.msra.mxu0 0.0
        %2331 = vmatprep.subr.mxu0 0.0
        %2332 = vmatpush1.msra.mxu0 0.0
        %2333 = vmatprep.subr.mxu0 0.0
        %2334 = vmatpush1.msra.mxu0 0.0
        %2335 = vmatprep.subr.mxu0 0.0
        %2336 = vmatpush1.msra.mxu0 0.0
        %2337 = vmatprep.subr.mxu0 0.0
        %2338 = vmatpush1.msra.mxu0 0.0
        %2339 = vmatprep.subr.mxu0 0.0
        %2340 = vmatpush1.msra.mxu0 0.0
        %2341 = vmatprep.subr.mxu0 0.0
        %2342 = vmatpush1.msra.mxu0 0.0
        %2343 = vmatprep.subr.mxu0 0.0
        %2344 = vmatpush1.msra.mxu0 0.0
        %2345 = vmatprep.subr.mxu0 0.0
        %2346 = vmatpush1.msra.mxu0 0.0
        %2347 = vmatprep.subr.mxu0 0.0
        %2348 = vmatpush1.msra.mxu0 0.0
        %2349 = vmatprep.mubr.f32.mxu0 0.0
        %2350 = vmatmul.mubr.f32.gmra.mrb[0].mxu0 %v2280
        %v2351 = vpop.f32.mrb[0].mxu0
        %v2352 = vadd.f32 0.0, %v2351
        %v2353 = vpop.f32.mrb[0].mxu0
        %2354 = vmatprep.mubr.f32.mxu0 0.0
        %2355 = vmatmul.mubr.f32.gmra.mrb[0].mxu0 %v2283
        %v2356 = vpop.f32.mrb[0].mxu0
        %v2357 = vadd.f32 0.0, %v2356
        %v2358 = vpop.f32.mrb[0].mxu0
        %2359 = vdwg.mxu0
        %v2360 = vld [vmem:[#allocation21] sm:$0x3]
        %vm2361 = vcmask 15360
        %v2363 = vsel %vm2361, %v2352, 0
        %v2366 = vsel %vm2361, %v2357, 0
        %vm2368 = vcmask 1041408
        %v2370 = vsel %vm2368, %v2360, 0
        %2372 = vmatprep.subr.mxu0 0.0
        %2373 = vmatpush1.msra.mxu0 %v2370
        %2374 = vmatprep.subr.mxu0 0.0
        %2375 = vmatpush1.msra.mxu0 0.0
        %2376 = vmatprep.subr.mxu0 0.0
        %2377 = vmatpush1.msra.mxu0 0.0
        %2378 = vmatprep.subr.mxu0 0.0
        %2379 = vmatpush1.msra.mxu0 0.0
        %2380 = vmatprep.subr.mxu0 0.0
        %2381 = vmatpush1.msra.mxu0 0.0
        %2382 = vmatprep.subr.mxu0 0.0
        %2383 = vmatpush1.msra.mxu0 0.0
        %2384 = vmatprep.subr.mxu0 0.0
        %2385 = vmatpush1.msra.mxu0 0.0
        %2386 = vmatprep.subr.mxu0 0.0
        %2387 = vmatpush1.msra.mxu0 0.0
        %2388 = vmatprep.subr.mxu0 0.0
        %2389 = vmatpush1.msra.mxu0 0.0
        %2390 = vmatprep.subr.mxu0 0.0
        %2391 = vmatpush1.msra.mxu0 0.0
        %2392 = vmatprep.subr.mxu0 0.0
        %2393 = vmatpush1.msra.mxu0 0.0
        %2394 = vmatprep.subr.mxu0 0.0
        %2395 = vmatpush1.msra.mxu0 0.0
        %2396 = vmatprep.subr.mxu0 0.0
        %2397 = vmatpush1.msra.mxu0 0.0
        %2398 = vmatprep.subr.mxu0 0.0
        %2399 = vmatpush1.msra.mxu0 0.0
        %2400 = vmatprep.subr.mxu0 0.0
        %2401 = vmatpush1.msra.mxu0 0.0
        %2402 = vmatprep.subr.mxu0 0.0
        %2403 = vmatpush1.msra.mxu0 0.0
        %2404 = vmatprep.subr.mxu0 0.0
        %2405 = vmatpush1.msra.mxu0 0.0
        %2406 = vmatprep.subr.mxu0 0.0
        %2407 = vmatpush1.msra.mxu0 0.0
        %2408 = vmatprep.subr.mxu0 0.0
        %2409 = vmatpush1.msra.mxu0 0.0
        %2410 = vmatprep.subr.mxu0 0.0
        %2411 = vmatpush1.msra.mxu0 0.0
        %2412 = vmatprep.subr.mxu0 0.0
        %2413 = vmatpush1.msra.mxu0 0.0
        %2414 = vmatprep.subr.mxu0 0.0
        %2415 = vmatpush1.msra.mxu0 0.0
        %2416 = vmatprep.subr.mxu0 0.0
        %2417 = vmatpush1.msra.mxu0 0.0
        %2418 = vmatprep.subr.mxu0 0.0
        %2419 = vmatpush1.msra.mxu0 0.0
        %2420 = vmatprep.subr.mxu0 0.0
        %2421 = vmatpush1.msra.mxu0 0.0
        %2422 = vmatprep.subr.mxu0 0.0
        %2423 = vmatpush1.msra.mxu0 0.0
        %2424 = vmatprep.subr.mxu0 0.0
        %2425 = vmatpush1.msra.mxu0 0.0
        %2426 = vmatprep.subr.mxu0 0.0
        %2427 = vmatpush1.msra.mxu0 0.0
        %2428 = vmatprep.subr.mxu0 0.0
        %2429 = vmatpush1.msra.mxu0 0.0
        %2430 = vmatprep.subr.mxu0 0.0
        %2431 = vmatpush1.msra.mxu0 0.0
        %2432 = vmatprep.subr.mxu0 0.0
        %2433 = vmatpush1.msra.mxu0 0.0
        %2434 = vmatprep.subr.mxu0 0.0
        %2435 = vmatpush1.msra.mxu0 0.0
        %2436 = vmatprep.mubr.f32.mxu0 0.0
        %2437 = vmatmul.mubr.f32.gmra.mrb[0].mxu0 %v2363
        %v2438 = vpop.f32.mrb[0].mxu0
        %v2439 = vadd.f32 0.0, %v2438
        %v2440 = vpop.f32.mrb[0].mxu0
        %2441 = vmatprep.mubr.f32.mxu0 0.0
        %2442 = vmatmul.mubr.f32.gmra.mrb[0].mxu0 %v2366
        %v2443 = vpop.f32.mrb[0].mxu0
        %v2444 = vadd.f32 0.0, %v2443
        %v2445 = vpop.f32.mrb[0].mxu0
        %2446 = vdwg.mxu0
        %v2448 = vsel %vm2361, %v2270, 0
        %v2451 = vsel %vm2361, %v2275, 0
        %v2454 = vsel %vm2368, %v2278, 0
        %2456 = vmatprep.subr.mxu0 0.0
        %2457 = vmatpush1.msra.mxu0 %v2454
        %2458 = vmatprep.subr.mxu0 0.0
        %2459 = vmatpush1.msra.mxu0 0.0
        %2460 = vmatprep.subr.mxu0 0.0
        %2461 = vmatpush1.msra.mxu0 0.0
        %2462 = vmatprep.subr.mxu0 0.0
        %2463 = vmatpush1.msra.mxu0 0.0
        %2464 = vmatprep.subr.mxu0 0.0
        %2465 = vmatpush1.msra.mxu0 0.0
        %2466 = vmatprep.subr.mxu0 0.0
        %2467 = vmatpush1.msra.mxu0 0.0
        %2468 = vmatprep.subr.mxu0 0.0
        %2469 = vmatpush1.msra.mxu0 0.0
        %2470 = vmatprep.subr.mxu0 0.0
        %2471 = vmatpush1.msra.mxu0 0.0
        %2472 = vmatprep.subr.mxu0 0.0
        %2473 = vmatpush1.msra.mxu0 0.0
        %2474 = vmatprep.subr.mxu0 0.0
        %2475 = vmatpush1.msra.mxu0 0.0
        %2476 = vmatprep.subr.mxu0 0.0
        %2477 = vmatpush1.msra.mxu0 0.0
        %2478 = vmatprep.subr.mxu0 0.0
        %2479 = vmatpush1.msra.mxu0 0.0
        %2480 = vmatprep.subr.mxu0 0.0
        %2481 = vmatpush1.msra.mxu0 0.0
        %2482 = vmatprep.subr.mxu0 0.0
        %2483 = vmatpush1.msra.mxu0 0.0
        %2484 = vmatprep.subr.mxu0 0.0
        %2485 = vmatpush1.msra.mxu0 0.0
        %2486 = vmatprep.subr.mxu0 0.0
        %2487 = vmatpush1.msra.mxu0 0.0
        %2488 = vmatprep.subr.mxu0 0.0
        %2489 = vmatpush1.msra.mxu0 0.0
        %2490 = vmatprep.subr.mxu0 0.0
        %2491 = vmatpush1.msra.mxu0 0.0
        %2492 = vmatprep.subr.mxu0 0.0
        %2493 = vmatpush1.msra.mxu0 0.0
        %2494 = vmatprep.subr.mxu0 0.0
        %2495 = vmatpush1.msra.mxu0 0.0
        %2496 = vmatprep.subr.mxu0 0.0
        %2497 = vmatpush1.msra.mxu0 0.0
        %2498 = vmatprep.subr.mxu0 0.0
        %2499 = vmatpush1.msra.mxu0 0.0
        %2500 = vmatprep.subr.mxu0 0.0
        %2501 = vmatpush1.msra.mxu0 0.0
        %2502 = vmatprep.subr.mxu0 0.0
        %2503 = vmatpush1.msra.mxu0 0.0
        %2504 = vmatprep.subr.mxu0 0.0
        %2505 = vmatpush1.msra.mxu0 0.0
        %2506 = vmatprep.subr.mxu0 0.0
        %2507 = vmatpush1.msra.mxu0 0.0
        %2508 = vmatprep.subr.mxu0 0.0
        %2509 = vmatpush1.msra.mxu0 0.0
        %2510 = vmatprep.subr.mxu0 0.0
        %2511 = vmatpush1.msra.mxu0 0.0
        %2512 = vmatprep.subr.mxu0 0.0
        %2513 = vmatpush1.msra.mxu0 0.0
        %2514 = vmatprep.subr.mxu0 0.0
        %2515 = vmatpush1.msra.mxu0 0.0
        %2516 = vmatprep.subr.mxu0 0.0
        %2517 = vmatpush1.msra.mxu0 0.0
        %2518 = vmatprep.subr.mxu0 0.0
        %2519 = vmatpush1.msra.mxu0 0.0
        %2520 = vmatprep.mubr.f32.mxu0 0.0
        %2521 = vmatmul.mubr.f32.gmra.mrb[0].mxu0 %v2448
        %v2522 = vpop.f32.mrb[0].mxu0
        %v2523 = vadd.f32 %v2439, %v2522
        %v2524 = vpop.f32.mrb[0].mxu0
        %2525 = vmatprep.mubr.f32.mxu0 0.0
        %2526 = vmatmul.mubr.f32.gmra.mrb[0].mxu0 %v2451
        %v2527 = vpop.f32.mrb[0].mxu0
        %v2528 = vadd.f32 %v2444, %v2527
        %v2529 = vpop.f32.mrb[0].mxu0
        %2530 = vdwg.mxu0
        %2531 = vmatprep.subr.mxu0 0.0
        %2532 = vmatpush1.msra.mxu0 %v2194
        %2533 = vmatprep.subr.mxu0 0.0
        %2534 = vmatpush1.msra.mxu0 %v2195
        %2535 = vmatprep.subr.mxu0 0.0
        %2536 = vmatpush1.msra.mxu0 0.0
        %2537 = vmatprep.subr.mxu0 0.0
        %2538 = vmatpush1.msra.mxu0 0.0
        %2539 = vmatprep.subr.mxu0 0.0
        %2540 = vmatpush1.msra.mxu0 0.0
        %2541 = vmatprep.subr.mxu0 0.0
        %2542 = vmatpush1.msra.mxu0 0.0
        %2543 = vmatprep.subr.mxu0 0.0
        %2544 = vmatpush1.msra.mxu0 0.0
        %2545 = vmatprep.subr.mxu0 0.0
        %2546 = vmatpush1.msra.mxu0 0.0
        %2547 = vmatprep.subr.mxu0 0.0
        %2548 = vmatpush1.msra.mxu0 0.0
        %2549 = vmatprep.subr.mxu0 0.0
        %2550 = vmatpush1.msra.mxu0 0.0
        %2551 = vmatprep.subr.mxu0 0.0
        %2552 = vmatpush1.msra.mxu0 0.0
        %2553 = vmatprep.subr.mxu0 0.0
        %2554 = vmatpush1.msra.mxu0 0.0
        %2555 = vmatprep.subr.mxu0 0.0
        %2556 = vmatpush1.msra.mxu0 0.0
        %2557 = vmatprep.subr.mxu0 0.0
        %2558 = vmatpush1.msra.mxu0 0.0
        %2559 = vmatprep.subr.mxu0 0.0
        %2560 = vmatpush1.msra.mxu0 0.0
        %2561 = vmatprep.subr.mxu0 0.0
        %2562 = vmatpush1.msra.mxu0 0.0
        %2563 = vmatprep.subr.mxu0 0.0
        %2564 = vmatpush1.msra.mxu0 0.0
        %2565 = vmatprep.subr.mxu0 0.0
        %2566 = vmatpush1.msra.mxu0 0.0
        %2567 = vmatprep.subr.mxu0 0.0
        %2568 = vmatpush1.msra.mxu0 0.0
        %2569 = vmatprep.subr.mxu0 0.0
        %2570 = vmatpush1.msra.mxu0 0.0
        %2571 = vmatprep.subr.mxu0 0.0
        %2572 = vmatpush1.msra.mxu0 0.0
        %2573 = vmatprep.subr.mxu0 0.0
        %2574 = vmatpush1.msra.mxu0 0.0
        %2575 = vmatprep.subr.mxu0 0.0
        %2576 = vmatpush1.msra.mxu0 0.0
        %2577 = vmatprep.subr.mxu0 0.0
        %2578 = vmatpush1.msra.mxu0 0.0
        %2579 = vmatprep.subr.mxu0 0.0
        %2580 = vmatpush1.msra.mxu0 0.0
        %2581 = vmatprep.subr.mxu0 0.0
        %2582 = vmatpush1.msra.mxu0 0.0
        %2583 = vmatprep.subr.mxu0 0.0
        %2584 = vmatpush1.msra.mxu0 0.0
        %2585 = vmatprep.subr.mxu0 0.0
        %2586 = vmatpush1.msra.mxu0 0.0
        %2587 = vmatprep.subr.mxu0 0.0
        %2588 = vmatpush1.msra.mxu0 0.0
        %2589 = vmatprep.subr.mxu0 0.0
        %2590 = vmatpush1.msra.mxu0 0.0
        %2591 = vmatprep.subr.mxu0 0.0
        %2592 = vmatpush1.msra.mxu0 0.0
        %2593 = vmatprep.subr.mxu0 0.0
        %2594 = vmatpush1.msra.mxu0 0.0
        %2595 = vmatprep.mubr.f32.mxu0 0.0
        %2596 = vmatmul.mubr.f32.gmra.mrb[0].mxu0 %v2198
        %v2597 = vpop.f32.mrb[0].mxu0
        %v2598 = vadd.f32 0.0, %v2597
        %v2599 = vpop.f32.mrb[0].mxu0
        %2600 = vmatprep.mubr.f32.mxu0 0.0
        %2601 = vmatmul.mubr.f32.gmra.mrb[0].mxu0 %v2201
        %v2602 = vpop.f32.mrb[0].mxu0
        %v2603 = vadd.f32 0.0, %v2602
        %v2604 = vpop.f32.mrb[0].mxu0
        %2605 = vdwg.mxu0
        %v2606 = vld [vmem:[%s37] sm:$0xff]
        %v2607 = vld [vmem:[%s37 + $0x8] sm:$0xff]
        %v2608 = vld [vmem:[%s37 + $0x10] sm:$0xff]
        %v2609 = vld [vmem:[%s37 + $0x18] sm:$0xff]
        %2610 = vmatprep.subr.mxu0 0.0
        %2611 = vmatpush1.msra.mxu0 %v2194
        %2612 = vmatprep.subr.mxu0 0.0
        %2613 = vmatpush1.msra.mxu0 %v2195
        %2614 = vmatprep.subr.mxu0 0.0
        %2615 = vmatpush1.msra.mxu0 0.0
        %2616 = vmatprep.subr.mxu0 0.0
        %2617 = vmatpush1.msra.mxu0 0.0
        %2618 = vmatprep.subr.mxu0 0.0
        %2619 = vmatpush1.msra.mxu0 0.0
        %2620 = vmatprep.subr.mxu0 0.0
        %2621 = vmatpush1.msra.mxu0 0.0
        %2622 = vmatprep.subr.mxu0 0.0
        %2623 = vmatpush1.msra.mxu0 0.0
        %2624 = vmatprep.subr.mxu0 0.0
        %2625 = vmatpush1.msra.mxu0 0.0
        %2626 = vmatprep.subr.mxu0 0.0
        %2627 = vmatpush1.msra.mxu0 0.0
        %2628 = vmatprep.subr.mxu0 0.0
        %2629 = vmatpush1.msra.mxu0 0.0
        %2630 = vmatprep.subr.mxu0 0.0
        %2631 = vmatpush1.msra.mxu0 0.0
        %2632 = vmatprep.subr.mxu0 0.0
        %2633 = vmatpush1.msra.mxu0 0.0
        %2634 = vmatprep.subr.mxu0 0.0
        %2635 = vmatpush1.msra.mxu0 0.0
        %2636 = vmatprep.subr.mxu0 0.0
        %2637 = vmatpush1.msra.mxu0 0.0
        %2638 = vmatprep.subr.mxu0 0.0
        %2639 = vmatpush1.msra.mxu0 0.0
        %2640 = vmatprep.subr.mxu0 0.0
        %2641 = vmatpush1.msra.mxu0 0.0
        %2642 = vmatprep.subr.mxu0 0.0
        %2643 = vmatpush1.msra.mxu0 0.0
        %2644 = vmatprep.subr.mxu0 0.0
        %2645 = vmatpush1.msra.mxu0 0.0
        %2646 = vmatprep.subr.mxu0 0.0
        %2647 = vmatpush1.msra.mxu0 0.0
        %2648 = vmatprep.subr.mxu0 0.0
        %2649 = vmatpush1.msra.mxu0 0.0
        %2650 = vmatprep.subr.mxu0 0.0
        %2651 = vmatpush1.msra.mxu0 0.0
        %2652 = vmatprep.subr.mxu0 0.0
        %2653 = vmatpush1.msra.mxu0 0.0
        %2654 = vmatprep.subr.mxu0 0.0
        %2655 = vmatpush1.msra.mxu0 0.0
        %2656 = vmatprep.subr.mxu0 0.0
        %2657 = vmatpush1.msra.mxu0 0.0
        %2658 = vmatprep.subr.mxu0 0.0
        %2659 = vmatpush1.msra.mxu0 0.0
        %2660 = vmatprep.subr.mxu0 0.0
        %2661 = vmatpush1.msra.mxu0 0.0
        %2662 = vmatprep.subr.mxu0 0.0
        %2663 = vmatpush1.msra.mxu0 0.0
        %2664 = vmatprep.subr.mxu0 0.0
        %2665 = vmatpush1.msra.mxu0 0.0
        %2666 = vmatprep.subr.mxu0 0.0
        %2667 = vmatpush1.msra.mxu0 0.0
        %2668 = vmatprep.subr.mxu0 0.0
        %2669 = vmatpush1.msra.mxu0 0.0
        %2670 = vmatprep.subr.mxu0 0.0
        %2671 = vmatpush1.msra.mxu0 0.0
        %2672 = vmatprep.subr.mxu0 0.0
        %2673 = vmatpush1.msra.mxu0 0.0
        %2674 = vmatprep.mubr.f32.mxu0 0.0
        %2675 = vmatmul.mubr.f32.gmra.mrb[0].mxu0 %v2280
        %v2676 = vpop.f32.mrb[0].mxu0
        %v2677 = vadd.f32 0.0, %v2676
        %v2678 = vpop.f32.mrb[0].mxu0
        %2679 = vmatprep.mubr.f32.mxu0 0.0
        %2680 = vmatmul.mubr.f32.gmra.mrb[0].mxu0 %v2283
        %v2681 = vpop.f32.mrb[0].mxu0
        %v2682 = vadd.f32 0.0, %v2681
        %v2683 = vpop.f32.mrb[0].mxu0
        %2684 = vdwg.mxu0
        %v2685 = vld [vmem:[%s39] sm:$0xff]
        %v2686 = vld [vmem:[%s39 + $0x8] sm:$0xff]
        %v2687 = vld [vmem:[%s39 + $0x10] sm:$0xff]
        %v2688 = vld [vmem:[%s39 + $0x18] sm:$0xff]
        %v2690 = vsel %vm1565, %v2677, 0
        %v2693 = vsel %vm1565, %v2682, 0
        %2695 = vmatprep.subr.mxu0 0.0
        %2696 = vmatpush1.msra.mxu0 %v2685
        %2697 = vmatprep.subr.mxu0 0.0
        %2698 = vmatpush1.msra.mxu0 %v2686
        %2699 = vmatprep.subr.mxu0 0.0
        %2700 = vmatpush1.msra.mxu0 %v2687
        %2701 = vmatprep.subr.mxu0 0.0
        %2702 = vmatpush1.msra.mxu0 %v2688
        %2703 = vmatprep.subr.mxu0 0.0
        %2704 = vmatpush1.msra.mxu0 0.0
        %2705 = vmatprep.subr.mxu0 0.0
        %2706 = vmatpush1.msra.mxu0 0.0
        %2707 = vmatprep.subr.mxu0 0.0
        %2708 = vmatpush1.msra.mxu0 0.0
        %2709 = vmatprep.subr.mxu0 0.0
        %2710 = vmatpush1.msra.mxu0 0.0
        %2711 = vmatprep.subr.mxu0 0.0
        %2712 = vmatpush1.msra.mxu0 0.0
        %2713 = vmatprep.subr.mxu0 0.0
        %2714 = vmatpush1.msra.mxu0 0.0
        %2715 = vmatprep.subr.mxu0 0.0
        %2716 = vmatpush1.msra.mxu0 0.0
        %2717 = vmatprep.subr.mxu0 0.0
        %2718 = vmatpush1.msra.mxu0 0.0
        %2719 = vmatprep.subr.mxu0 0.0
        %2720 = vmatpush1.msra.mxu0 0.0
        %2721 = vmatprep.subr.mxu0 0.0
        %2722 = vmatpush1.msra.mxu0 0.0
        %2723 = vmatprep.subr.mxu0 0.0
        %2724 = vmatpush1.msra.mxu0 0.0
        %2725 = vmatprep.subr.mxu0 0.0
        %2726 = vmatpush1.msra.mxu0 0.0
        %2727 = vmatprep.subr.mxu0 0.0
        %2728 = vmatpush1.msra.mxu0 0.0
        %2729 = vmatprep.subr.mxu0 0.0
        %2730 = vmatpush1.msra.mxu0 0.0
        %2731 = vmatprep.subr.mxu0 0.0
        %2732 = vmatpush1.msra.mxu0 0.0
        %2733 = vmatprep.subr.mxu0 0.0
        %2734 = vmatpush1.msra.mxu0 0.0
        %2735 = vmatprep.subr.mxu0 0.0
        %2736 = vmatpush1.msra.mxu0 0.0
        %2737 = vmatprep.subr.mxu0 0.0
        %2738 = vmatpush1.msra.mxu0 0.0
        %2739 = vmatprep.subr.mxu0 0.0
        %2740 = vmatpush1.msra.mxu0 0.0
        %2741 = vmatprep.subr.mxu0 0.0
        %2742 = vmatpush1.msra.mxu0 0.0
        %2743 = vmatprep.subr.mxu0 0.0
        %2744 = vmatpush1.msra.mxu0 0.0
        %2745 = vmatprep.subr.mxu0 0.0
        %2746 = vmatpush1.msra.mxu0 0.0
        %2747 = vmatprep.subr.mxu0 0.0
        %2748 = vmatpush1.msra.mxu0 0.0
        %2749 = vmatprep.subr.mxu0 0.0
        %2750 = vmatpush1.msra.mxu0 0.0
        %2751 = vmatprep.subr.mxu0 0.0
        %2752 = vmatpush1.msra.mxu0 0.0
        %2753 = vmatprep.subr.mxu0 0.0
        %2754 = vmatpush1.msra.mxu0 0.0
        %2755 = vmatprep.subr.mxu0 0.0
        %2756 = vmatpush1.msra.mxu0 0.0
        %2757 = vmatprep.subr.mxu0 0.0
        %2758 = vmatpush1.msra.mxu0 0.0
        %2759 = vmatprep.mubr.f32.mxu0 0.0
        %2760 = vmatmul.mubr.f32.gmra.mrb[0].mxu0 %v2690
        %v2761 = vpop.f32.mrb[0].mxu0
        %v2762 = vadd.f32 0.0, %v2761
        %v2763 = vpop.f32.mrb[0].mxu0
        %2764 = vmatprep.mubr.f32.mxu0 0.0
        %2765 = vmatmul.mubr.f32.gmra.mrb[0].mxu0 %v2693
        %v2766 = vpop.f32.mrb[0].mxu0
        %v2767 = vadd.f32 0.0, %v2766
        %v2768 = vpop.f32.mrb[0].mxu0
        %2769 = vdwg.mxu0
        %v2771 = vsel %vm1565, %v2598, 0
        %v2774 = vsel %vm1565, %v2603, 0
        %2776 = vmatprep.subr.mxu0 0.0
        %2777 = vmatpush1.msra.mxu0 %v2606
        %2778 = vmatprep.subr.mxu0 0.0
        %2779 = vmatpush1.msra.mxu0 %v2607
        %2780 = vmatprep.subr.mxu0 0.0
        %2781 = vmatpush1.msra.mxu0 %v2608
        %2782 = vmatprep.subr.mxu0 0.0
        %2783 = vmatpush1.msra.mxu0 %v2609
        %2784 = vmatprep.subr.mxu0 0.0
        %2785 = vmatpush1.msra.mxu0 0.0
        %2786 = vmatprep.subr.mxu0 0.0
        %2787 = vmatpush1.msra.mxu0 0.0
        %2788 = vmatprep.subr.mxu0 0.0
        %2789 = vmatpush1.msra.mxu0 0.0
        %2790 = vmatprep.subr.mxu0 0.0
        %2791 = vmatpush1.msra.mxu0 0.0
        %2792 = vmatprep.subr.mxu0 0.0
        %2793 = vmatpush1.msra.mxu0 0.0
        %2794 = vmatprep.subr.mxu0 0.0
        %2795 = vmatpush1.msra.mxu0 0.0
        %2796 = vmatprep.subr.mxu0 0.0
        %2797 = vmatpush1.msra.mxu0 0.0
        %2798 = vmatprep.subr.mxu0 0.0
        %2799 = vmatpush1.msra.mxu0 0.0
        %2800 = vmatprep.subr.mxu0 0.0
        %2801 = vmatpush1.msra.mxu0 0.0
        %2802 = vmatprep.subr.mxu0 0.0
        %2803 = vmatpush1.msra.mxu0 0.0
        %2804 = vmatprep.subr.mxu0 0.0
        %2805 = vmatpush1.msra.mxu0 0.0
        %2806 = vmatprep.subr.mxu0 0.0
        %2807 = vmatpush1.msra.mxu0 0.0
        %2808 = vmatprep.subr.mxu0 0.0
        %2809 = vmatpush1.msra.mxu0 0.0
        %2810 = vmatprep.subr.mxu0 0.0
        %2811 = vmatpush1.msra.mxu0 0.0
        %2812 = vmatprep.subr.mxu0 0.0
        %2813 = vmatpush1.msra.mxu0 0.0
        %2814 = vmatprep.subr.mxu0 0.0
        %2815 = vmatpush1.msra.mxu0 0.0
        %2816 = vmatprep.subr.mxu0 0.0
        %2817 = vmatpush1.msra.mxu0 0.0
        %2818 = vmatprep.subr.mxu0 0.0
        %2819 = vmatpush1.msra.mxu0 0.0
        %2820 = vmatprep.subr.mxu0 0.0
        %2821 = vmatpush1.msra.mxu0 0.0
        %2822 = vmatprep.subr.mxu0 0.0
        %2823 = vmatpush1.msra.mxu0 0.0
        %2824 = vmatprep.subr.mxu0 0.0
        %2825 = vmatpush1.msra.mxu0 0.0
        %2826 = vmatprep.subr.mxu0 0.0
        %2827 = vmatpush1.msra.mxu0 0.0
        %2828 = vmatprep.subr.mxu0 0.0
        %2829 = vmatpush1.msra.mxu0 0.0
        %2830 = vmatprep.subr.mxu0 0.0
        %2831 = vmatpush1.msra.mxu0 0.0
        %2832 = vmatprep.subr.mxu0 0.0
        %2833 = vmatpush1.msra.mxu0 0.0
        %2834 = vmatprep.subr.mxu0 0.0
        %2835 = vmatpush1.msra.mxu0 0.0
        %2836 = vmatprep.subr.mxu0 0.0
        %2837 = vmatpush1.msra.mxu0 0.0
        %2838 = vmatprep.subr.mxu0 0.0
        %2839 = vmatpush1.msra.mxu0 0.0
        %2840 = vmatprep.mubr.f32.mxu0 0.0
        %2841 = vmatmul.mubr.f32.gmra.mrb[0].mxu0 %v2771
        %v2842 = vpop.f32.mrb[0].mxu0
        %v2843 = vadd.f32 %v2762, %v2842
        %v2844 = vpop.f32.mrb[0].mxu0
        %2845 = vmatprep.mubr.f32.mxu0 0.0
        %2846 = vmatmul.mubr.f32.gmra.mrb[0].mxu0 %v2774
        %v2847 = vpop.f32.mrb[0].mxu0
        %v2848 = vadd.f32 %v2767, %v2847
        %v2849 = vpop.f32.mrb[0].mxu0
        %2850 = vdwg.mxu0
        %v2851 = vadd.f32 %v2843, %v2523
        %v2852 = vadd.f32 %v2848, %v2528
        %v2853 = vld [vmem:[#allocation23] sm:$0x1]
        %v2855 = vlaneseq
        %v2856 = vshrl.u32 %v2855, 7
        %v2857 = vsub.s32 0, %v2856
        %v2858 = vrot.slane %v2853, %v2857
        %v2860 = vadd.f32 %v2851, %v2858
        %v2861 = vadd.f32 %v2852, %v2858
        %vm2862 = vcmp.gt.f32.partialorder %v2860, 0.0
        %vm2863 = vcmp.gt.f32.partialorder %v2861, 0.0
        %v2864 = vmul.f32 %v2860, 0.01
        %v2865 = vmul.f32 %v2861, 0.01
        %v2866 = vsel %vm2862, %v2860, %v2864
        %v2867 = vsel %vm2863, %v2861, %v2865
        %v2868 = vld [vmem:[%s47] sm:$0xff]
        %v2869 = vld [vmem:[%s47 + $0x8] sm:$0xff]
        %v2870 = vld [vmem:[%s47 + $0x10] sm:$0xff]
        %v2871 = vld [vmem:[%s47 + $0x18] sm:$0xff]
        %v2872 = vld [vmem:[#allocation24] sm:$0x1]
        %v2874 = vlaneseq
        %v2875 = vshrl.u32 %v2874, 7
        %v2876 = vsub.s32 0, %v2875
        %v2877 = vrot.slane %v2872, %v2876
        %v2880 = vsel %vm1565, %v2866, 0
        %v2883 = vsel %vm1565, %v2867, 0
        %2885 = vmatprep.subr.mxu0 0.0
        %2886 = vmatpush1.msra.mxu0 %v2868
        %2887 = vmatprep.subr.mxu0 0.0
        %2888 = vmatpush1.msra.mxu0 %v2869
        %2889 = vmatprep.subr.mxu0 0.0
        %2890 = vmatpush1.msra.mxu0 %v2870
        %2891 = vmatprep.subr.mxu0 0.0
        %2892 = vmatpush1.msra.mxu0 %v2871
        %2893 = vmatprep.subr.mxu0 0.0
        %2894 = vmatpush1.msra.mxu0 0.0
        %2895 = vmatprep.subr.mxu0 0.0
        %2896 = vmatpush1.msra.mxu0 0.0
        %2897 = vmatprep.subr.mxu0 0.0
        %2898 = vmatpush1.msra.mxu0 0.0
        %2899 = vmatprep.subr.mxu0 0.0
        %2900 = vmatpush1.msra.mxu0 0.0
        %2901 = vmatprep.subr.mxu0 0.0
        %2902 = vmatpush1.msra.mxu0 0.0
        %2903 = vmatprep.subr.mxu0 0.0
        %2904 = vmatpush1.msra.mxu0 0.0
        %2905 = vmatprep.subr.mxu0 0.0
        %2906 = vmatpush1.msra.mxu0 0.0
        %2907 = vmatprep.subr.mxu0 0.0
        %2908 = vmatpush1.msra.mxu0 0.0
        %2909 = vmatprep.subr.mxu0 0.0
        %2910 = vmatpush1.msra.mxu0 0.0
        %2911 = vmatprep.subr.mxu0 0.0
        %2912 = vmatpush1.msra.mxu0 0.0
        %2913 = vmatprep.subr.mxu0 0.0
        %2914 = vmatpush1.msra.mxu0 0.0
        %2915 = vmatprep.subr.mxu0 0.0
        %2916 = vmatpush1.msra.mxu0 0.0
        %2917 = vmatprep.subr.mxu0 0.0
        %2918 = vmatpush1.msra.mxu0 0.0
        %2919 = vmatprep.subr.mxu0 0.0
        %2920 = vmatpush1.msra.mxu0 0.0
        %2921 = vmatprep.subr.mxu0 0.0
        %2922 = vmatpush1.msra.mxu0 0.0
        %2923 = vmatprep.subr.mxu0 0.0
        %2924 = vmatpush1.msra.mxu0 0.0
        %2925 = vmatprep.subr.mxu0 0.0
        %2926 = vmatpush1.msra.mxu0 0.0
        %2927 = vmatprep.subr.mxu0 0.0
        %2928 = vmatpush1.msra.mxu0 0.0
        %2929 = vmatprep.subr.mxu0 0.0
        %2930 = vmatpush1.msra.mxu0 0.0
        %2931 = vmatprep.subr.mxu0 0.0
        %2932 = vmatpush1.msra.mxu0 0.0
        %2933 = vmatprep.subr.mxu0 0.0
        %2934 = vmatpush1.msra.mxu0 0.0
        %2935 = vmatprep.subr.mxu0 0.0
        %2936 = vmatpush1.msra.mxu0 0.0
        %2937 = vmatprep.subr.mxu0 0.0
        %2938 = vmatpush1.msra.mxu0 0.0
        %2939 = vmatprep.subr.mxu0 0.0
        %2940 = vmatpush1.msra.mxu0 0.0
        %2941 = vmatprep.subr.mxu0 0.0
        %2942 = vmatpush1.msra.mxu0 0.0
        %2943 = vmatprep.subr.mxu0 0.0
        %2944 = vmatpush1.msra.mxu0 0.0
        %2945 = vmatprep.subr.mxu0 0.0
        %2946 = vmatpush1.msra.mxu0 0.0
        %2947 = vmatprep.subr.mxu0 0.0
        %2948 = vmatpush1.msra.mxu0 0.0
        %2949 = vmatprep.mubr.f32.mxu0 0.0
        %2950 = vmatmul.mubr.f32.gmra.mrb[0].mxu0 %v2880
        %v2951 = vpop.f32.mrb[0].mxu0
        %v2952 = vadd.f32 %v2877, %v2951
        %v2953 = vpop.f32.mrb[0].mxu0
        %2954 = vmatprep.mubr.f32.mxu0 0.0
        %2955 = vmatmul.mubr.f32.gmra.mrb[0].mxu0 %v2883
        %v2956 = vpop.f32.mrb[0].mxu0
        %v2957 = vadd.f32 %v2877, %v2956
        %v2958 = vpop.f32.mrb[0].mxu0
        %2959 = vdwg.mxu0
        %vm2960 = vcmp.gt.f32.partialorder %v2952, 0.0
        %vm2961 = vcmp.gt.f32.partialorder %v2957, 0.0
        %v2962 = vmul.f32 %v2952, 0.01
        %v2963 = vmul.f32 %v2957, 0.01
        %v2964 = vsel %vm2960, %v2952, %v2962
        %v2965 = vsel %vm2961, %v2957, %v2963
        %v2967 = vsel %vm2196, %v1351, 0
        %v2970 = vsel %vm2196, %v1352, 0
        %2972 = vmatprep.subr.mxu0 0.0
        %2973 = vmatpush1.msra.mxu0 %v2964
        %2974 = vmatprep.subr.mxu0 0.0
        %2975 = vmatpush1.msra.mxu0 %v2965
        %2976 = vmatprep.subr.mxu0 0.0
        %2977 = vmatpush1.msra.mxu0 0.0
        %2978 = vmatprep.subr.mxu0 0.0
        %2979 = vmatpush1.msra.mxu0 0.0
        %2980 = vmatprep.subr.mxu0 0.0
        %2981 = vmatpush1.msra.mxu0 0.0
        %2982 = vmatprep.subr.mxu0 0.0
        %2983 = vmatpush1.msra.mxu0 0.0
        %2984 = vmatprep.subr.mxu0 0.0
        %2985 = vmatpush1.msra.mxu0 0.0
        %2986 = vmatprep.subr.mxu0 0.0
        %2987 = vmatpush1.msra.mxu0 0.0
        %2988 = vmatprep.subr.mxu0 0.0
        %2989 = vmatpush1.msra.mxu0 0.0
        %2990 = vmatprep.subr.mxu0 0.0
        %2991 = vmatpush1.msra.mxu0 0.0
        %2992 = vmatprep.subr.mxu0 0.0
        %2993 = vmatpush1.msra.mxu0 0.0
        %2994 = vmatprep.subr.mxu0 0.0
        %2995 = vmatpush1.msra.mxu0 0.0
        %2996 = vmatprep.subr.mxu0 0.0
        %2997 = vmatpush1.msra.mxu0 0.0
        %2998 = vmatprep.subr.mxu0 0.0
        %2999 = vmatpush1.msra.mxu0 0.0
        %3000 = vmatprep.subr.mxu0 0.0
        %3001 = vmatpush1.msra.mxu0 0.0
        %3002 = vmatprep.subr.mxu0 0.0
        %3003 = vmatpush1.msra.mxu0 0.0
        %3004 = vmatprep.subr.mxu0 0.0
        %3005 = vmatpush1.msra.mxu0 0.0
        %3006 = vmatprep.subr.mxu0 0.0
        %3007 = vmatpush1.msra.mxu0 0.0
        %3008 = vmatprep.subr.mxu0 0.0
        %3009 = vmatpush1.msra.mxu0 0.0
        %3010 = vmatprep.subr.mxu0 0.0
        %3011 = vmatpush1.msra.mxu0 0.0
        %3012 = vmatprep.subr.mxu0 0.0
        %3013 = vmatpush1.msra.mxu0 0.0
        %3014 = vmatprep.subr.mxu0 0.0
        %3015 = vmatpush1.msra.mxu0 0.0
        %3016 = vmatprep.subr.mxu0 0.0
        %3017 = vmatpush1.msra.mxu0 0.0
        %3018 = vmatprep.subr.mxu0 0.0
        %3019 = vmatpush1.msra.mxu0 0.0
        %3020 = vmatprep.subr.mxu0 0.0
        %3021 = vmatpush1.msra.mxu0 0.0
        %3022 = vmatprep.subr.mxu0 0.0
        %3023 = vmatpush1.msra.mxu0 0.0
        %3024 = vmatprep.subr.mxu0 0.0
        %3025 = vmatpush1.msra.mxu0 0.0
        %3026 = vmatprep.subr.mxu0 0.0
        %3027 = vmatpush1.msra.mxu0 0.0
        %3028 = vmatprep.subr.mxu0 0.0
        %3029 = vmatpush1.msra.mxu0 0.0
        %3030 = vmatprep.subr.mxu0 0.0
        %3031 = vmatpush1.msra.mxu0 0.0
        %3032 = vmatprep.subr.mxu0 0.0
        %3033 = vmatpush1.msra.mxu0 0.0
        %3034 = vmatprep.subr.mxu0 0.0
        %3035 = vmatpush1.msra.mxu0 0.0
        %3036 = vmatprep.mubr.f32.mxu0 0.0
        %3037 = vmatmul.mubr.f32.gmra.mrb[0].mxu0 %v2967
        %v3038 = vpop.f32.mrb[0].mxu0
        %v3039 = vadd.f32 0.0, %v3038
        %v3040 = vpop.f32.mrb[0].mxu0
        %3041 = vmatprep.mubr.f32.mxu0 0.0
        %3042 = vmatmul.mubr.f32.gmra.mrb[0].mxu0 %v2970
        %v3043 = vpop.f32.mrb[0].mxu0
        %v3044 = vadd.f32 0.0, %v3043
        %v3045 = vpop.f32.mrb[0].mxu0
        %3046 = vdwg.mxu0
        %3048 = vset.pattern.permute.xlu0 0
        %3049 = vperm.xlu0 %3048, %v1353
        %v3050 = vpop.permute.xlu0 %3049
        %3053 = vset.pattern.permute.xlu0 0
        %3054 = vperm.xlu0 %3053, %v1354
        %v3055 = vpop.permute.xlu0 %3054
        %v3057 = vmul.f32 %v3039, %v3050
        %v3058 = vmul.f32 %v3044, %v3055
        %v3059 = vld [vmem:[%s51] sm:$0xff]
        %v3060 = vld [vmem:[%s51 + $0x8] sm:$0xff]
        %v3061 = vld [vmem:[%s51 + $0x10] sm:$0xff]
        %v3062 = vld [vmem:[%s51 + $0x18] sm:$0xff]
        %v3063 = vld [vmem:[#allocation26] sm:$0x1]
        %v3065 = vlaneseq
        %v3066 = vshrl.u32 %v3065, 7
        %v3067 = vsub.s32 0, %v3066
        %v3068 = vrot.slane %v3063, %v3067
        %v3071 = vsel %vm1565, %v3057, 0
        %v3074 = vsel %vm1565, %v3058, 0
        %3076 = vmatprep.subr.mxu0 0.0
        %3077 = vmatpush1.msra.mxu0 %v3059
        %3078 = vmatprep.subr.mxu0 0.0
        %3079 = vmatpush1.msra.mxu0 %v3060
        %3080 = vmatprep.subr.mxu0 0.0
        %3081 = vmatpush1.msra.mxu0 %v3061
        %3082 = vmatprep.subr.mxu0 0.0
        %3083 = vmatpush1.msra.mxu0 %v3062
        %3084 = vmatprep.subr.mxu0 0.0
        %3085 = vmatpush1.msra.mxu0 0.0
        %3086 = vmatprep.subr.mxu0 0.0
        %3087 = vmatpush1.msra.mxu0 0.0
        %3088 = vmatprep.subr.mxu0 0.0
        %3089 = vmatpush1.msra.mxu0 0.0
        %3090 = vmatprep.subr.mxu0 0.0
        %3091 = vmatpush1.msra.mxu0 0.0
        %3092 = vmatprep.subr.mxu0 0.0
        %3093 = vmatpush1.msra.mxu0 0.0
        %3094 = vmatprep.subr.mxu0 0.0
        %3095 = vmatpush1.msra.mxu0 0.0
        %3096 = vmatprep.subr.mxu0 0.0
        %3097 = vmatpush1.msra.mxu0 0.0
        %3098 = vmatprep.subr.mxu0 0.0
        %3099 = vmatpush1.msra.mxu0 0.0
        %3100 = vmatprep.subr.mxu0 0.0
        %3101 = vmatpush1.msra.mxu0 0.0
        %3102 = vmatprep.subr.mxu0 0.0
        %3103 = vmatpush1.msra.mxu0 0.0
        %3104 = vmatprep.subr.mxu0 0.0
        %3105 = vmatpush1.msra.mxu0 0.0
        %3106 = vmatprep.subr.mxu0 0.0
        %3107 = vmatpush1.msra.mxu0 0.0
        %3108 = vmatprep.subr.mxu0 0.0
        %3109 = vmatpush1.msra.mxu0 0.0
        %3110 = vmatprep.subr.mxu0 0.0
        %3111 = vmatpush1.msra.mxu0 0.0
        %3112 = vmatprep.subr.mxu0 0.0
        %3113 = vmatpush1.msra.mxu0 0.0
        %3114 = vmatprep.subr.mxu0 0.0
        %3115 = vmatpush1.msra.mxu0 0.0
        %3116 = vmatprep.subr.mxu0 0.0
        %3117 = vmatpush1.msra.mxu0 0.0
        %3118 = vmatprep.subr.mxu0 0.0
        %3119 = vmatpush1.msra.mxu0 0.0
        %3120 = vmatprep.subr.mxu0 0.0
        %3121 = vmatpush1.msra.mxu0 0.0
        %3122 = vmatprep.subr.mxu0 0.0
        %3123 = vmatpush1.msra.mxu0 0.0
        %3124 = vmatprep.subr.mxu0 0.0
        %3125 = vmatpush1.msra.mxu0 0.0
        %3126 = vmatprep.subr.mxu0 0.0
        %3127 = vmatpush1.msra.mxu0 0.0
        %3128 = vmatprep.subr.mxu0 0.0
        %3129 = vmatpush1.msra.mxu0 0.0
        %3130 = vmatprep.subr.mxu0 0.0
        %3131 = vmatpush1.msra.mxu0 0.0
        %3132 = vmatprep.subr.mxu0 0.0
        %3133 = vmatpush1.msra.mxu0 0.0
        %3134 = vmatprep.subr.mxu0 0.0
        %3135 = vmatpush1.msra.mxu0 0.0
        %3136 = vmatprep.subr.mxu0 0.0
        %3137 = vmatpush1.msra.mxu0 0.0
        %3138 = vmatprep.subr.mxu0 0.0
        %3139 = vmatpush1.msra.mxu0 0.0
        %3140 = vmatprep.mubr.f32.mxu0 0.0
        %3141 = vmatmul.mubr.f32.gmra.mrb[0].mxu0 %v3071
        %v3142 = vpop.f32.mrb[0].mxu0
        %v3143 = vadd.f32 %v3068, %v3142
        %v3144 = vpop.f32.mrb[0].mxu0
        %3145 = vmatprep.mubr.f32.mxu0 0.0
        %3146 = vmatmul.mubr.f32.gmra.mrb[0].mxu0 %v3074
        %v3147 = vpop.f32.mrb[0].mxu0
        %v3148 = vadd.f32 %v3068, %v3147
        %v3149 = vpop.f32.mrb[0].mxu0
        %3150 = vdwg.mxu0
        %vm3151 = vcmp.gt.f32.partialorder %v3143, 0.0
        %vm3152 = vcmp.gt.f32.partialorder %v3148, 0.0
        %v3153 = vmul.f32 %v3143, 0.01
        %v3154 = vmul.f32 %v3148, 0.01
        %v3155 = vsel %vm3151, %v3143, %v3153
        %v3156 = vsel %vm3152, %v3148, %v3154
        %v3157 = vld [vmem:[#allocation27] sm:$0xff]
        %v3158 = vld [vmem:[#allocation27 + $0x8] sm:$0xff]
        %v3159 = vld [vmem:[#allocation27 + $0x10] sm:$0xff]
        %v3160 = vld [vmem:[#allocation27 + $0x18] sm:$0xff]
        %v3161 = vld [vmem:[#allocation29] sm:$0x1]
        %v3163 = vlaneseq
        %v3164 = vshrl.u32 %v3163, 7
        %v3165 = vsub.s32 0, %v3164
        %v3166 = vrot.slane %v3161, %v3165
        %v3169 = vsel %vm1565, %v3155, 0
        %v3172 = vsel %vm1565, %v3156, 0
        %3174 = vmatprep.subr.mxu0 0.0
        %3175 = vmatpush1.msra.mxu0 %v3157
        %3176 = vmatprep.subr.mxu0 0.0
        %3177 = vmatpush1.msra.mxu0 %v3158
        %3178 = vmatprep.subr.mxu0 0.0
        %3179 = vmatpush1.msra.mxu0 %v3159
        %3180 = vmatprep.subr.mxu0 0.0
        %3181 = vmatpush1.msra.mxu0 %v3160
        %3182 = vmatprep.subr.mxu0 0.0
        %3183 = vmatpush1.msra.mxu0 0.0
        %3184 = vmatprep.subr.mxu0 0.0
        %3185 = vmatpush1.msra.mxu0 0.0
        %3186 = vmatprep.subr.mxu0 0.0
        %3187 = vmatpush1.msra.mxu0 0.0
        %3188 = vmatprep.subr.mxu0 0.0
        %3189 = vmatpush1.msra.mxu0 0.0
        %3190 = vmatprep.subr.mxu0 0.0
        %3191 = vmatpush1.msra.mxu0 0.0
        %3192 = vmatprep.subr.mxu0 0.0
        %3193 = vmatpush1.msra.mxu0 0.0
        %3194 = vmatprep.subr.mxu0 0.0
        %3195 = vmatpush1.msra.mxu0 0.0
        %3196 = vmatprep.subr.mxu0 0.0
        %3197 = vmatpush1.msra.mxu0 0.0
        %3198 = vmatprep.subr.mxu0 0.0
        %3199 = vmatpush1.msra.mxu0 0.0
        %3200 = vmatprep.subr.mxu0 0.0
        %3201 = vmatpush1.msra.mxu0 0.0
        %3202 = vmatprep.subr.mxu0 0.0
        %3203 = vmatpush1.msra.mxu0 0.0
        %3204 = vmatprep.subr.mxu0 0.0
        %3205 = vmatpush1.msra.mxu0 0.0
        %3206 = vmatprep.subr.mxu0 0.0
        %3207 = vmatpush1.msra.mxu0 0.0
        %3208 = vmatprep.subr.mxu0 0.0
        %3209 = vmatpush1.msra.mxu0 0.0
        %3210 = vmatprep.subr.mxu0 0.0
        %3211 = vmatpush1.msra.mxu0 0.0
        %3212 = vmatprep.subr.mxu0 0.0
        %3213 = vmatpush1.msra.mxu0 0.0
        %3214 = vmatprep.subr.mxu0 0.0
        %3215 = vmatpush1.msra.mxu0 0.0
        %3216 = vmatprep.subr.mxu0 0.0
        %3217 = vmatpush1.msra.mxu0 0.0
        %3218 = vmatprep.subr.mxu0 0.0
        %3219 = vmatpush1.msra.mxu0 0.0
        %3220 = vmatprep.subr.mxu0 0.0
        %3221 = vmatpush1.msra.mxu0 0.0
        %3222 = vmatprep.subr.mxu0 0.0
        %3223 = vmatpush1.msra.mxu0 0.0
        %3224 = vmatprep.subr.mxu0 0.0
        %3225 = vmatpush1.msra.mxu0 0.0
        %3226 = vmatprep.subr.mxu0 0.0
        %3227 = vmatpush1.msra.mxu0 0.0
        %3228 = vmatprep.subr.mxu0 0.0
        %3229 = vmatpush1.msra.mxu0 0.0
        %3230 = vmatprep.subr.mxu0 0.0
        %3231 = vmatpush1.msra.mxu0 0.0
        %3232 = vmatprep.subr.mxu0 0.0
        %3233 = vmatpush1.msra.mxu0 0.0
        %3234 = vmatprep.subr.mxu0 0.0
        %3235 = vmatpush1.msra.mxu0 0.0
        %3236 = vmatprep.subr.mxu0 0.0
        %3237 = vmatpush1.msra.mxu0 0.0
        %3238 = vmatprep.mubr.f32.mxu0 0.0
        %3239 = vmatmul.mubr.f32.gmra.mrb[0].mxu0 %v3169
        %v3240 = vpop.f32.mrb[0].mxu0
        %v3241 = vadd.f32 %v3166, %v3240
        %v3242 = vpop.f32.mrb[0].mxu0
        %3243 = vmatprep.mubr.f32.mxu0 0.0
        %3244 = vmatmul.mubr.f32.gmra.mrb[0].mxu0 %v3172
        %v3245 = vpop.f32.mrb[0].mxu0
        %v3246 = vadd.f32 %v3166, %v3245
        %v3247 = vpop.f32.mrb[0].mxu0
        %3248 = vdwg.mxu0
        %vm3249 = vcmp.gt.f32.partialorder %v3241, 0.0
        %vm3250 = vcmp.gt.f32.partialorder %v3246, 0.0
        %v3251 = vmul.f32 %v3241, 0.01
        %v3252 = vmul.f32 %v3246, 0.01
        %v3253 = vsel %vm3249, %v3241, %v3251
        %v3254 = vsel %vm3250, %v3246, %v3252
        %3255 = vmatprep.subr.mxu0 0.0
        %3256 = vmatpush1.msra.mxu0 %v3253
        %3257 = vmatprep.subr.mxu0 0.0
        %3258 = vmatpush1.msra.mxu0 %v3254
        %3259 = vmatprep.subr.mxu0 0.0
        %3260 = vmatpush1.msra.mxu0 0.0
        %3261 = vmatprep.subr.mxu0 0.0
        %3262 = vmatpush1.msra.mxu0 0.0
        %3263 = vmatprep.subr.mxu0 0.0
        %3264 = vmatpush1.msra.mxu0 0.0
        %3265 = vmatprep.subr.mxu0 0.0
        %3266 = vmatpush1.msra.mxu0 0.0
        %3267 = vmatprep.subr.mxu0 0.0
        %3268 = vmatpush1.msra.mxu0 0.0
        %3269 = vmatprep.subr.mxu0 0.0
        %3270 = vmatpush1.msra.mxu0 0.0
        %3271 = vmatprep.subr.mxu0 0.0
        %3272 = vmatpush1.msra.mxu0 0.0
        %3273 = vmatprep.subr.mxu0 0.0
        %3274 = vmatpush1.msra.mxu0 0.0
        %3275 = vmatprep.subr.mxu0 0.0
        %3276 = vmatpush1.msra.mxu0 0.0
        %3277 = vmatprep.subr.mxu0 0.0
        %3278 = vmatpush1.msra.mxu0 0.0
        %3279 = vmatprep.subr.mxu0 0.0
        %3280 = vmatpush1.msra.mxu0 0.0
        %3281 = vmatprep.subr.mxu0 0.0
        %3282 = vmatpush1.msra.mxu0 0.0
        %3283 = vmatprep.subr.mxu0 0.0
        %3284 = vmatpush1.msra.mxu0 0.0
        %3285 = vmatprep.subr.mxu0 0.0
        %3286 = vmatpush1.msra.mxu0 0.0
        %3287 = vmatprep.subr.mxu0 0.0
        %3288 = vmatpush1.msra.mxu0 0.0
        %3289 = vmatprep.subr.mxu0 0.0
        %3290 = vmatpush1.msra.mxu0 0.0
        %3291 = vmatprep.subr.mxu0 0.0
        %3292 = vmatpush1.msra.mxu0 0.0
        %3293 = vmatprep.subr.mxu0 0.0
        %3294 = vmatpush1.msra.mxu0 0.0
        %3295 = vmatprep.subr.mxu0 0.0
        %3296 = vmatpush1.msra.mxu0 0.0
        %3297 = vmatprep.subr.mxu0 0.0
        %3298 = vmatpush1.msra.mxu0 0.0
        %3299 = vmatprep.subr.mxu0 0.0
        %3300 = vmatpush1.msra.mxu0 0.0
        %3301 = vmatprep.subr.mxu0 0.0
        %3302 = vmatpush1.msra.mxu0 0.0
        %3303 = vmatprep.subr.mxu0 0.0
        %3304 = vmatpush1.msra.mxu0 0.0
        %3305 = vmatprep.subr.mxu0 0.0
        %3306 = vmatpush1.msra.mxu0 0.0
        %3307 = vmatprep.subr.mxu0 0.0
        %3308 = vmatpush1.msra.mxu0 0.0
        %3309 = vmatprep.subr.mxu0 0.0
        %3310 = vmatpush1.msra.mxu0 0.0
        %3311 = vmatprep.subr.mxu0 0.0
        %3312 = vmatpush1.msra.mxu0 0.0
        %3313 = vmatprep.subr.mxu0 0.0
        %3314 = vmatpush1.msra.mxu0 0.0
        %3315 = vmatprep.subr.mxu0 0.0
        %3316 = vmatpush1.msra.mxu0 0.0
        %3317 = vmatprep.subr.mxu0 0.0
        %3318 = vmatpush1.msra.mxu0 0.0
        %3319 = vmatprep.mubr.f32.mxu0 0.0
        %3320 = vmatmul.mubr.f32.gmra.mrb[0].mxu0 %v2198
        %v3321 = vpop.f32.mrb[0].mxu0
        %v3322 = vadd.f32 0.0, %v3321
        %v3323 = vpop.f32.mrb[0].mxu0
        %3324 = vmatprep.mubr.f32.mxu0 0.0
        %3325 = vmatmul.mubr.f32.gmra.mrb[0].mxu0 %v2201
        %v3326 = vpop.f32.mrb[0].mxu0
        %v3327 = vadd.f32 0.0, %v3326
        %v3328 = vpop.f32.mrb[0].mxu0
        %3329 = vdwg.mxu0
        %3330 = vmatprep.subr.mxu0 0.0
        %3331 = vmatpush1.msra.mxu0 %v3253
        %3332 = vmatprep.subr.mxu0 0.0
        %3333 = vmatpush1.msra.mxu0 %v3254
        %3334 = vmatprep.subr.mxu0 0.0
        %3335 = vmatpush1.msra.mxu0 0.0
        %3336 = vmatprep.subr.mxu0 0.0
        %3337 = vmatpush1.msra.mxu0 0.0
        %3338 = vmatprep.subr.mxu0 0.0
        %3339 = vmatpush1.msra.mxu0 0.0
        %3340 = vmatprep.subr.mxu0 0.0
        %3341 = vmatpush1.msra.mxu0 0.0
        %3342 = vmatprep.subr.mxu0 0.0
        %3343 = vmatpush1.msra.mxu0 0.0
        %3344 = vmatprep.subr.mxu0 0.0
        %3345 = vmatpush1.msra.mxu0 0.0
        %3346 = vmatprep.subr.mxu0 0.0
        %3347 = vmatpush1.msra.mxu0 0.0
        %3348 = vmatprep.subr.mxu0 0.0
        %3349 = vmatpush1.msra.mxu0 0.0
        %3350 = vmatprep.subr.mxu0 0.0
        %3351 = vmatpush1.msra.mxu0 0.0
        %3352 = vmatprep.subr.mxu0 0.0
        %3353 = vmatpush1.msra.mxu0 0.0
        %3354 = vmatprep.subr.mxu0 0.0
        %3355 = vmatpush1.msra.mxu0 0.0
        %3356 = vmatprep.subr.mxu0 0.0
        %3357 = vmatpush1.msra.mxu0 0.0
        %3358 = vmatprep.subr.mxu0 0.0
        %3359 = vmatpush1.msra.mxu0 0.0
        %3360 = vmatprep.subr.mxu0 0.0
        %3361 = vmatpush1.msra.mxu0 0.0
        %3362 = vmatprep.subr.mxu0 0.0
        %3363 = vmatpush1.msra.mxu0 0.0
        %3364 = vmatprep.subr.mxu0 0.0
        %3365 = vmatpush1.msra.mxu0 0.0
        %3366 = vmatprep.subr.mxu0 0.0
        %3367 = vmatpush1.msra.mxu0 0.0
        %3368 = vmatprep.subr.mxu0 0.0
        %3369 = vmatpush1.msra.mxu0 0.0
        %3370 = vmatprep.subr.mxu0 0.0
        %3371 = vmatpush1.msra.mxu0 0.0
        %3372 = vmatprep.subr.mxu0 0.0
        %3373 = vmatpush1.msra.mxu0 0.0
        %3374 = vmatprep.subr.mxu0 0.0
        %3375 = vmatpush1.msra.mxu0 0.0
        %3376 = vmatprep.subr.mxu0 0.0
        %3377 = vmatpush1.msra.mxu0 0.0
        %3378 = vmatprep.subr.mxu0 0.0
        %3379 = vmatpush1.msra.mxu0 0.0
        %3380 = vmatprep.subr.mxu0 0.0
        %3381 = vmatpush1.msra.mxu0 0.0
        %3382 = vmatprep.subr.mxu0 0.0
        %3383 = vmatpush1.msra.mxu0 0.0
        %3384 = vmatprep.subr.mxu0 0.0
        %3385 = vmatpush1.msra.mxu0 0.0
        %3386 = vmatprep.subr.mxu0 0.0
        %3387 = vmatpush1.msra.mxu0 0.0
        %3388 = vmatprep.subr.mxu0 0.0
        %3389 = vmatpush1.msra.mxu0 0.0
        %3390 = vmatprep.subr.mxu0 0.0
        %3391 = vmatpush1.msra.mxu0 0.0
        %3392 = vmatprep.subr.mxu0 0.0
        %3393 = vmatpush1.msra.mxu0 0.0
        %3394 = vmatprep.mubr.f32.mxu0 0.0
        %3395 = vmatmul.mubr.f32.gmra.mrb[0].mxu0 %v2280
        %v3396 = vpop.f32.mrb[0].mxu0
        %v3397 = vadd.f32 0.0, %v3396
        %v3398 = vpop.f32.mrb[0].mxu0
        %3399 = vmatprep.mubr.f32.mxu0 0.0
        %3400 = vmatmul.mubr.f32.gmra.mrb[0].mxu0 %v2283
        %v3401 = vpop.f32.mrb[0].mxu0
        %v3402 = vadd.f32 0.0, %v3401
        %v3403 = vpop.f32.mrb[0].mxu0
        %3404 = vdwg.mxu0
        %v3406 = vsel %vm1565, %v3397, 0
        %v3409 = vsel %vm1565, %v3402, 0
        %3411 = vmatprep.subr.mxu0 0.0
        %3412 = vmatpush1.msra.mxu0 %v2685
        %3413 = vmatprep.subr.mxu0 0.0
        %3414 = vmatpush1.msra.mxu0 %v2686
        %3415 = vmatprep.subr.mxu0 0.0
        %3416 = vmatpush1.msra.mxu0 %v2687
        %3417 = vmatprep.subr.mxu0 0.0
        %3418 = vmatpush1.msra.mxu0 %v2688
        %3419 = vmatprep.subr.mxu0 0.0
        %3420 = vmatpush1.msra.mxu0 0.0
        %3421 = vmatprep.subr.mxu0 0.0
        %3422 = vmatpush1.msra.mxu0 0.0
        %3423 = vmatprep.subr.mxu0 0.0
        %3424 = vmatpush1.msra.mxu0 0.0
        %3425 = vmatprep.subr.mxu0 0.0
        %3426 = vmatpush1.msra.mxu0 0.0
        %3427 = vmatprep.subr.mxu0 0.0
        %3428 = vmatpush1.msra.mxu0 0.0
        %3429 = vmatprep.subr.mxu0 0.0
        %3430 = vmatpush1.msra.mxu0 0.0
        %3431 = vmatprep.subr.mxu0 0.0
        %3432 = vmatpush1.msra.mxu0 0.0
        %3433 = vmatprep.subr.mxu0 0.0
        %3434 = vmatpush1.msra.mxu0 0.0
        %3435 = vmatprep.subr.mxu0 0.0
        %3436 = vmatpush1.msra.mxu0 0.0
        %3437 = vmatprep.subr.mxu0 0.0
        %3438 = vmatpush1.msra.mxu0 0.0
        %3439 = vmatprep.subr.mxu0 0.0
        %3440 = vmatpush1.msra.mxu0 0.0
        %3441 = vmatprep.subr.mxu0 0.0
        %3442 = vmatpush1.msra.mxu0 0.0
        %3443 = vmatprep.subr.mxu0 0.0
        %3444 = vmatpush1.msra.mxu0 0.0
        %3445 = vmatprep.subr.mxu0 0.0
        %3446 = vmatpush1.msra.mxu0 0.0
        %3447 = vmatprep.subr.mxu0 0.0
        %3448 = vmatpush1.msra.mxu0 0.0
        %3449 = vmatprep.subr.mxu0 0.0
        %3450 = vmatpush1.msra.mxu0 0.0
        %3451 = vmatprep.subr.mxu0 0.0
        %3452 = vmatpush1.msra.mxu0 0.0
        %3453 = vmatprep.subr.mxu0 0.0
        %3454 = vmatpush1.msra.mxu0 0.0
        %3455 = vmatprep.subr.mxu0 0.0
        %3456 = vmatpush1.msra.mxu0 0.0
        %3457 = vmatprep.subr.mxu0 0.0
        %3458 = vmatpush1.msra.mxu0 0.0
        %3459 = vmatprep.subr.mxu0 0.0
        %3460 = vmatpush1.msra.mxu0 0.0
        %3461 = vmatprep.subr.mxu0 0.0
        %3462 = vmatpush1.msra.mxu0 0.0
        %3463 = vmatprep.subr.mxu0 0.0
        %3464 = vmatpush1.msra.mxu0 0.0
        %3465 = vmatprep.subr.mxu0 0.0
        %3466 = vmatpush1.msra.mxu0 0.0
        %3467 = vmatprep.subr.mxu0 0.0
        %3468 = vmatpush1.msra.mxu0 0.0
        %3469 = vmatprep.subr.mxu0 0.0
        %3470 = vmatpush1.msra.mxu0 0.0
        %3471 = vmatprep.subr.mxu0 0.0
        %3472 = vmatpush1.msra.mxu0 0.0
        %3473 = vmatprep.subr.mxu0 0.0
        %3474 = vmatpush1.msra.mxu0 0.0
        %3475 = vmatprep.mubr.f32.mxu0 0.0
        %3476 = vmatmul.mubr.f32.gmra.mrb[0].mxu0 %v3406
        %v3477 = vpop.f32.mrb[0].mxu0
        %v3478 = vadd.f32 0.0, %v3477
        %v3479 = vpop.f32.mrb[0].mxu0
        %3480 = vmatprep.mubr.f32.mxu0 0.0
        %3481 = vmatmul.mubr.f32.gmra.mrb[0].mxu0 %v3409
        %v3482 = vpop.f32.mrb[0].mxu0
        %v3483 = vadd.f32 0.0, %v3482
        %v3484 = vpop.f32.mrb[0].mxu0
        %3485 = vdwg.mxu0
        %v3487 = vsel %vm1565, %v3322, 0
        %v3490 = vsel %vm1565, %v3327, 0
        %3492 = vmatprep.subr.mxu0 0.0
        %3493 = vmatpush1.msra.mxu0 %v2606
        %3494 = vmatprep.subr.mxu0 0.0
        %3495 = vmatpush1.msra.mxu0 %v2607
        %3496 = vmatprep.subr.mxu0 0.0
        %3497 = vmatpush1.msra.mxu0 %v2608
        %3498 = vmatprep.subr.mxu0 0.0
        %3499 = vmatpush1.msra.mxu0 %v2609
        %3500 = vmatprep.subr.mxu0 0.0
        %3501 = vmatpush1.msra.mxu0 0.0
        %3502 = vmatprep.subr.mxu0 0.0
        %3503 = vmatpush1.msra.mxu0 0.0
        %3504 = vmatprep.subr.mxu0 0.0
        %3505 = vmatpush1.msra.mxu0 0.0
        %3506 = vmatprep.subr.mxu0 0.0
        %3507 = vmatpush1.msra.mxu0 0.0
        %3508 = vmatprep.subr.mxu0 0.0
        %3509 = vmatpush1.msra.mxu0 0.0
        %3510 = vmatprep.subr.mxu0 0.0
        %3511 = vmatpush1.msra.mxu0 0.0
        %3512 = vmatprep.subr.mxu0 0.0
        %3513 = vmatpush1.msra.mxu0 0.0
        %3514 = vmatprep.subr.mxu0 0.0
        %3515 = vmatpush1.msra.mxu0 0.0
        %3516 = vmatprep.subr.mxu0 0.0
        %3517 = vmatpush1.msra.mxu0 0.0
        %3518 = vmatprep.subr.mxu0 0.0
        %3519 = vmatpush1.msra.mxu0 0.0
        %3520 = vmatprep.subr.mxu0 0.0
        %3521 = vmatpush1.msra.mxu0 0.0
        %3522 = vmatprep.subr.mxu0 0.0
        %3523 = vmatpush1.msra.mxu0 0.0
        %3524 = vmatprep.subr.mxu0 0.0
        %3525 = vmatpush1.msra.mxu0 0.0
        %3526 = vmatprep.subr.mxu0 0.0
        %3527 = vmatpush1.msra.mxu0 0.0
        %3528 = vmatprep.subr.mxu0 0.0
        %3529 = vmatpush1.msra.mxu0 0.0
        %3530 = vmatprep.subr.mxu0 0.0
        %3531 = vmatpush1.msra.mxu0 0.0
        %3532 = vmatprep.subr.mxu0 0.0
        %3533 = vmatpush1.msra.mxu0 0.0
        %3534 = vmatprep.subr.mxu0 0.0
        %3535 = vmatpush1.msra.mxu0 0.0
        %3536 = vmatprep.subr.mxu0 0.0
        %3537 = vmatpush1.msra.mxu0 0.0
        %3538 = vmatprep.subr.mxu0 0.0
        %3539 = vmatpush1.msra.mxu0 0.0
        %3540 = vmatprep.subr.mxu0 0.0
        %3541 = vmatpush1.msra.mxu0 0.0
        %3542 = vmatprep.subr.mxu0 0.0
        %3543 = vmatpush1.msra.mxu0 0.0
        %3544 = vmatprep.subr.mxu0 0.0
        %3545 = vmatpush1.msra.mxu0 0.0
        %3546 = vmatprep.subr.mxu0 0.0
        %3547 = vmatpush1.msra.mxu0 0.0
        %3548 = vmatprep.subr.mxu0 0.0
        %3549 = vmatpush1.msra.mxu0 0.0
        %3550 = vmatprep.subr.mxu0 0.0
        %3551 = vmatpush1.msra.mxu0 0.0
        %3552 = vmatprep.subr.mxu0 0.0
        %3553 = vmatpush1.msra.mxu0 0.0
        %3554 = vmatprep.subr.mxu0 0.0
        %3555 = vmatpush1.msra.mxu0 0.0
        %3556 = vmatprep.mubr.f32.mxu0 0.0
        %3557 = vmatmul.mubr.f32.gmra.mrb[0].mxu0 %v3487
        %v3558 = vpop.f32.mrb[0].mxu0
        %v3559 = vadd.f32 %v3478, %v3558
        %v3560 = vpop.f32.mrb[0].mxu0
        %3561 = vmatprep.mubr.f32.mxu0 0.0
        %3562 = vmatmul.mubr.f32.gmra.mrb[0].mxu0 %v3490
        %v3563 = vpop.f32.mrb[0].mxu0
        %v3564 = vadd.f32 %v3483, %v3563
        %v3565 = vpop.f32.mrb[0].mxu0
        %3566 = vdwg.mxu0
        %v3567 = vadd.f32 %v3559, %v2523
        %v3568 = vadd.f32 %v3564, %v2528
        %v3569 = vadd.f32 %v3567, %v2858
        %v3570 = vadd.f32 %v3568, %v2858
        %vm3571 = vcmp.gt.f32.partialorder %v3569, 0.0
        %vm3572 = vcmp.gt.f32.partialorder %v3570, 0.0
        %v3573 = vmul.f32 %v3569, 0.01
        %v3574 = vmul.f32 %v3570, 0.01
        %v3575 = vsel %vm3571, %v3569, %v3573
        %v3576 = vsel %vm3572, %v3570, %v3574
        %v3578 = vsel %vm1565, %v3575, 0
        %v3581 = vsel %vm1565, %v3576, 0
        %3583 = vmatprep.subr.mxu0 0.0
        %3584 = vmatpush1.msra.mxu0 %v2868
        %3585 = vmatprep.subr.mxu0 0.0
        %3586 = vmatpush1.msra.mxu0 %v2869
        %3587 = vmatprep.subr.mxu0 0.0
        %3588 = vmatpush1.msra.mxu0 %v2870
        %3589 = vmatprep.subr.mxu0 0.0
        %3590 = vmatpush1.msra.mxu0 %v2871
        %3591 = vmatprep.subr.mxu0 0.0
        %3592 = vmatpush1.msra.mxu0 0.0
        %3593 = vmatprep.subr.mxu0 0.0
        %3594 = vmatpush1.msra.mxu0 0.0
        %3595 = vmatprep.subr.mxu0 0.0
        %3596 = vmatpush1.msra.mxu0 0.0
        %3597 = vmatprep.subr.mxu0 0.0
        %3598 = vmatpush1.msra.mxu0 0.0
        %3599 = vmatprep.subr.mxu0 0.0
        %3600 = vmatpush1.msra.mxu0 0.0
        %3601 = vmatprep.subr.mxu0 0.0
        %3602 = vmatpush1.msra.mxu0 0.0
        %3603 = vmatprep.subr.mxu0 0.0
        %3604 = vmatpush1.msra.mxu0 0.0
        %3605 = vmatprep.subr.mxu0 0.0
        %3606 = vmatpush1.msra.mxu0 0.0
        %3607 = vmatprep.subr.mxu0 0.0
        %3608 = vmatpush1.msra.mxu0 0.0
        %3609 = vmatprep.subr.mxu0 0.0
        %3610 = vmatpush1.msra.mxu0 0.0
        %3611 = vmatprep.subr.mxu0 0.0
        %3612 = vmatpush1.msra.mxu0 0.0
        %3613 = vmatprep.subr.mxu0 0.0
        %3614 = vmatpush1.msra.mxu0 0.0
        %3615 = vmatprep.subr.mxu0 0.0
        %3616 = vmatpush1.msra.mxu0 0.0
        %3617 = vmatprep.subr.mxu0 0.0
        %3618 = vmatpush1.msra.mxu0 0.0
        %3619 = vmatprep.subr.mxu0 0.0
        %3620 = vmatpush1.msra.mxu0 0.0
        %3621 = vmatprep.subr.mxu0 0.0
        %3622 = vmatpush1.msra.mxu0 0.0
        %3623 = vmatprep.subr.mxu0 0.0
        %3624 = vmatpush1.msra.mxu0 0.0
        %3625 = vmatprep.subr.mxu0 0.0
        %3626 = vmatpush1.msra.mxu0 0.0
        %3627 = vmatprep.subr.mxu0 0.0
        %3628 = vmatpush1.msra.mxu0 0.0
        %3629 = vmatprep.subr.mxu0 0.0
        %3630 = vmatpush1.msra.mxu0 0.0
        %3631 = vmatprep.subr.mxu0 0.0
        %3632 = vmatpush1.msra.mxu0 0.0
        %3633 = vmatprep.subr.mxu0 0.0
        %3634 = vmatpush1.msra.mxu0 0.0
        %3635 = vmatprep.subr.mxu0 0.0
        %3636 = vmatpush1.msra.mxu0 0.0
        %3637 = vmatprep.subr.mxu0 0.0
        %3638 = vmatpush1.msra.mxu0 0.0
        %3639 = vmatprep.subr.mxu0 0.0
        %3640 = vmatpush1.msra.mxu0 0.0
        %3641 = vmatprep.subr.mxu0 0.0
        %3642 = vmatpush1.msra.mxu0 0.0
        %3643 = vmatprep.subr.mxu0 0.0
        %3644 = vmatpush1.msra.mxu0 0.0
        %3645 = vmatprep.subr.mxu0 0.0
        %3646 = vmatpush1.msra.mxu0 0.0
        %3647 = vmatprep.mubr.f32.mxu0 0.0
        %3648 = vmatmul.mubr.f32.gmra.mrb[0].mxu0 %v3578
        %v3649 = vpop.f32.mrb[0].mxu0
        %v3650 = vadd.f32 %v2877, %v3649
        %v3651 = vpop.f32.mrb[0].mxu0
        %3652 = vmatprep.mubr.f32.mxu0 0.0
        %3653 = vmatmul.mubr.f32.gmra.mrb[0].mxu0 %v3581
        %v3654 = vpop.f32.mrb[0].mxu0
        %v3655 = vadd.f32 %v2877, %v3654
        %v3656 = vpop.f32.mrb[0].mxu0
        %3657 = vdwg.mxu0
        %vm3658 = vcmp.gt.f32.partialorder %v3650, 0.0
        %vm3659 = vcmp.gt.f32.partialorder %v3655, 0.0
        %v3660 = vmul.f32 %v3650, 0.01
        %v3661 = vmul.f32 %v3655, 0.01
        %v3662 = vsel %vm3658, %v3650, %v3660
        %v3663 = vsel %vm3659, %v3655, %v3661
        %3664 = vmatprep.subr.mxu0 0.0
        %3665 = vmatpush1.msra.mxu0 %v3662
        %3666 = vmatprep.subr.mxu0 0.0
        %3667 = vmatpush1.msra.mxu0 %v3663
        %3668 = vmatprep.subr.mxu0 0.0
        %3669 = vmatpush1.msra.mxu0 0.0
        %3670 = vmatprep.subr.mxu0 0.0
        %3671 = vmatpush1.msra.mxu0 0.0
        %3672 = vmatprep.subr.mxu0 0.0
        %3673 = vmatpush1.msra.mxu0 0.0
        %3674 = vmatprep.subr.mxu0 0.0
        %3675 = vmatpush1.msra.mxu0 0.0
        %3676 = vmatprep.subr.mxu0 0.0
        %3677 = vmatpush1.msra.mxu0 0.0
        %3678 = vmatprep.subr.mxu0 0.0
        %3679 = vmatpush1.msra.mxu0 0.0
        %3680 = vmatprep.subr.mxu0 0.0
        %3681 = vmatpush1.msra.mxu0 0.0
        %3682 = vmatprep.subr.mxu0 0.0
        %3683 = vmatpush1.msra.mxu0 0.0
        %3684 = vmatprep.subr.mxu0 0.0
        %3685 = vmatpush1.msra.mxu0 0.0
        %3686 = vmatprep.subr.mxu0 0.0
        %3687 = vmatpush1.msra.mxu0 0.0
        %3688 = vmatprep.subr.mxu0 0.0
        %3689 = vmatpush1.msra.mxu0 0.0
        %3690 = vmatprep.subr.mxu0 0.0
        %3691 = vmatpush1.msra.mxu0 0.0
        %3692 = vmatprep.subr.mxu0 0.0
        %3693 = vmatpush1.msra.mxu0 0.0
        %3694 = vmatprep.subr.mxu0 0.0
        %3695 = vmatpush1.msra.mxu0 0.0
        %3696 = vmatprep.subr.mxu0 0.0
        %3697 = vmatpush1.msra.mxu0 0.0
        %3698 = vmatprep.subr.mxu0 0.0
        %3699 = vmatpush1.msra.mxu0 0.0
        %3700 = vmatprep.subr.mxu0 0.0
        %3701 = vmatpush1.msra.mxu0 0.0
        %3702 = vmatprep.subr.mxu0 0.0
        %3703 = vmatpush1.msra.mxu0 0.0
        %3704 = vmatprep.subr.mxu0 0.0
        %3705 = vmatpush1.msra.mxu0 0.0
        %3706 = vmatprep.subr.mxu0 0.0
        %3707 = vmatpush1.msra.mxu0 0.0
        %3708 = vmatprep.subr.mxu0 0.0
        %3709 = vmatpush1.msra.mxu0 0.0
        %3710 = vmatprep.subr.mxu0 0.0
        %3711 = vmatpush1.msra.mxu0 0.0
        %3712 = vmatprep.subr.mxu0 0.0
        %3713 = vmatpush1.msra.mxu0 0.0
        %3714 = vmatprep.subr.mxu0 0.0
        %3715 = vmatpush1.msra.mxu0 0.0
        %3716 = vmatprep.subr.mxu0 0.0
        %3717 = vmatpush1.msra.mxu0 0.0
        %3718 = vmatprep.subr.mxu0 0.0
        %3719 = vmatpush1.msra.mxu0 0.0
        %3720 = vmatprep.subr.mxu0 0.0
        %3721 = vmatpush1.msra.mxu0 0.0
        %3722 = vmatprep.subr.mxu0 0.0
        %3723 = vmatpush1.msra.mxu0 0.0
        %3724 = vmatprep.subr.mxu0 0.0
        %3725 = vmatpush1.msra.mxu0 0.0
        %3726 = vmatprep.subr.mxu0 0.0
        %3727 = vmatpush1.msra.mxu0 0.0
        %3728 = vmatprep.mubr.f32.mxu0 0.0
        %3729 = vmatmul.mubr.f32.gmra.mrb[0].mxu0 %v2967
        %v3730 = vpop.f32.mrb[0].mxu0
        %v3731 = vadd.f32 0.0, %v3730
        %v3732 = vpop.f32.mrb[0].mxu0
        %3733 = vmatprep.mubr.f32.mxu0 0.0
        %3734 = vmatmul.mubr.f32.gmra.mrb[0].mxu0 %v2970
        %v3735 = vpop.f32.mrb[0].mxu0
        %v3736 = vadd.f32 0.0, %v3735
        %v3737 = vpop.f32.mrb[0].mxu0
        %3738 = vdwg.mxu0
        %v3739 = vmul.f32 %v3731, %v3050
        %v3740 = vmul.f32 %v3736, %v3055
        %v3741 = vadd.f32 %v3057, %v3739
        %v3742 = vadd.f32 %v3058, %v3740
        %v3744 = vsel %vm1565, %v3741, 0
        %v3747 = vsel %vm1565, %v3742, 0
        %3749 = vmatprep.subr.mxu0 0.0
        %3750 = vmatpush1.msra.mxu0 %v3059
        %3751 = vmatprep.subr.mxu0 0.0
        %3752 = vmatpush1.msra.mxu0 %v3060
        %3753 = vmatprep.subr.mxu0 0.0
        %3754 = vmatpush1.msra.mxu0 %v3061
        %3755 = vmatprep.subr.mxu0 0.0
        %3756 = vmatpush1.msra.mxu0 %v3062
        %3757 = vmatprep.subr.mxu0 0.0
        %3758 = vmatpush1.msra.mxu0 0.0
        %3759 = vmatprep.subr.mxu0 0.0
        %3760 = vmatpush1.msra.mxu0 0.0
        %3761 = vmatprep.subr.mxu0 0.0
        %3762 = vmatpush1.msra.mxu0 0.0
        %3763 = vmatprep.subr.mxu0 0.0
        %3764 = vmatpush1.msra.mxu0 0.0
        %3765 = vmatprep.subr.mxu0 0.0
        %3766 = vmatpush1.msra.mxu0 0.0
        %3767 = vmatprep.subr.mxu0 0.0
        %3768 = vmatpush1.msra.mxu0 0.0
        %3769 = vmatprep.subr.mxu0 0.0
        %3770 = vmatpush1.msra.mxu0 0.0
        %3771 = vmatprep.subr.mxu0 0.0
        %3772 = vmatpush1.msra.mxu0 0.0
        %3773 = vmatprep.subr.mxu0 0.0
        %3774 = vmatpush1.msra.mxu0 0.0
        %3775 = vmatprep.subr.mxu0 0.0
        %3776 = vmatpush1.msra.mxu0 0.0
        %3777 = vmatprep.subr.mxu0 0.0
        %3778 = vmatpush1.msra.mxu0 0.0
        %3779 = vmatprep.subr.mxu0 0.0
        %3780 = vmatpush1.msra.mxu0 0.0
        %3781 = vmatprep.subr.mxu0 0.0
        %3782 = vmatpush1.msra.mxu0 0.0
        %3783 = vmatprep.subr.mxu0 0.0
        %3784 = vmatpush1.msra.mxu0 0.0
        %3785 = vmatprep.subr.mxu0 0.0
        %3786 = vmatpush1.msra.mxu0 0.0
        %3787 = vmatprep.subr.mxu0 0.0
        %3788 = vmatpush1.msra.mxu0 0.0
        %3789 = vmatprep.subr.mxu0 0.0
        %3790 = vmatpush1.msra.mxu0 0.0
        %3791 = vmatprep.subr.mxu0 0.0
        %3792 = vmatpush1.msra.mxu0 0.0
        %3793 = vmatprep.subr.mxu0 0.0
        %3794 = vmatpush1.msra.mxu0 0.0
        %3795 = vmatprep.subr.mxu0 0.0
        %3796 = vmatpush1.msra.mxu0 0.0
        %3797 = vmatprep.subr.mxu0 0.0
        %3798 = vmatpush1.msra.mxu0 0.0
        %3799 = vmatprep.subr.mxu0 0.0
        %3800 = vmatpush1.msra.mxu0 0.0
        %3801 = vmatprep.subr.mxu0 0.0
        %3802 = vmatpush1.msra.mxu0 0.0
        %3803 = vmatprep.subr.mxu0 0.0
        %3804 = vmatpush1.msra.mxu0 0.0
        %3805 = vmatprep.subr.mxu0 0.0
        %3806 = vmatpush1.msra.mxu0 0.0
        %3807 = vmatprep.subr.mxu0 0.0
        %3808 = vmatpush1.msra.mxu0 0.0
        %3809 = vmatprep.subr.mxu0 0.0
        %3810 = vmatpush1.msra.mxu0 0.0
        %3811 = vmatprep.subr.mxu0 0.0
        %3812 = vmatpush1.msra.mxu0 0.0
        %3813 = vmatprep.mubr.f32.mxu0 0.0
        %3814 = vmatmul.mubr.f32.gmra.mrb[0].mxu0 %v3744
        %v3815 = vpop.f32.mrb[0].mxu0
        %v3816 = vadd.f32 %v3068, %v3815
        %v3817 = vpop.f32.mrb[0].mxu0
        %3818 = vmatprep.mubr.f32.mxu0 0.0
        %3819 = vmatmul.mubr.f32.gmra.mrb[0].mxu0 %v3747
        %v3820 = vpop.f32.mrb[0].mxu0
        %v3821 = vadd.f32 %v3068, %v3820
        %v3822 = vpop.f32.mrb[0].mxu0
        %3823 = vdwg.mxu0
        %vm3824 = vcmp.gt.f32.partialorder %v3816, 0.0
        %vm3825 = vcmp.gt.f32.partialorder %v3821, 0.0
        %v3826 = vmul.f32 %v3816, 0.01
        %v3827 = vmul.f32 %v3821, 0.01
        %v3828 = vsel %vm3824, %v3816, %v3826
        %v3829 = vsel %vm3825, %v3821, %v3827
        %v3831 = vsel %vm1565, %v3828, 0
        %v3834 = vsel %vm1565, %v3829, 0
        %3836 = vmatprep.subr.mxu0 0.0
        %3837 = vmatpush1.msra.mxu0 %v3157
        %3838 = vmatprep.subr.mxu0 0.0
        %3839 = vmatpush1.msra.mxu0 %v3158
        %3840 = vmatprep.subr.mxu0 0.0
        %3841 = vmatpush1.msra.mxu0 %v3159
        %3842 = vmatprep.subr.mxu0 0.0
        %3843 = vmatpush1.msra.mxu0 %v3160
        %3844 = vmatprep.subr.mxu0 0.0
        %3845 = vmatpush1.msra.mxu0 0.0
        %3846 = vmatprep.subr.mxu0 0.0
        %3847 = vmatpush1.msra.mxu0 0.0
        %3848 = vmatprep.subr.mxu0 0.0
        %3849 = vmatpush1.msra.mxu0 0.0
        %3850 = vmatprep.subr.mxu0 0.0
        %3851 = vmatpush1.msra.mxu0 0.0
        %3852 = vmatprep.subr.mxu0 0.0
        %3853 = vmatpush1.msra.mxu0 0.0
        %3854 = vmatprep.subr.mxu0 0.0
        %3855 = vmatpush1.msra.mxu0 0.0
        %3856 = vmatprep.subr.mxu0 0.0
        %3857 = vmatpush1.msra.mxu0 0.0
        %3858 = vmatprep.subr.mxu0 0.0
        %3859 = vmatpush1.msra.mxu0 0.0
        %3860 = vmatprep.subr.mxu0 0.0
        %3861 = vmatpush1.msra.mxu0 0.0
        %3862 = vmatprep.subr.mxu0 0.0
        %3863 = vmatpush1.msra.mxu0 0.0
        %3864 = vmatprep.subr.mxu0 0.0
        %3865 = vmatpush1.msra.mxu0 0.0
        %3866 = vmatprep.subr.mxu0 0.0
        %3867 = vmatpush1.msra.mxu0 0.0
        %3868 = vmatprep.subr.mxu0 0.0
        %3869 = vmatpush1.msra.mxu0 0.0
        %3870 = vmatprep.subr.mxu0 0.0
        %3871 = vmatpush1.msra.mxu0 0.0
        %3872 = vmatprep.subr.mxu0 0.0
        %3873 = vmatpush1.msra.mxu0 0.0
        %3874 = vmatprep.subr.mxu0 0.0
        %3875 = vmatpush1.msra.mxu0 0.0
        %3876 = vmatprep.subr.mxu0 0.0
        %3877 = vmatpush1.msra.mxu0 0.0
        %3878 = vmatprep.subr.mxu0 0.0
        %3879 = vmatpush1.msra.mxu0 0.0
        %3880 = vmatprep.subr.mxu0 0.0
        %3881 = vmatpush1.msra.mxu0 0.0
        %3882 = vmatprep.subr.mxu0 0.0
        %3883 = vmatpush1.msra.mxu0 0.0
        %3884 = vmatprep.subr.mxu0 0.0
        %3885 = vmatpush1.msra.mxu0 0.0
        %3886 = vmatprep.subr.mxu0 0.0
        %3887 = vmatpush1.msra.mxu0 0.0
        %3888 = vmatprep.subr.mxu0 0.0
        %3889 = vmatpush1.msra.mxu0 0.0
        %3890 = vmatprep.subr.mxu0 0.0
        %3891 = vmatpush1.msra.mxu0 0.0
        %3892 = vmatprep.subr.mxu0 0.0
        %3893 = vmatpush1.msra.mxu0 0.0
        %3894 = vmatprep.subr.mxu0 0.0
        %3895 = vmatpush1.msra.mxu0 0.0
        %3896 = vmatprep.subr.mxu0 0.0
        %3897 = vmatpush1.msra.mxu0 0.0
        %3898 = vmatprep.subr.mxu0 0.0
        %3899 = vmatpush1.msra.mxu0 0.0
        %3900 = vmatprep.mubr.f32.mxu0 0.0
        %3901 = vmatmul.mubr.f32.gmra.mrb[0].mxu0 %v3831
        %v3902 = vpop.f32.mrb[0].mxu0
        %v3903 = vadd.f32 %v3166, %v3902
        %v3904 = vpop.f32.mrb[0].mxu0
        %3905 = vmatprep.mubr.f32.mxu0 0.0
        %3906 = vmatmul.mubr.f32.gmra.mrb[0].mxu0 %v3834
        %v3907 = vpop.f32.mrb[0].mxu0
        %v3908 = vadd.f32 %v3166, %v3907
        %v3909 = vpop.f32.mrb[0].mxu0
        %3910 = vdwg.mxu0
        %vm3911 = vcmp.gt.f32.partialorder %v3903, 0.0
        %vm3912 = vcmp.gt.f32.partialorder %v3908, 0.0
        %v3913 = vmul.f32 %v3903, 0.01
        %v3914 = vmul.f32 %v3908, 0.01
        %v3915 = vsel %vm3911, %v3903, %v3913
        %v3916 = vsel %vm3912, %v3908, %v3914
        %3917 = vmatprep.subr.mxu0 0.0
        %3918 = vmatpush1.msra.mxu0 %v3915
        %3919 = vmatprep.subr.mxu0 0.0
        %3920 = vmatpush1.msra.mxu0 %v3916
        %3921 = vmatprep.subr.mxu0 0.0
        %3922 = vmatpush1.msra.mxu0 0.0
        %3923 = vmatprep.subr.mxu0 0.0
        %3924 = vmatpush1.msra.mxu0 0.0
        %3925 = vmatprep.subr.mxu0 0.0
        %3926 = vmatpush1.msra.mxu0 0.0
        %3927 = vmatprep.subr.mxu0 0.0
        %3928 = vmatpush1.msra.mxu0 0.0
        %3929 = vmatprep.subr.mxu0 0.0
        %3930 = vmatpush1.msra.mxu0 0.0
        %3931 = vmatprep.subr.mxu0 0.0
        %3932 = vmatpush1.msra.mxu0 0.0
        %3933 = vmatprep.subr.mxu0 0.0
        %3934 = vmatpush1.msra.mxu0 0.0
        %3935 = vmatprep.subr.mxu0 0.0
        %3936 = vmatpush1.msra.mxu0 0.0
        %3937 = vmatprep.subr.mxu0 0.0
        %3938 = vmatpush1.msra.mxu0 0.0
        %3939 = vmatprep.subr.mxu0 0.0
        %3940 = vmatpush1.msra.mxu0 0.0
        %3941 = vmatprep.subr.mxu0 0.0
        %3942 = vmatpush1.msra.mxu0 0.0
        %3943 = vmatprep.subr.mxu0 0.0
        %3944 = vmatpush1.msra.mxu0 0.0
        %3945 = vmatprep.subr.mxu0 0.0
        %3946 = vmatpush1.msra.mxu0 0.0
        %3947 = vmatprep.subr.mxu0 0.0
        %3948 = vmatpush1.msra.mxu0 0.0
        %3949 = vmatprep.subr.mxu0 0.0
        %3950 = vmatpush1.msra.mxu0 0.0
        %3951 = vmatprep.subr.mxu0 0.0
        %3952 = vmatpush1.msra.mxu0 0.0
        %3953 = vmatprep.subr.mxu0 0.0
        %3954 = vmatpush1.msra.mxu0 0.0
        %3955 = vmatprep.subr.mxu0 0.0
        %3956 = vmatpush1.msra.mxu0 0.0
        %3957 = vmatprep.subr.mxu0 0.0
        %3958 = vmatpush1.msra.mxu0 0.0
        %3959 = vmatprep.subr.mxu0 0.0
        %3960 = vmatpush1.msra.mxu0 0.0
        %3961 = vmatprep.subr.mxu0 0.0
        %3962 = vmatpush1.msra.mxu0 0.0
        %3963 = vmatprep.subr.mxu0 0.0
        %3964 = vmatpush1.msra.mxu0 0.0
        %3965 = vmatprep.subr.mxu0 0.0
        %3966 = vmatpush1.msra.mxu0 0.0
        %3967 = vmatprep.subr.mxu0 0.0
        %3968 = vmatpush1.msra.mxu0 0.0
        %3969 = vmatprep.subr.mxu0 0.0
        %3970 = vmatpush1.msra.mxu0 0.0
        %3971 = vmatprep.subr.mxu0 0.0
        %3972 = vmatpush1.msra.mxu0 0.0
        %3973 = vmatprep.subr.mxu0 0.0
        %3974 = vmatpush1.msra.mxu0 0.0
        %3975 = vmatprep.subr.mxu0 0.0
        %3976 = vmatpush1.msra.mxu0 0.0
        %3977 = vmatprep.subr.mxu0 0.0
        %3978 = vmatpush1.msra.mxu0 0.0
        %3979 = vmatprep.subr.mxu0 0.0
        %3980 = vmatpush1.msra.mxu0 0.0
        %3981 = vmatprep.mubr.f32.mxu0 0.0
        %3982 = vmatmul.mubr.f32.gmra.mrb[0].mxu0 %v2198
        %v3983 = vpop.f32.mrb[0].mxu0
        %v3984 = vadd.f32 0.0, %v3983
        %v3985 = vpop.f32.mrb[0].mxu0
        %3986 = vmatprep.mubr.f32.mxu0 0.0
        %3987 = vmatmul.mubr.f32.gmra.mrb[0].mxu0 %v2201
        %v3988 = vpop.f32.mrb[0].mxu0
        %v3989 = vadd.f32 0.0, %v3988
        %v3990 = vpop.f32.mrb[0].mxu0
        %3991 = vdwg.mxu0
        %3992 = vmatprep.subr.mxu0 0.0
        %3993 = vmatpush1.msra.mxu0 %v3915
        %3994 = vmatprep.subr.mxu0 0.0
        %3995 = vmatpush1.msra.mxu0 %v3916
        %3996 = vmatprep.subr.mxu0 0.0
        %3997 = vmatpush1.msra.mxu0 0.0
        %3998 = vmatprep.subr.mxu0 0.0
        %3999 = vmatpush1.msra.mxu0 0.0
        %4000 = vmatprep.subr.mxu0 0.0
        %4001 = vmatpush1.msra.mxu0 0.0
        %4002 = vmatprep.subr.mxu0 0.0
        %4003 = vmatpush1.msra.mxu0 0.0
        %4004 = vmatprep.subr.mxu0 0.0
        %4005 = vmatpush1.msra.mxu0 0.0
        %4006 = vmatprep.subr.mxu0 0.0
        %4007 = vmatpush1.msra.mxu0 0.0
        %4008 = vmatprep.subr.mxu0 0.0
        %4009 = vmatpush1.msra.mxu0 0.0
        %4010 = vmatprep.subr.mxu0 0.0
        %4011 = vmatpush1.msra.mxu0 0.0
        %4012 = vmatprep.subr.mxu0 0.0
        %4013 = vmatpush1.msra.mxu0 0.0
        %4014 = vmatprep.subr.mxu0 0.0
        %4015 = vmatpush1.msra.mxu0 0.0
        %4016 = vmatprep.subr.mxu0 0.0
        %4017 = vmatpush1.msra.mxu0 0.0
        %4018 = vmatprep.subr.mxu0 0.0
        %4019 = vmatpush1.msra.mxu0 0.0
        %4020 = vmatprep.subr.mxu0 0.0
        %4021 = vmatpush1.msra.mxu0 0.0
        %4022 = vmatprep.subr.mxu0 0.0
        %4023 = vmatpush1.msra.mxu0 0.0
        %4024 = vmatprep.subr.mxu0 0.0
        %4025 = vmatpush1.msra.mxu0 0.0
        %4026 = vmatprep.subr.mxu0 0.0
        %4027 = vmatpush1.msra.mxu0 0.0
        %4028 = vmatprep.subr.mxu0 0.0
        %4029 = vmatpush1.msra.mxu0 0.0
        %4030 = vmatprep.subr.mxu0 0.0
        %4031 = vmatpush1.msra.mxu0 0.0
        %4032 = vmatprep.subr.mxu0 0.0
        %4033 = vmatpush1.msra.mxu0 0.0
        %4034 = vmatprep.subr.mxu0 0.0
        %4035 = vmatpush1.msra.mxu0 0.0
        %4036 = vmatprep.subr.mxu0 0.0
        %4037 = vmatpush1.msra.mxu0 0.0
        %4038 = vmatprep.subr.mxu0 0.0
        %4039 = vmatpush1.msra.mxu0 0.0
        %4040 = vmatprep.subr.mxu0 0.0
        %4041 = vmatpush1.msra.mxu0 0.0
        %4042 = vmatprep.subr.mxu0 0.0
        %4043 = vmatpush1.msra.mxu0 0.0
        %4044 = vmatprep.subr.mxu0 0.0
        %4045 = vmatpush1.msra.mxu0 0.0
        %4046 = vmatprep.subr.mxu0 0.0
        %4047 = vmatpush1.msra.mxu0 0.0
        %4048 = vmatprep.subr.mxu0 0.0
        %4049 = vmatpush1.msra.mxu0 0.0
        %4050 = vmatprep.subr.mxu0 0.0
        %4051 = vmatpush1.msra.mxu0 0.0
        %4052 = vmatprep.subr.mxu0 0.0
        %4053 = vmatpush1.msra.mxu0 0.0
        %4054 = vmatprep.subr.mxu0 0.0
        %4055 = vmatpush1.msra.mxu0 0.0
        %4056 = vmatprep.mubr.f32.mxu0 0.0
        %4057 = vmatmul.mubr.f32.gmra.mrb[0].mxu0 %v2280
        %v4058 = vpop.f32.mrb[0].mxu0
        %v4059 = vadd.f32 0.0, %v4058
        %v4060 = vpop.f32.mrb[0].mxu0
        %4061 = vmatprep.mubr.f32.mxu0 0.0
        %4062 = vmatmul.mubr.f32.gmra.mrb[0].mxu0 %v2283
        %v4063 = vpop.f32.mrb[0].mxu0
        %v4064 = vadd.f32 0.0, %v4063
        %v4065 = vpop.f32.mrb[0].mxu0
        %4066 = vdwg.mxu0
        %v4068 = vsel %vm1565, %v4059, 0
        %v4071 = vsel %vm1565, %v4064, 0
        %4073 = vmatprep.subr.mxu0 0.0
        %4074 = vmatpush1.msra.mxu0 %v2685
        %4075 = vmatprep.subr.mxu0 0.0
        %4076 = vmatpush1.msra.mxu0 %v2686
        %4077 = vmatprep.subr.mxu0 0.0
        %4078 = vmatpush1.msra.mxu0 %v2687
        %4079 = vmatprep.subr.mxu0 0.0
        %4080 = vmatpush1.msra.mxu0 %v2688
        %4081 = vmatprep.subr.mxu0 0.0
        %4082 = vmatpush1.msra.mxu0 0.0
        %4083 = vmatprep.subr.mxu0 0.0
        %4084 = vmatpush1.msra.mxu0 0.0
        %4085 = vmatprep.subr.mxu0 0.0
        %4086 = vmatpush1.msra.mxu0 0.0
        %4087 = vmatprep.subr.mxu0 0.0
        %4088 = vmatpush1.msra.mxu0 0.0
        %4089 = vmatprep.subr.mxu0 0.0
        %4090 = vmatpush1.msra.mxu0 0.0
        %4091 = vmatprep.subr.mxu0 0.0
        %4092 = vmatpush1.msra.mxu0 0.0
        %4093 = vmatprep.subr.mxu0 0.0
        %4094 = vmatpush1.msra.mxu0 0.0
        %4095 = vmatprep.subr.mxu0 0.0
        %4096 = vmatpush1.msra.mxu0 0.0
        %4097 = vmatprep.subr.mxu0 0.0
        %4098 = vmatpush1.msra.mxu0 0.0
        %4099 = vmatprep.subr.mxu0 0.0
        %4100 = vmatpush1.msra.mxu0 0.0
        %4101 = vmatprep.subr.mxu0 0.0
        %4102 = vmatpush1.msra.mxu0 0.0
        %4103 = vmatprep.subr.mxu0 0.0
        %4104 = vmatpush1.msra.mxu0 0.0
        %4105 = vmatprep.subr.mxu0 0.0
        %4106 = vmatpush1.msra.mxu0 0.0
        %4107 = vmatprep.subr.mxu0 0.0
        %4108 = vmatpush1.msra.mxu0 0.0
        %4109 = vmatprep.subr.mxu0 0.0
        %4110 = vmatpush1.msra.mxu0 0.0
        %4111 = vmatprep.subr.mxu0 0.0
        %4112 = vmatpush1.msra.mxu0 0.0
        %4113 = vmatprep.subr.mxu0 0.0
        %4114 = vmatpush1.msra.mxu0 0.0
        %4115 = vmatprep.subr.mxu0 0.0
        %4116 = vmatpush1.msra.mxu0 0.0
        %4117 = vmatprep.subr.mxu0 0.0
        %4118 = vmatpush1.msra.mxu0 0.0
        %4119 = vmatprep.subr.mxu0 0.0
        %4120 = vmatpush1.msra.mxu0 0.0
        %4121 = vmatprep.subr.mxu0 0.0
        %4122 = vmatpush1.msra.mxu0 0.0
        %4123 = vmatprep.subr.mxu0 0.0
        %4124 = vmatpush1.msra.mxu0 0.0
        %4125 = vmatprep.subr.mxu0 0.0
        %4126 = vmatpush1.msra.mxu0 0.0
        %4127 = vmatprep.subr.mxu0 0.0
        %4128 = vmatpush1.msra.mxu0 0.0
        %4129 = vmatprep.subr.mxu0 0.0
        %4130 = vmatpush1.msra.mxu0 0.0
        %4131 = vmatprep.subr.mxu0 0.0
        %4132 = vmatpush1.msra.mxu0 0.0
        %4133 = vmatprep.subr.mxu0 0.0
        %4134 = vmatpush1.msra.mxu0 0.0
        %4135 = vmatprep.subr.mxu0 0.0
        %4136 = vmatpush1.msra.mxu0 0.0
        %4137 = vmatprep.mubr.f32.mxu0 0.0
        %4138 = vmatmul.mubr.f32.gmra.mrb[0].mxu0 %v4068
        %v4139 = vpop.f32.mrb[0].mxu0
        %v4140 = vadd.f32 0.0, %v4139
        %v4141 = vpop.f32.mrb[0].mxu0
        %4142 = vmatprep.mubr.f32.mxu0 0.0
        %4143 = vmatmul.mubr.f32.gmra.mrb[0].mxu0 %v4071
        %v4144 = vpop.f32.mrb[0].mxu0
        %v4145 = vadd.f32 0.0, %v4144
        %v4146 = vpop.f32.mrb[0].mxu0
        %4147 = vdwg.mxu0
        %v4149 = vsel %vm1565, %v3984, 0
        %v4152 = vsel %vm1565, %v3989, 0
        %4154 = vmatprep.subr.mxu0 0.0
        %4155 = vmatpush1.msra.mxu0 %v2606
        %4156 = vmatprep.subr.mxu0 0.0
        %4157 = vmatpush1.msra.mxu0 %v2607
        %4158 = vmatprep.subr.mxu0 0.0
        %4159 = vmatpush1.msra.mxu0 %v2608
        %4160 = vmatprep.subr.mxu0 0.0
        %4161 = vmatpush1.msra.mxu0 %v2609
        %4162 = vmatprep.subr.mxu0 0.0
        %4163 = vmatpush1.msra.mxu0 0.0
        %4164 = vmatprep.subr.mxu0 0.0
        %4165 = vmatpush1.msra.mxu0 0.0
        %4166 = vmatprep.subr.mxu0 0.0
        %4167 = vmatpush1.msra.mxu0 0.0
        %4168 = vmatprep.subr.mxu0 0.0
        %4169 = vmatpush1.msra.mxu0 0.0
        %4170 = vmatprep.subr.mxu0 0.0
        %4171 = vmatpush1.msra.mxu0 0.0
        %4172 = vmatprep.subr.mxu0 0.0
        %4173 = vmatpush1.msra.mxu0 0.0
        %4174 = vmatprep.subr.mxu0 0.0
        %4175 = vmatpush1.msra.mxu0 0.0
        %4176 = vmatprep.subr.mxu0 0.0
        %4177 = vmatpush1.msra.mxu0 0.0
        %4178 = vmatprep.subr.mxu0 0.0
        %4179 = vmatpush1.msra.mxu0 0.0
        %4180 = vmatprep.subr.mxu0 0.0
        %4181 = vmatpush1.msra.mxu0 0.0
        %4182 = vmatprep.subr.mxu0 0.0
        %4183 = vmatpush1.msra.mxu0 0.0
        %4184 = vmatprep.subr.mxu0 0.0
        %4185 = vmatpush1.msra.mxu0 0.0
        %4186 = vmatprep.subr.mxu0 0.0
        %4187 = vmatpush1.msra.mxu0 0.0
        %4188 = vmatprep.subr.mxu0 0.0
        %4189 = vmatpush1.msra.mxu0 0.0
        %4190 = vmatprep.subr.mxu0 0.0
        %4191 = vmatpush1.msra.mxu0 0.0
        %4192 = vmatprep.subr.mxu0 0.0
        %4193 = vmatpush1.msra.mxu0 0.0
        %4194 = vmatprep.subr.mxu0 0.0
        %4195 = vmatpush1.msra.mxu0 0.0
        %4196 = vmatprep.subr.mxu0 0.0
        %4197 = vmatpush1.msra.mxu0 0.0
        %4198 = vmatprep.subr.mxu0 0.0
        %4199 = vmatpush1.msra.mxu0 0.0
        %4200 = vmatprep.subr.mxu0 0.0
        %4201 = vmatpush1.msra.mxu0 0.0
        %4202 = vmatprep.subr.mxu0 0.0
        %4203 = vmatpush1.msra.mxu0 0.0
        %4204 = vmatprep.subr.mxu0 0.0
        %4205 = vmatpush1.msra.mxu0 0.0
        %4206 = vmatprep.subr.mxu0 0.0
        %4207 = vmatpush1.msra.mxu0 0.0
        %4208 = vmatprep.subr.mxu0 0.0
        %4209 = vmatpush1.msra.mxu0 0.0
        %4210 = vmatprep.subr.mxu0 0.0
        %4211 = vmatpush1.msra.mxu0 0.0
        %4212 = vmatprep.subr.mxu0 0.0
        %4213 = vmatpush1.msra.mxu0 0.0
        %4214 = vmatprep.subr.mxu0 0.0
        %4215 = vmatpush1.msra.mxu0 0.0
        %4216 = vmatprep.subr.mxu0 0.0
        %4217 = vmatpush1.msra.mxu0 0.0
        %4218 = vmatprep.mubr.f32.mxu0 0.0
        %4219 = vmatmul.mubr.f32.gmra.mrb[0].mxu0 %v4149
        %v4220 = vpop.f32.mrb[0].mxu0
        %v4221 = vadd.f32 %v4140, %v4220
        %v4222 = vpop.f32.mrb[0].mxu0
        %4223 = vmatprep.mubr.f32.mxu0 0.0
        %4224 = vmatmul.mubr.f32.gmra.mrb[0].mxu0 %v4152
        %v4225 = vpop.f32.mrb[0].mxu0
        %v4226 = vadd.f32 %v4145, %v4225
        %v4227 = vpop.f32.mrb[0].mxu0
        %4228 = vdwg.mxu0
        %v4229 = vadd.f32 %v4221, %v2523
        %v4230 = vadd.f32 %v4226, %v2528
        %v4231 = vadd.f32 %v4229, %v2858
        %v4232 = vadd.f32 %v4230, %v2858
        %vm4233 = vcmp.gt.f32.partialorder %v4231, 0.0
        %vm4234 = vcmp.gt.f32.partialorder %v4232, 0.0
        %v4235 = vmul.f32 %v4231, 0.01
        %v4236 = vmul.f32 %v4232, 0.01
        %v4237 = vsel %vm4233, %v4231, %v4235
        %v4238 = vsel %vm4234, %v4232, %v4236
        %v4240 = vsel %vm1565, %v4237, 0
        %v4243 = vsel %vm1565, %v4238, 0
        %4245 = vmatprep.subr.mxu0 0.0
        %4246 = vmatpush1.msra.mxu0 %v2868
        %4247 = vmatprep.subr.mxu0 0.0
        %4248 = vmatpush1.msra.mxu0 %v2869
        %4249 = vmatprep.subr.mxu0 0.0
        %4250 = vmatpush1.msra.mxu0 %v2870
        %4251 = vmatprep.subr.mxu0 0.0
        %4252 = vmatpush1.msra.mxu0 %v2871
        %4253 = vmatprep.subr.mxu0 0.0
        %4254 = vmatpush1.msra.mxu0 0.0
        %4255 = vmatprep.subr.mxu0 0.0
        %4256 = vmatpush1.msra.mxu0 0.0
        %4257 = vmatprep.subr.mxu0 0.0
        %4258 = vmatpush1.msra.mxu0 0.0
        %4259 = vmatprep.subr.mxu0 0.0
        %4260 = vmatpush1.msra.mxu0 0.0
        %4261 = vmatprep.subr.mxu0 0.0
        %4262 = vmatpush1.msra.mxu0 0.0
        %4263 = vmatprep.subr.mxu0 0.0
        %4264 = vmatpush1.msra.mxu0 0.0
        %4265 = vmatprep.subr.mxu0 0.0
        %4266 = vmatpush1.msra.mxu0 0.0
        %4267 = vmatprep.subr.mxu0 0.0
        %4268 = vmatpush1.msra.mxu0 0.0
        %4269 = vmatprep.subr.mxu0 0.0
        %4270 = vmatpush1.msra.mxu0 0.0
        %4271 = vmatprep.subr.mxu0 0.0
        %4272 = vmatpush1.msra.mxu0 0.0
        %4273 = vmatprep.subr.mxu0 0.0
        %4274 = vmatpush1.msra.mxu0 0.0
        %4275 = vmatprep.subr.mxu0 0.0
        %4276 = vmatpush1.msra.mxu0 0.0
        %4277 = vmatprep.subr.mxu0 0.0
        %4278 = vmatpush1.msra.mxu0 0.0
        %4279 = vmatprep.subr.mxu0 0.0
        %4280 = vmatpush1.msra.mxu0 0.0
        %4281 = vmatprep.subr.mxu0 0.0
        %4282 = vmatpush1.msra.mxu0 0.0
        %4283 = vmatprep.subr.mxu0 0.0
        %4284 = vmatpush1.msra.mxu0 0.0
        %4285 = vmatprep.subr.mxu0 0.0
        %4286 = vmatpush1.msra.mxu0 0.0
        %4287 = vmatprep.subr.mxu0 0.0
        %4288 = vmatpush1.msra.mxu0 0.0
        %4289 = vmatprep.subr.mxu0 0.0
        %4290 = vmatpush1.msra.mxu0 0.0
        %4291 = vmatprep.subr.mxu0 0.0
        %4292 = vmatpush1.msra.mxu0 0.0
        %4293 = vmatprep.subr.mxu0 0.0
        %4294 = vmatpush1.msra.mxu0 0.0
        %4295 = vmatprep.subr.mxu0 0.0
        %4296 = vmatpush1.msra.mxu0 0.0
        %4297 = vmatprep.subr.mxu0 0.0
        %4298 = vmatpush1.msra.mxu0 0.0
        %4299 = vmatprep.subr.mxu0 0.0
        %4300 = vmatpush1.msra.mxu0 0.0
        %4301 = vmatprep.subr.mxu0 0.0
        %4302 = vmatpush1.msra.mxu0 0.0
        %4303 = vmatprep.subr.mxu0 0.0
        %4304 = vmatpush1.msra.mxu0 0.0
        %4305 = vmatprep.subr.mxu0 0.0
        %4306 = vmatpush1.msra.mxu0 0.0
        %4307 = vmatprep.subr.mxu0 0.0
        %4308 = vmatpush1.msra.mxu0 0.0
        %4309 = vmatprep.mubr.f32.mxu0 0.0
        %4310 = vmatmul.mubr.f32.gmra.mrb[0].mxu0 %v4240
        %v4311 = vpop.f32.mrb[0].mxu0
        %v4312 = vadd.f32 %v2877, %v4311
        %v4313 = vpop.f32.mrb[0].mxu0
        %4314 = vmatprep.mubr.f32.mxu0 0.0
        %4315 = vmatmul.mubr.f32.gmra.mrb[0].mxu0 %v4243
        %v4316 = vpop.f32.mrb[0].mxu0
        %v4317 = vadd.f32 %v2877, %v4316
        %v4318 = vpop.f32.mrb[0].mxu0
        %4319 = vdwg.mxu0
        %vm4320 = vcmp.gt.f32.partialorder %v4312, 0.0
        %vm4321 = vcmp.gt.f32.partialorder %v4317, 0.0
        %v4322 = vmul.f32 %v4312, 0.01
        %v4323 = vmul.f32 %v4317, 0.01
        %v4324 = vsel %vm4320, %v4312, %v4322
        %v4325 = vsel %vm4321, %v4317, %v4323
        %4326 = vmatprep.subr.mxu0 0.0
        %4327 = vmatpush1.msra.mxu0 %v4324
        %4328 = vmatprep.subr.mxu0 0.0
        %4329 = vmatpush1.msra.mxu0 %v4325
        %4330 = vmatprep.subr.mxu0 0.0
        %4331 = vmatpush1.msra.mxu0 0.0
        %4332 = vmatprep.subr.mxu0 0.0
        %4333 = vmatpush1.msra.mxu0 0.0
        %4334 = vmatprep.subr.mxu0 0.0
        %4335 = vmatpush1.msra.mxu0 0.0
        %4336 = vmatprep.subr.mxu0 0.0
        %4337 = vmatpush1.msra.mxu0 0.0
        %4338 = vmatprep.subr.mxu0 0.0
        %4339 = vmatpush1.msra.mxu0 0.0
        %4340 = vmatprep.subr.mxu0 0.0
        %4341 = vmatpush1.msra.mxu0 0.0
        %4342 = vmatprep.subr.mxu0 0.0
        %4343 = vmatpush1.msra.mxu0 0.0
        %4344 = vmatprep.subr.mxu0 0.0
        %4345 = vmatpush1.msra.mxu0 0.0
        %4346 = vmatprep.subr.mxu0 0.0
        %4347 = vmatpush1.msra.mxu0 0.0
        %4348 = vmatprep.subr.mxu0 0.0
        %4349 = vmatpush1.msra.mxu0 0.0
        %4350 = vmatprep.subr.mxu0 0.0
        %4351 = vmatpush1.msra.mxu0 0.0
        %4352 = vmatprep.subr.mxu0 0.0
        %4353 = vmatpush1.msra.mxu0 0.0
        %4354 = vmatprep.subr.mxu0 0.0
        %4355 = vmatpush1.msra.mxu0 0.0
        %4356 = vmatprep.subr.mxu0 0.0
        %4357 = vmatpush1.msra.mxu0 0.0
        %4358 = vmatprep.subr.mxu0 0.0
        %4359 = vmatpush1.msra.mxu0 0.0
        %4360 = vmatprep.subr.mxu0 0.0
        %4361 = vmatpush1.msra.mxu0 0.0
        %4362 = vmatprep.subr.mxu0 0.0
        %4363 = vmatpush1.msra.mxu0 0.0
        %4364 = vmatprep.subr.mxu0 0.0
        %4365 = vmatpush1.msra.mxu0 0.0
        %4366 = vmatprep.subr.mxu0 0.0
        %4367 = vmatpush1.msra.mxu0 0.0
        %4368 = vmatprep.subr.mxu0 0.0
        %4369 = vmatpush1.msra.mxu0 0.0
        %4370 = vmatprep.subr.mxu0 0.0
        %4371 = vmatpush1.msra.mxu0 0.0
        %4372 = vmatprep.subr.mxu0 0.0
        %4373 = vmatpush1.msra.mxu0 0.0
        %4374 = vmatprep.subr.mxu0 0.0
        %4375 = vmatpush1.msra.mxu0 0.0
        %4376 = vmatprep.subr.mxu0 0.0
        %4377 = vmatpush1.msra.mxu0 0.0
        %4378 = vmatprep.subr.mxu0 0.0
        %4379 = vmatpush1.msra.mxu0 0.0
        %4380 = vmatprep.subr.mxu0 0.0
        %4381 = vmatpush1.msra.mxu0 0.0
        %4382 = vmatprep.subr.mxu0 0.0
        %4383 = vmatpush1.msra.mxu0 0.0
        %4384 = vmatprep.subr.mxu0 0.0
        %4385 = vmatpush1.msra.mxu0 0.0
        %4386 = vmatprep.subr.mxu0 0.0
        %4387 = vmatpush1.msra.mxu0 0.0
        %4388 = vmatprep.subr.mxu0 0.0
        %4389 = vmatpush1.msra.mxu0 0.0
        %4390 = vmatprep.mubr.f32.mxu0 0.0
        %4391 = vmatmul.mubr.f32.gmra.mrb[0].mxu0 %v2967
        %v4392 = vpop.f32.mrb[0].mxu0
        %v4393 = vadd.f32 0.0, %v4392
        %v4394 = vpop.f32.mrb[0].mxu0
        %4395 = vmatprep.mubr.f32.mxu0 0.0
        %4396 = vmatmul.mubr.f32.gmra.mrb[0].mxu0 %v2970
        %v4397 = vpop.f32.mrb[0].mxu0
        %v4398 = vadd.f32 0.0, %v4397
        %v4399 = vpop.f32.mrb[0].mxu0
        %4400 = vdwg.mxu0
        %v4401 = vmul.f32 %v4393, %v3050
        %v4402 = vmul.f32 %v4398, %v3055
        %v4403 = vadd.f32 %v3741, %v4401
        %v4404 = vadd.f32 %v3742, %v4402
        %v4405 = vld [vmem:[#allocation30] sm:$0xff]
        %v4406 = vld [vmem:[#allocation30 + $0x8] sm:$0xff]
        %v4407 = vld [vmem:[#allocation30 + $0x10] sm:$0xff]
        %v4408 = vld [vmem:[#allocation30 + $0x18] sm:$0xff]
        %v4409 = vld [vmem:[#allocation32] sm:$0x1]
        %v4411 = vlaneseq
        %v4412 = vshrl.u32 %v4411, 7
        %v4413 = vsub.s32 0, %v4412
        %v4414 = vrot.slane %v4409, %v4413
        %v4417 = vsel %vm1565, %v4403, 0
        %v4420 = vsel %vm1565, %v4404, 0
        %4422 = vmatprep.subr.mxu0 0.0
        %4423 = vmatpush1.msra.mxu0 %v4405
        %4424 = vmatprep.subr.mxu0 0.0
        %4425 = vmatpush1.msra.mxu0 %v4406
        %4426 = vmatprep.subr.mxu0 0.0
        %4427 = vmatpush1.msra.mxu0 %v4407
        %4428 = vmatprep.subr.mxu0 0.0
        %4429 = vmatpush1.msra.mxu0 %v4408
        %4430 = vmatprep.subr.mxu0 0.0
        %4431 = vmatpush1.msra.mxu0 0.0
        %4432 = vmatprep.subr.mxu0 0.0
        %4433 = vmatpush1.msra.mxu0 0.0
        %4434 = vmatprep.subr.mxu0 0.0
        %4435 = vmatpush1.msra.mxu0 0.0
        %4436 = vmatprep.subr.mxu0 0.0
        %4437 = vmatpush1.msra.mxu0 0.0
        %4438 = vmatprep.subr.mxu0 0.0
        %4439 = vmatpush1.msra.mxu0 0.0
        %4440 = vmatprep.subr.mxu0 0.0
        %4441 = vmatpush1.msra.mxu0 0.0
        %4442 = vmatprep.subr.mxu0 0.0
        %4443 = vmatpush1.msra.mxu0 0.0
        %4444 = vmatprep.subr.mxu0 0.0
        %4445 = vmatpush1.msra.mxu0 0.0
        %4446 = vmatprep.subr.mxu0 0.0
        %4447 = vmatpush1.msra.mxu0 0.0
        %4448 = vmatprep.subr.mxu0 0.0
        %4449 = vmatpush1.msra.mxu0 0.0
        %4450 = vmatprep.subr.mxu0 0.0
        %4451 = vmatpush1.msra.mxu0 0.0
        %4452 = vmatprep.subr.mxu0 0.0
        %4453 = vmatpush1.msra.mxu0 0.0
        %4454 = vmatprep.subr.mxu0 0.0
        %4455 = vmatpush1.msra.mxu0 0.0
        %4456 = vmatprep.subr.mxu0 0.0
        %4457 = vmatpush1.msra.mxu0 0.0
        %4458 = vmatprep.subr.mxu0 0.0
        %4459 = vmatpush1.msra.mxu0 0.0
        %4460 = vmatprep.subr.mxu0 0.0
        %4461 = vmatpush1.msra.mxu0 0.0
        %4462 = vmatprep.subr.mxu0 0.0
        %4463 = vmatpush1.msra.mxu0 0.0
        %4464 = vmatprep.subr.mxu0 0.0
        %4465 = vmatpush1.msra.mxu0 0.0
        %4466 = vmatprep.subr.mxu0 0.0
        %4467 = vmatpush1.msra.mxu0 0.0
        %4468 = vmatprep.subr.mxu0 0.0
        %4469 = vmatpush1.msra.mxu0 0.0
        %4470 = vmatprep.subr.mxu0 0.0
        %4471 = vmatpush1.msra.mxu0 0.0
        %4472 = vmatprep.subr.mxu0 0.0
        %4473 = vmatpush1.msra.mxu0 0.0
        %4474 = vmatprep.subr.mxu0 0.0
        %4475 = vmatpush1.msra.mxu0 0.0
        %4476 = vmatprep.subr.mxu0 0.0
        %4477 = vmatpush1.msra.mxu0 0.0
        %4478 = vmatprep.subr.mxu0 0.0
        %4479 = vmatpush1.msra.mxu0 0.0
        %4480 = vmatprep.subr.mxu0 0.0
        %4481 = vmatpush1.msra.mxu0 0.0
        %4482 = vmatprep.subr.mxu0 0.0
        %4483 = vmatpush1.msra.mxu0 0.0
        %4484 = vmatprep.subr.mxu0 0.0
        %4485 = vmatpush1.msra.mxu0 0.0
        %4486 = vmatprep.mubr.f32.mxu0 0.0
        %4487 = vmatmul.mubr.f32.gmra.mrb[0].mxu0 %v4417
        %v4488 = vpop.f32.mrb[0].mxu0
        %v4489 = vadd.f32 %v4414, %v4488
        %v4490 = vpop.f32.mrb[0].mxu0
        %4491 = vmatprep.mubr.f32.mxu0 0.0
        %4492 = vmatmul.mubr.f32.gmra.mrb[0].mxu0 %v4420
        %v4493 = vpop.f32.mrb[0].mxu0
        %v4494 = vadd.f32 %v4414, %v4493
        %v4495 = vpop.f32.mrb[0].mxu0
        %4496 = vdwg.mxu0
        %vm4497 = vcmp.gt.f32.partialorder %v4489, 0.0
        %vm4498 = vcmp.gt.f32.partialorder %v4494, 0.0
        %v4499 = vmul.f32 %v4489, 0.01
        %v4500 = vmul.f32 %v4494, 0.01
        %v4501 = vsel %vm4497, %v4489, %v4499
        %v4502 = vsel %vm4498, %v4494, %v4500
        %v4503 = vld [vmem:[%s63] sm:$0xff]
        %v4504 = vld [vmem:[%s63 + $0x8] sm:$0xff]
        %v4505 = vld [vmem:[%s63 + $0x10] sm:$0xff]
        %v4506 = vld [vmem:[%s63 + $0x18] sm:$0xff]
        %v4507 = vld [vmem:[#allocation2] sm:$0x1]
        %v4509 = vlaneseq
        %v4510 = vshrl.u32 %v4509, 7
        %v4511 = vsub.s32 0, %v4510
        %v4512 = vrot.slane %v4507, %v4511
        %v4515 = vsel %vm1565, %v4501, 0
        %v4518 = vsel %vm1565, %v4502, 0
        %4520 = vmatprep.subr.mxu0 0.0
        %4521 = vmatpush1.msra.mxu0 %v4503
        %4522 = vmatprep.subr.mxu0 0.0
        %4523 = vmatpush1.msra.mxu0 %v4504
        %4524 = vmatprep.subr.mxu0 0.0
        %4525 = vmatpush1.msra.mxu0 %v4505
        %4526 = vmatprep.subr.mxu0 0.0
        %4527 = vmatpush1.msra.mxu0 %v4506
        %4528 = vmatprep.subr.mxu0 0.0
        %4529 = vmatpush1.msra.mxu0 0.0
        %4530 = vmatprep.subr.mxu0 0.0
        %4531 = vmatpush1.msra.mxu0 0.0
        %4532 = vmatprep.subr.mxu0 0.0
        %4533 = vmatpush1.msra.mxu0 0.0
        %4534 = vmatprep.subr.mxu0 0.0
        %4535 = vmatpush1.msra.mxu0 0.0
        %4536 = vmatprep.subr.mxu0 0.0
        %4537 = vmatpush1.msra.mxu0 0.0
        %4538 = vmatprep.subr.mxu0 0.0
        %4539 = vmatpush1.msra.mxu0 0.0
        %4540 = vmatprep.subr.mxu0 0.0
        %4541 = vmatpush1.msra.mxu0 0.0
        %4542 = vmatprep.subr.mxu0 0.0
        %4543 = vmatpush1.msra.mxu0 0.0
        %4544 = vmatprep.subr.mxu0 0.0
        %4545 = vmatpush1.msra.mxu0 0.0
        %4546 = vmatprep.subr.mxu0 0.0
        %4547 = vmatpush1.msra.mxu0 0.0
        %4548 = vmatprep.subr.mxu0 0.0
        %4549 = vmatpush1.msra.mxu0 0.0
        %4550 = vmatprep.subr.mxu0 0.0
        %4551 = vmatpush1.msra.mxu0 0.0
        %4552 = vmatprep.subr.mxu0 0.0
        %4553 = vmatpush1.msra.mxu0 0.0
        %4554 = vmatprep.subr.mxu0 0.0
        %4555 = vmatpush1.msra.mxu0 0.0
        %4556 = vmatprep.subr.mxu0 0.0
        %4557 = vmatpush1.msra.mxu0 0.0
        %4558 = vmatprep.subr.mxu0 0.0
        %4559 = vmatpush1.msra.mxu0 0.0
        %4560 = vmatprep.subr.mxu0 0.0
        %4561 = vmatpush1.msra.mxu0 0.0
        %4562 = vmatprep.subr.mxu0 0.0
        %4563 = vmatpush1.msra.mxu0 0.0
        %4564 = vmatprep.subr.mxu0 0.0
        %4565 = vmatpush1.msra.mxu0 0.0
        %4566 = vmatprep.subr.mxu0 0.0
        %4567 = vmatpush1.msra.mxu0 0.0
        %4568 = vmatprep.subr.mxu0 0.0
        %4569 = vmatpush1.msra.mxu0 0.0
        %4570 = vmatprep.subr.mxu0 0.0
        %4571 = vmatpush1.msra.mxu0 0.0
        %4572 = vmatprep.subr.mxu0 0.0
        %4573 = vmatpush1.msra.mxu0 0.0
        %4574 = vmatprep.subr.mxu0 0.0
        %4575 = vmatpush1.msra.mxu0 0.0
        %4576 = vmatprep.subr.mxu0 0.0
        %4577 = vmatpush1.msra.mxu0 0.0
        %4578 = vmatprep.subr.mxu0 0.0
        %4579 = vmatpush1.msra.mxu0 0.0
        %4580 = vmatprep.subr.mxu0 0.0
        %4581 = vmatpush1.msra.mxu0 0.0
        %4582 = vmatprep.subr.mxu0 0.0
        %4583 = vmatpush1.msra.mxu0 0.0
        %4584 = vmatprep.mubr.f32.mxu0 0.0
        %4585 = vmatmul.mubr.f32.gmra.mrb[0].mxu0 %v4515
        %v4586 = vpop.f32.mrb[0].mxu0
        %v4587 = vadd.f32 %v4512, %v4586
        %v4588 = vpop.f32.mrb[0].mxu0
        %4589 = vmatprep.mubr.f32.mxu0 0.0
        %4590 = vmatmul.mubr.f32.gmra.mrb[0].mxu0 %v4518
        %v4591 = vpop.f32.mrb[0].mxu0
        %v4592 = vadd.f32 %v4512, %v4591
        %v4593 = vpop.f32.mrb[0].mxu0
        %4594 = vdwg.mxu0
        %vm4595 = vcmp.gt.f32.partialorder %v4587, 0.0
        %vm4596 = vcmp.gt.f32.partialorder %v4592, 0.0
        %v4597 = vmul.f32 %v4587, 0.01
        %v4598 = vmul.f32 %v4592, 0.01
        %v4599 = vsel %vm4595, %v4587, %v4597
        %v4600 = vsel %vm4596, %v4592, %v4598
        %v4601 = vld [vmem:[%s67] sm:$0xff]
        %v4602 = vld [vmem:[%s67 + $0x8] sm:$0xff]
        %v4603 = vmul.f32 %v4599, %v4601
        %v4604 = vmul.f32 %v4600, %v4602
        %vm4605 = vcmask 7168
        %v4606 = vsel %vm4605, %v4603, 0.0
        %v4607 = vsel %vm4605, %v4604, 0.0
        %v4608 = vadd.f32 %v4606, %v4607
        %v4609 = vrot.slane %v4608, 4
        %v4610 = vadd.f32 %v4608, %v4609
        %v4611 = vrot.slane %v4610, 2
        %v4612 = vadd.f32 %v4610, %v4611
        %v4613 = vrot.slane %v4612, 1
        %v4614 = vadd.f32 %v4612, %v4613
        %v4615 = vld [vmem:[#allocation3] sm:$0x1]
        %v4616 = vadd.f32 %v4614, %v4615
        %v4617 = vsub.f32 0.0, %v4616
        %v4618 = vmul.f32 %v4617, 1.442695
        %v4619 = vpow.pop %v4618
        %v4620 = vadd.f32 %v4619, 1.0
        %v4621 = vrcp.pop %v4620
        %v4622 = vmul.f32 1.0, %v4621
        %vm4623 = vcmask 0
        %4624 = vst.msk [vmem:[%s1342] sm:$0x1] %vm4623, %v4622
        %p4625 = scmp.lt.s32.totalorder %s96, 1
        %s4626 = scalar_select %p4625, %s96, 1
        %s4627 = scalar_lea.vmem %s71, %s4626
        // Predicated region
        $region237: #{forward.1} parent=159 // pred_check
          %p4628 = pneg %p859
        $region238: #{forward.1} parent=159 // pred_check_branch
          %4630 = sbr.rel (%p4628) target = $region240
        $region239: #{forward.1} parent=159 // pred_region
          _
        $region240: #{forward.1} parent=159 // pred_fallthru
          _
      $region160: #{forward.1} parent=5 // pred_fallthru
        _
      %p4631 = scmp.le.s32.totalorder 2, %s91
      // Predicated region
      $region241: #{forward.1} parent=5 // pred_check
        %p4632 = pneg %p4631
      $region242: #{forward.1} parent=5 // pred_check_branch
        %4634 = sbr.rel (%p4632) target = $region244
      $region243: #{forward.1} parent=5 // pred_region
        %s4635 = ssub.s32 %s91, 2
        // Predicated region
        $region245: #{forward.1} parent=243 // pred_check
          %p4636 = pneg %p865
        $region246: #{forward.1} parent=243 // pred_check_branch
          %4638 = sbr.rel (%p4636) target = $region248
        $region247: #{forward.1} parent=243 // pred_region
          %p4639 = scmp.lt.s32.totalorder %s97, 1
          %s4640 = scalar_select %p4639, %s97, 1
          %s4641 = scalar_lea.vmem %s71, %s4640
        $region248: #{forward.1} parent=243 // pred_fallthru
          _
      $region244: #{forward.1} parent=5 // pred_fallthru
        _
    $region6: #{forward.1} parent=1 // loop_footer
      %s95 = sadd.s32 1, %s91
    $region7: #{forward.1} parent=1 // loop_footer_branch
      %90 = sbr.rel target = $region3
    $region8: #{forward.1} parent=1 // loop_exit
      _
    %4642 = vsyncpa [#allocation5], 1
    %s4643 = scalar_lea.sflag [#allocation5], 1
    %4644 = vsyncpa %s4643, 1
    %4645 = vsyncpa [#allocation7], 1
    %4646 = vsyncpa [#allocation10], 1
    %4647 = vsyncpa [#allocation13], 1
    %4648 = vsyncpa [#allocation16], 1
    %4649 = vsyncpa [#allocation19], 1
    %4650 = vsyncpa [#allocation22], 1
    %4651 = vsyncpa [#allocation25], 1
    %4652 = vsyncpa [#allocation28], 1
    %4653 = vsyncpa [#allocation31], 1

</llo_original>
